<compile_context>
chip_gen: v7x
topology: tpu7x:2x2x1
jax: 0.10.0
libtpu: 0.0.40
codegen_flags: <defaults>
</compile_context>

<pallas_src>
import jax
import jax.numpy as jnp
import numpy as np
from jax.experimental import pallas as pl
from jax.experimental.pallas import tpu as pltpu


# ---------------------------------------------------------------------------
# Fused kernel: both PointNet branches + goal-idx linear + head linear.
# Grid: one axis over batch tiles ("parallel").
# Point clouds arrive channel-major: (bt, cin_pad, N), bf16, points on lanes.
# ---------------------------------------------------------------------------
def _fused_kernel(ctx_ref, init_ref, goal_ref,
                  cw1_ref, ct1_ref, cw2_ref, ct2_ref, cw3_ref, ct3_ref,
                  iw1_ref, it1_ref, iw2_ref, it2_ref, iw3_ref, it3_ref,
                  wg_ref, tg_ref, wc_ref, wi_ref, wgo_ref, tfc_ref,
                  out_ref):
    f32 = jnp.float32
    bf16 = jnp.bfloat16

    def branch(pc_ref, w1_ref, t1_ref, w2_ref, t2_ref, w3_ref, t3_ref):
        # Transposed PointNet branch: features on sublanes, points on lanes.
        bt = pc_ref.shape[0]
        w1 = w1_ref[...]; w2 = w2_ref[...]; w3 = w3_ref[...]   # bf16, (out, in)
        t1 = t1_ref[...]; t2 = t2_ref[...]; t3 = t3_ref[...]   # f32,  (out, 1)
        cols = []
        for b in range(bt):                      # bt is small & static (unrolled)
            x = pc_ref[b]                        # (cin_pad, N) bf16, channel-major
            h = jnp.dot(w1, x, preferred_element_type=f32)       # K=8 MXU dot
            h = jnp.maximum(h + t1, 0.0)         # relu(bn1(conv1))   (folded)
            h = jnp.dot(w2, h.astype(bf16), preferred_element_type=f32)
            h = jnp.maximum(h + t2, 0.0)         # relu(bn2(conv2))   (folded)
            h = jnp.dot(w3, h.astype(bf16), preferred_element_type=f32)
            h = h + t3                           # bn3(conv3), no relu (folded)
            cols.append(jnp.max(h, axis=-1, keepdims=True))      # max over points
        feat_t = cols[0] if bt == 1 else jnp.concatenate(cols, axis=1)  # (256, bt)
        return jnp.transpose(feat_t, (1, 0))     # (bt, 256) f32 (tiny relayout)

    ctx_feat = branch(ctx_ref, cw1_ref, ct1_ref, cw2_ref, ct2_ref, cw3_ref, ct3_ref)
    init_feat = branch(init_ref, iw1_ref, it1_ref, iw2_ref, it2_ref, iw3_ref, it3_ref)

    goal = goal_ref[...]
    if goal.ndim == 3:                           # (bt, 1, gdim) fallback layout
        goal = goal.reshape(goal.shape[0], goal.shape[2])
    g = jnp.dot(goal, wg_ref[...], preferred_element_type=f32)
    g = jnp.maximum(g + tg_ref[...], 0.0)        # relu(fc_bn1_goal_idx(fc1_goal_idx))

    # fc1(cat([ctx, init, goal])) as a sum of three partial matmuls (no concat).
    x = (jnp.dot(ctx_feat.astype(bf16), wc_ref[...], preferred_element_type=f32)
         + jnp.dot(init_feat.astype(bf16), wi_ref[...], preferred_element_type=f32)
         + jnp.dot(g.astype(bf16), wgo_ref[...], preferred_element_type=f32)
         + tfc_ref[...])
    y = jnp.maximum(x, 0.0)                      # relu(fc_bn1(fc1))
    if len(out_ref.shape) == 3:
        out_ref[...] = y[:, None, :]
    else:
        out_ref[...] = y


# ---------------------------------------------------------------------------
# Bias + BatchNorm folding:  (x @ w + b) * s + t  ==  x @ (w*s) + (b*s + t)
# ---------------------------------------------------------------------------
def _fold_bn(w, b, s, t):
    return w * s, b * s + t


def _prep_branch(prm, cin_pad):
    """Fold conv-bias + BN, transpose to (out, in), pad layer-1 K to cin_pad, cast to bf16."""
    w1, b1, s1, t1, w2, b2, s2, t2, w3, b3, s3, t3 = prm
    w1f, t1f = _fold_bn(w1, b1, s1, t1)          # (cin, 128), (1, 128)
    w2f, t2f = _fold_bn(w2, b2, s2, t2)          # (128, 128), (1, 128)
    w3f, t3f = _fold_bn(w3, b3, s3, t3)          # (128, 256), (1, 256)
    cin, c1 = w1f.shape
    w1t = jnp.zeros((c1, cin_pad), jnp.float32).at[:, :cin].set(w1f.T)
    return (w1t.astype(jnp.bfloat16), t1f.reshape(-1, 1),
            jnp.transpose(w2f).astype(jnp.bfloat16), t2f.reshape(-1, 1),
            jnp.transpose(w3f).astype(jnp.bfloat16), t3f.reshape(-1, 1))


def _prep_head(prm):
    wg, bg, sg, tg, wc, wi, wgo, b, s, t = prm
    wgf, tgf = _fold_bn(wg, bg, sg, tg)
    return (wgf.astype(jnp.bfloat16), tgf,
            (wc * s).astype(jnp.bfloat16), (wi * s).astype(jnp.bfloat16),
            (wgo * s).astype(jnp.bfloat16), b * s + t)


def _round_up(x, m):
    return -(-x // m) * m


def _choose_batch_tile(B, n_ctx, n_init, gdim, zdim, weight_bytes, cin_pad,
                       row_target=1024, unroll_cap=8, vmem_budget=24 << 20):
    """Pick bt so bt*max(N) ~ row_target MXU rows/step, grid >= 2 (even when possible
    for v7x's two TensorCores), and the VMEM footprint fits the budget.  On single-TC
    parts (v5e/v6e) the B//2 cap only costs one extra ~0.35us grid step."""

    def vmem_estimate(bt):
        def pc_block(n):   # (bt, cin_pad, n) bf16, double-buffered, tile-padded
            return 2 * bt * _round_up(cin_pad, 16) * _round_up(n, 128) * 2
        pts = pc_block(n_ctx) + pc_block(n_init)
        goal = 2 * _round_up(bt, 16) * _round_up(gdim, 128) * 2
        out = 2 * _round_up(bt, 8) * _round_up(zdim, 128) * 4
        n_max = max(_round_up(n_ctx, 128), _round_up(n_init, 128))
        interm = (256 + 128) * n_max * 4 + 256 * n_max * 2    # live activations
        return pts + goal + out + 2 * weight_bytes + interm

    def largest_divisor_leq(n, k):
        k = max(1, min(k, n))
        while n % k:
            k -= 1
        return k

    n_max = max(n_ctx, n_init, 1)
    if B <= 1:
        bt = 1
    else:
        bt = largest_divisor_leq(B, min(max(1, row_target // n_max), B // 2, unroll_cap))
        # Prefer an even number of grid steps so both v7x TensorCores stay balanced.
        while bt > 1 and (B // bt) % 2:
            bt = largest_divisor_leq(B, bt - 1)
    while bt > 1 and vmem_estimate(bt) > vmem_budget:
        bt = largest_divisor_leq(B, bt - 1)

    est = vmem_estimate(bt)
    vmem_limit = int(min(48 << 20, max(32 << 20, 2 * est)))   # <= v7x 64 MiB physical
    return bt, vmem_limit


def task_context_encoder_pointnet(context_pc, init_pc, goal_idx, params):
    B, n_ctx, cin = context_pc.shape
    _, n_init, _ = init_pc.shape
    gdim = goal_idx.shape[1]
    cin_pad = max(8, _round_up(cin, 8))

    ctx_w = _prep_branch(params["context"], cin_pad)
    ini_w = _prep_branch(params["init"], cin_pad)
    wg, tg, wc, wi, wgo, tfc = _prep_head(params["head"])
    zdim = wc.shape[1]
    weights = list(ctx_w) + list(ini_w) + [wg, tg, wc, wi, wgo, tfc]

    # Channel-major, channel-padded, bf16 point clouds: points sit on lanes.
    def prep_points(pc):
        x = jnp.transpose(pc, (0, 2, 1))                       # (B, cin, N)
        x = jnp.pad(x, ((0, 0), (0, cin_pad - cin), (0, 0)))   # (B, cin_pad, N)
        return x.astype(jnp.bfloat16)

    ctx_cm = prep_points(context_pc)
    init_cm = prep_points(init_pc)
    goal_bf = goal_idx.astype(jnp.bfloat16)

    weight_bytes = sum(int(np.prod(w.shape)) * w.dtype.itemsize for w in weights)
    bt, vmem_limit = _choose_batch_tile(B, n_ctx, n_init, gdim, zdim,
                                        weight_bytes, cin_pad)
    grid = (B // bt,)

    # Lane-dense 2-D goal/output blocks when the batch tile is sublane-aligned;
    # otherwise the (bt, 1, feat) layout keeps block shapes legal.
    aligned = (bt % 16 == 0) or (bt == B)
    if aligned:
        goal_in = goal_bf
        goal_spec = pl.BlockSpec((bt, gdim), lambda b: (b, 0))
        out_shape = jax.ShapeDtypeStruct((B, zdim), jnp.float32)
        out_spec = pl.BlockSpec((bt, zdim), lambda b: (b, 0))
    else:
        goal_in = goal_bf.reshape(B, 1, gdim)
        goal_spec = pl.BlockSpec((bt, 1, gdim), lambda b: (b, 0, 0))
        out_shape = jax.ShapeDtypeStruct((B, 1, zdim), jnp.float32)
        out_spec = pl.BlockSpec((bt, 1, zdim), lambda b: (b, 0, 0))

    def const_spec(shape):
        nd = len(shape)
        return pl.BlockSpec(shape, lambda b, nd=nd: (0,) * nd)

    c1, c2, c3 = ctx_w[0].shape[0], ctx_w[2].shape[0], ctx_w[4].shape[0]
    flops = (2 * B * (n_ctx + n_init) * (cin_pad * c1 + c1 * c2 + c2 * c3)
             + 2 * B * (gdim * 256 + 3 * 256 * zdim))
    bytes_accessed = int(ctx_cm.size * 2 + init_cm.size * 2 + goal_bf.size * 2
                         + weight_bytes + B * zdim * 4)

    out = pl.pallas_call(
        _fused_kernel,
        out_shape=out_shape,
        grid=grid,
        in_specs=[
            pl.BlockSpec((bt, cin_pad, n_ctx), lambda b: (b, 0, 0)),
            pl.BlockSpec((bt, cin_pad, n_init), lambda b: (b, 0, 0)),
            goal_spec,
        ] + [const_spec(tuple(w.shape)) for w in weights],
        out_specs=out_spec,
        compiler_params=pltpu.CompilerParams(
            dimension_semantics=("parallel",),
            vmem_limit_bytes=vmem_limit),
        cost_estimate=pl.CostEstimate(
            flops=int(flops), transcendentals=0, bytes_accessed=bytes_accessed),
    )(ctx_cm, init_cm, goal_in, *weights)

    return out.reshape(B, zdim)


# ---------------------------------------------------------------------------
# Deterministic parameter construction (synthetic; matches module shapes).
# ---------------------------------------------------------------------------
def _linear_params(key, fan_in, fan_out):
    kw, kb = jax.random.split(key)
    bound = 1.0 / np.sqrt(fan_in)
    w = jax.random.uniform(kw, (fan_in, fan_out), jnp.float32, -bound, bound)
    b = jax.random.uniform(kb, (1, fan_out), jnp.float32, -bound, bound)
    return w, b


def _bn_params(key, c, eps=1e-5):
    k1, k2, k3, k4 = jax.random.split(key, 4)
    gamma = jax.random.uniform(k1, (1, c), jnp.float32, 0.5, 1.5)
    beta = jax.random.uniform(k2, (1, c), jnp.float32, -0.1, 0.1)
    mean = jax.random.uniform(k3, (1, c), jnp.float32, -0.1, 0.1)
    var = jax.random.uniform(k4, (1, c), jnp.float32, 0.5, 1.5)
    s = gamma / jnp.sqrt(var + eps)
    t = beta - mean * s
    return s, t


def init_params(key, zdim=256, input_dim=3):
    keys = jax.random.split(key, 16)

    def branch(ks):
        w1, b1 = _linear_params(ks[0], input_dim, 128)
        s1, t1 = _bn_params(ks[1], 128)
        w2, b2 = _linear_params(ks[2], 128, 128)
        s2, t2 = _bn_params(ks[3], 128)
        w3, b3 = _linear_params(ks[4], 128, 256)
        s3, t3 = _bn_params(ks[5], 256)
        return (w1, b1, s1, t1, w2, b2, s2, t2, w3, b3, s3, t3)

    ctx_params = branch(keys[0:6])
    init_params_ = branch(keys[6:12])

    wg, bg = _linear_params(keys[12], 256, 256)              # fc1_goal_idx
    sg, tg = _bn_params(keys[13], 256)                       # fc_bn1_goal_idx
    w_fc1, b_fc1 = _linear_params(keys[14], 256 * 3, zdim)   # fc1
    s_fc1, t_fc1 = _bn_params(keys[15], zdim)                # fc_bn1
    wc, wi, wgo = w_fc1[0:256], w_fc1[256:512], w_fc1[512:768]
    head_params = (wg, bg, sg, tg, wc, wi, wgo, b_fc1, s_fc1, t_fc1)

    return {"context": ctx_params, "init": init_params_, "head": head_params}


# ---------------------------------------------------------------------------
# Pure-JAX f32 reference for correctness check (unfused, unfolded).
# ---------------------------------------------------------------------------
def ref_forward(context_pc, init_pc, goal_idx, params):
    def branch(pc, prm):
        w1, b1, s1, t1, w2, b2, s2, t2, w3, b3, s3, t3 = prm
        h = jnp.maximum((pc @ w1 + b1) * s1 + t1, 0.0)
        h = jnp.maximum((h @ w2 + b2) * s2 + t2, 0.0)
        h = (h @ w3 + b3) * s3 + t3
        return jnp.max(h, axis=1)

    ctx = branch(context_pc, params["context"])
    ini = branch(init_pc, params["init"])
    wg, bg, sg, tg, wc, wi, wgo, b, s, t = params["head"]
    g = jnp.maximum((goal_idx @ wg + bg) * sg + tg, 0.0)
    x = ctx @ wc + ini @ wi + g @ wgo + b
    return jnp.maximum(x * s + t, 0.0)


if __name__ == "__main__":
    B, N, INPUT_DIM, ZDIM = 2, 16, 3, 256   # zdim must be 256 (view(-1, zdim) of the 256-chan maxpool)

    key = jax.random.PRNGKey(0)
    kp, kc, ki, kg = jax.random.split(key, 4)
    params = init_params(kp, zdim=ZDIM, input_dim=INPUT_DIM)

    context_pc = jax.random.normal(kc, (B, N, INPUT_DIM), jnp.float32)
    init_pc = jax.random.normal(ki, (B, N, INPUT_DIM), jnp.float32)
    goal_idx = jax.random.normal(kg, (B, 256), jnp.float32)

    out = task_context_encoder_pointnet(context_pc, init_pc, goal_idx, params)
    out = jax.block_until_ready(out)

    ref = ref_forward(context_pc, init_pc, goal_idx, params)
    # bf16 MXU path -> relaxed tolerance vs. the f32 reference (per perf review).
    np.testing.assert_allclose(np.asarray(out), np.asarray(ref), atol=5e-2, rtol=5e-2)
    assert out.shape == (B, ZDIM) and out.dtype == jnp.float32

    print("KERNEL_OK")
</pallas_src>

<mosaic_0001>
module attributes {stable_mosaic.version = 11 : i64} {
  func.func @_fused_kernel(%arg0: i32, %arg1: memref<1x8x16xbf16, #tpu.memory_space<vmem>>, %arg2: memref<1x8x16xbf16, #tpu.memory_space<vmem>>, %arg3: memref<1x1x256xbf16, #tpu.memory_space<vmem>>, %arg4: memref<128x8xbf16, #tpu.memory_space<vmem>>, %arg5: memref<128x1xf32, #tpu.memory_space<vmem>>, %arg6: memref<128x128xbf16, #tpu.memory_space<vmem>>, %arg7: memref<128x1xf32, #tpu.memory_space<vmem>>, %arg8: memref<256x128xbf16, #tpu.memory_space<vmem>>, %arg9: memref<256x1xf32, #tpu.memory_space<vmem>>, %arg10: memref<128x8xbf16, #tpu.memory_space<vmem>>, %arg11: memref<128x1xf32, #tpu.memory_space<vmem>>, %arg12: memref<128x128xbf16, #tpu.memory_space<vmem>>, %arg13: memref<128x1xf32, #tpu.memory_space<vmem>>, %arg14: memref<256x128xbf16, #tpu.memory_space<vmem>>, %arg15: memref<256x1xf32, #tpu.memory_space<vmem>>, %arg16: memref<256x256xbf16, #tpu.memory_space<vmem>>, %arg17: memref<1x256xf32, #tpu.memory_space<vmem>>, %arg18: memref<256x256xbf16, #tpu.memory_space<vmem>>, %arg19: memref<256x256xbf16, #tpu.memory_space<vmem>>, %arg20: memref<256x256xbf16, #tpu.memory_space<vmem>>, %arg21: memref<1x256xf32, #tpu.memory_space<vmem>>, %arg22: memref<1x1x256xf32, #tpu.memory_space<vmem>>) attributes {dimension_semantics = [#tpu.dimension_semantics<parallel>], iteration_bounds = array<i64: 2>, scalar_prefetch = 0 : i64, scratch_operands = 0 : i64, tpu.core_type = #tpu.core_type<tc>, window_params = [{transform_indices = @transform_0, window_bounds = array<i64: 1, 8, 16>}, {transform_indices = @transform_1, window_bounds = array<i64: 1, 8, 16>}, {transform_indices = @transform_2, window_bounds = array<i64: 1, 1, 256>}, {pipeline_mode = #tpu.pipeline_mode<synchronous>, transform_indices = @transform_3, window_bounds = array<i64: 128, 8>}, {pipeline_mode = #tpu.pipeline_mode<synchronous>, transform_indices = @transform_4, window_bounds = array<i64: 128, 1>}, {pipeline_mode = #tpu.pipeline_mode<synchronous>, transform_indices = @transform_5, window_bounds = array<i64: 128, 128>}, {pipeline_mode = #tpu.pipeline_mode<synchronous>, transform_indices = @transform_6, window_bounds = array<i64: 128, 1>}, {pipeline_mode = #tpu.pipeline_mode<synchronous>, transform_indices = @transform_7, window_bounds = array<i64: 256, 128>}, {pipeline_mode = #tpu.pipeline_mode<synchronous>, transform_indices = @transform_8, window_bounds = array<i64: 256, 1>}, {pipeline_mode = #tpu.pipeline_mode<synchronous>, transform_indices = @transform_9, window_bounds = array<i64: 128, 8>}, {pipeline_mode = #tpu.pipeline_mode<synchronous>, transform_indices = @transform_10, window_bounds = array<i64: 128, 1>}, {pipeline_mode = #tpu.pipeline_mode<synchronous>, transform_indices = @transform_11, window_bounds = array<i64: 128, 128>}, {pipeline_mode = #tpu.pipeline_mode<synchronous>, transform_indices = @transform_12, window_bounds = array<i64: 128, 1>}, {pipeline_mode = #tpu.pipeline_mode<synchronous>, transform_indices = @transform_13, window_bounds = array<i64: 256, 128>}, {pipeline_mode = #tpu.pipeline_mode<synchronous>, transform_indices = @transform_14, window_bounds = array<i64: 256, 1>}, {pipeline_mode = #tpu.pipeline_mode<synchronous>, transform_indices = @transform_15, window_bounds = array<i64: 256, 256>}, {pipeline_mode = #tpu.pipeline_mode<synchronous>, transform_indices = @transform_16, window_bounds = array<i64: 1, 256>}, {pipeline_mode = #tpu.pipeline_mode<synchronous>, transform_indices = @transform_17, window_bounds = array<i64: 256, 256>}, {pipeline_mode = #tpu.pipeline_mode<synchronous>, transform_indices = @transform_18, window_bounds = array<i64: 256, 256>}, {pipeline_mode = #tpu.pipeline_mode<synchronous>, transform_indices = @transform_19, window_bounds = array<i64: 256, 256>}, {pipeline_mode = #tpu.pipeline_mode<synchronous>, transform_indices = @transform_20, window_bounds = array<i64: 1, 256>}, {transform_indices = @transform_21, window_bounds = array<i64: 1, 1, 256>}]} {
    %c0 = arith.constant 0 : index
    %c0_0 = arith.constant 0 : index
    %0 = vector.load %arg4[%c0, %c0_0] : memref<128x8xbf16, #tpu.memory_space<vmem>>, vector<128x8xbf16>
    %c0_1 = arith.constant 0 : index
    %c0_2 = arith.constant 0 : index
    %1 = vector.load %arg6[%c0_1, %c0_2] : memref<128x128xbf16, #tpu.memory_space<vmem>>, vector<128x128xbf16>
    %c0_3 = arith.constant 0 : index
    %c0_4 = arith.constant 0 : index
    %2 = vector.load %arg8[%c0_3, %c0_4] : memref<256x128xbf16, #tpu.memory_space<vmem>>, vector<256x128xbf16>
    %c0_5 = arith.constant 0 : index
    %c0_6 = arith.constant 0 : index
    %3 = vector.load %arg5[%c0_5, %c0_6] : memref<128x1xf32, #tpu.memory_space<vmem>>, vector<128x1xf32>
    %c0_7 = arith.constant 0 : index
    %c0_8 = arith.constant 0 : index
    %4 = vector.load %arg7[%c0_7, %c0_8] : memref<128x1xf32, #tpu.memory_space<vmem>>, vector<128x1xf32>
    %c0_9 = arith.constant 0 : index
    %c0_10 = arith.constant 0 : index
    %5 = vector.load %arg9[%c0_9, %c0_10] : memref<256x1xf32, #tpu.memory_space<vmem>>, vector<256x1xf32>
    %c0_11 = arith.constant 0 : index
    %c0_12 = arith.constant 0 : index
    %c0_13 = arith.constant 0 : index
    %6 = vector.load %arg1[%c0_11, %c0_12, %c0_13] : memref<1x8x16xbf16, #tpu.memory_space<vmem>>, vector<1x8x16xbf16>
    %7 = vector.shape_cast %6 : vector<1x8x16xbf16> to vector<8x16xbf16>
    %cst = arith.constant dense<0.000000e+00> : vector<128x16xf32>
    %8 = tpu.matmul %0, %7, %cst {dimension_numbers = #tpu.dot_dimension_numbers<[1], [0], [0], [1], [0, 0, 1, 1], [], []>} : vector<128x8xbf16>, vector<8x16xbf16>, vector<128x16xf32> -> vector<128x16xf32>
    %9 = vector.broadcast %3 : vector<128x1xf32> to vector<128x16xf32>
    %10 = arith.addf %8, %9 : vector<128x16xf32>
    %cst_14 = arith.constant 0.000000e+00 : f32
    %11 = vector.broadcast %cst_14 : f32 to vector<128x16xf32>
    %12 = arith.maximumf %10, %11 : vector<128x16xf32>
    %13 = arith.truncf %12 : vector<128x16xf32> to vector<128x16xbf16>
    %cst_15 = arith.constant dense<0.000000e+00> : vector<128x16xf32>
    %14 = tpu.matmul %1, %13, %cst_15 {dimension_numbers = #tpu.dot_dimension_numbers<[1], [0], [0], [1], [0, 0, 1, 1], [], []>} : vector<128x128xbf16>, vector<128x16xbf16>, vector<128x16xf32> -> vector<128x16xf32>
    %15 = vector.broadcast %4 : vector<128x1xf32> to vector<128x16xf32>
    %16 = arith.addf %14, %15 : vector<128x16xf32>
    %cst_16 = arith.constant 0.000000e+00 : f32
    %17 = vector.broadcast %cst_16 : f32 to vector<128x16xf32>
    %18 = arith.maximumf %16, %17 : vector<128x16xf32>
    %19 = arith.truncf %18 : vector<128x16xf32> to vector<128x16xbf16>
    %cst_17 = arith.constant dense<0.000000e+00> : vector<256x16xf32>
    %20 = tpu.matmul %2, %19, %cst_17 {dimension_numbers = #tpu.dot_dimension_numbers<[1], [0], [0], [1], [0, 0, 1, 1], [], []>} : vector<256x128xbf16>, vector<128x16xbf16>, vector<256x16xf32> -> vector<256x16xf32>
    %21 = vector.broadcast %5 : vector<256x1xf32> to vector<256x16xf32>
    %22 = arith.addf %20, %21 : vector<256x16xf32>
    %cst_18 = arith.constant dense<0xFF800000> : vector<256xf32>
    %23 = vector.multi_reduction <maximumf>, %22, %cst_18 [1] : vector<256x16xf32> to vector<256xf32>
    %24 = vector.shape_cast %23 : vector<256xf32> to vector<256x1xf32>
    %25 = tpu.transpose %24, [1, 0] : vector<256x1xf32> -> vector<1x256xf32>
    %c0_19 = arith.constant 0 : index
    %c0_20 = arith.constant 0 : index
    %26 = vector.load %arg10[%c0_19, %c0_20] : memref<128x8xbf16, #tpu.memory_space<vmem>>, vector<128x8xbf16>
    %c0_21 = arith.constant 0 : index
    %c0_22 = arith.constant 0 : index
    %27 = vector.load %arg12[%c0_21, %c0_22] : memref<128x128xbf16, #tpu.memory_space<vmem>>, vector<128x128xbf16>
    %c0_23 = arith.constant 0 : index
    %c0_24 = arith.constant 0 : index
    %28 = vector.load %arg14[%c0_23, %c0_24] : memref<256x128xbf16, #tpu.memory_space<vmem>>, vector<256x128xbf16>
    %c0_25 = arith.constant 0 : index
    %c0_26 = arith.constant 0 : index
    %29 = vector.load %arg11[%c0_25, %c0_26] : memref<128x1xf32, #tpu.memory_space<vmem>>, vector<128x1xf32>
    %c0_27 = arith.constant 0 : index
    %c0_28 = arith.constant 0 : index
    %30 = vector.load %arg13[%c0_27, %c0_28] : memref<128x1xf32, #tpu.memory_space<vmem>>, vector<128x1xf32>
    %c0_29 = arith.constant 0 : index
    %c0_30 = arith.constant 0 : index
    %31 = vector.load %arg15[%c0_29, %c0_30] : memref<256x1xf32, #tpu.memory_space<vmem>>, vector<256x1xf32>
    %c0_31 = arith.constant 0 : index
    %c0_32 = arith.constant 0 : index
    %c0_33 = arith.constant 0 : index
    %32 = vector.load %arg2[%c0_31, %c0_32, %c0_33] : memref<1x8x16xbf16, #tpu.memory_space<vmem>>, vector<1x8x16xbf16>
    %33 = vector.shape_cast %32 : vector<1x8x16xbf16> to vector<8x16xbf16>
    %cst_34 = arith.constant dense<0.000000e+00> : vector<128x16xf32>
    %34 = tpu.matmul %26, %33, %cst_34 {dimension_numbers = #tpu.dot_dimension_numbers<[1], [0], [0], [1], [0, 0, 1, 1], [], []>} : vector<128x8xbf16>, vector<8x16xbf16>, vector<128x16xf32> -> vector<128x16xf32>
    %35 = vector.broadcast %29 : vector<128x1xf32> to vector<128x16xf32>
    %36 = arith.addf %34, %35 : vector<128x16xf32>
    %cst_35 = arith.constant 0.000000e+00 : f32
    %37 = vector.broadcast %cst_35 : f32 to vector<128x16xf32>
    %38 = arith.maximumf %36, %37 : vector<128x16xf32>
    %39 = arith.truncf %38 : vector<128x16xf32> to vector<128x16xbf16>
    %cst_36 = arith.constant dense<0.000000e+00> : vector<128x16xf32>
    %40 = tpu.matmul %27, %39, %cst_36 {dimension_numbers = #tpu.dot_dimension_numbers<[1], [0], [0], [1], [0, 0, 1, 1], [], []>} : vector<128x128xbf16>, vector<128x16xbf16>, vector<128x16xf32> -> vector<128x16xf32>
    %41 = vector.broadcast %30 : vector<128x1xf32> to vector<128x16xf32>
    %42 = arith.addf %40, %41 : vector<128x16xf32>
    %cst_37 = arith.constant 0.000000e+00 : f32
    %43 = vector.broadcast %cst_37 : f32 to vector<128x16xf32>
    %44 = arith.maximumf %42, %43 : vector<128x16xf32>
    %45 = arith.truncf %44 : vector<128x16xf32> to vector<128x16xbf16>
    %cst_38 = arith.constant dense<0.000000e+00> : vector<256x16xf32>
    %46 = tpu.matmul %28, %45, %cst_38 {dimension_numbers = #tpu.dot_dimension_numbers<[1], [0], [0], [1], [0, 0, 1, 1], [], []>} : vector<256x128xbf16>, vector<128x16xbf16>, vector<256x16xf32> -> vector<256x16xf32>
    %47 = vector.broadcast %31 : vector<256x1xf32> to vector<256x16xf32>
    %48 = arith.addf %46, %47 : vector<256x16xf32>
    %cst_39 = arith.constant dense<0xFF800000> : vector<256xf32>
    %49 = vector.multi_reduction <maximumf>, %48, %cst_39 [1] : vector<256x16xf32> to vector<256xf32>
    %50 = vector.shape_cast %49 : vector<256xf32> to vector<256x1xf32>
    %51 = tpu.transpose %50, [1, 0] : vector<256x1xf32> -> vector<1x256xf32>
    %c0_40 = arith.constant 0 : index
    %c0_41 = arith.constant 0 : index
    %c0_42 = arith.constant 0 : index
    %52 = vector.load %arg3[%c0_40, %c0_41, %c0_42] : memref<1x1x256xbf16, #tpu.memory_space<vmem>>, vector<1x1x256xbf16>
    %53 = vector.shape_cast %52 : vector<1x1x256xbf16> to vector<1x256xbf16>
    %c0_43 = arith.constant 0 : index
    %c0_44 = arith.constant 0 : index
    %54 = vector.load %arg16[%c0_43, %c0_44] : memref<256x256xbf16, #tpu.memory_space<vmem>>, vector<256x256xbf16>
    %cst_45 = arith.constant dense<0.000000e+00> : vector<1x256xf32>
    %55 = tpu.matmul %53, %54, %cst_45 {dimension_numbers = #tpu.dot_dimension_numbers<[1], [0], [0], [1], [0, 0, 1, 1], [], []>} : vector<1x256xbf16>, vector<256x256xbf16>, vector<1x256xf32> -> vector<1x256xf32>
    %c0_46 = arith.constant 0 : index
    %c0_47 = arith.constant 0 : index
    %56 = vector.load %arg17[%c0_46, %c0_47] : memref<1x256xf32, #tpu.memory_space<vmem>>, vector<1x256xf32>
    %57 = arith.addf %55, %56 : vector<1x256xf32>
    %cst_48 = arith.constant 0.000000e+00 : f32
    %58 = vector.broadcast %cst_48 : f32 to vector<1x256xf32>
    %59 = arith.maximumf %57, %58 : vector<1x256xf32>
    %60 = arith.truncf %25 : vector<1x256xf32> to vector<1x256xbf16>
    %c0_49 = arith.constant 0 : index
    %c0_50 = arith.constant 0 : index
    %61 = vector.load %arg18[%c0_49, %c0_50] : memref<256x256xbf16, #tpu.memory_space<vmem>>, vector<256x256xbf16>
    %cst_51 = arith.constant dense<0.000000e+00> : vector<1x256xf32>
    %62 = tpu.matmul %60, %61, %cst_51 {dimension_numbers = #tpu.dot_dimension_numbers<[1], [0], [0], [1], [0, 0, 1, 1], [], []>} : vector<1x256xbf16>, vector<256x256xbf16>, vector<1x256xf32> -> vector<1x256xf32>
    %63 = arith.truncf %51 : vector<1x256xf32> to vector<1x256xbf16>
    %c0_52 = arith.constant 0 : index
    %c0_53 = arith.constant 0 : index
    %64 = vector.load %arg19[%c0_52, %c0_53] : memref<256x256xbf16, #tpu.memory_space<vmem>>, vector<256x256xbf16>
    %cst_54 = arith.constant dense<0.000000e+00> : vector<1x256xf32>
    %65 = tpu.matmul %63, %64, %cst_54 {dimension_numbers = #tpu.dot_dimension_numbers<[1], [0], [0], [1], [0, 0, 1, 1], [], []>} : vector<1x256xbf16>, vector<256x256xbf16>, vector<1x256xf32> -> vector<1x256xf32>
    %66 = arith.addf %62, %65 : vector<1x256xf32>
    %67 = arith.truncf %59 : vector<1x256xf32> to vector<1x256xbf16>
    %c0_55 = arith.constant 0 : index
    %c0_56 = arith.constant 0 : index
    %68 = vector.load %arg20[%c0_55, %c0_56] : memref<256x256xbf16, #tpu.memory_space<vmem>>, vector<256x256xbf16>
    %cst_57 = arith.constant dense<0.000000e+00> : vector<1x256xf32>
    %69 = tpu.matmul %67, %68, %cst_57 {dimension_numbers = #tpu.dot_dimension_numbers<[1], [0], [0], [1], [0, 0, 1, 1], [], []>} : vector<1x256xbf16>, vector<256x256xbf16>, vector<1x256xf32> -> vector<1x256xf32>
    %70 = arith.addf %66, %69 : vector<1x256xf32>
    %c0_58 = arith.constant 0 : index
    %c0_59 = arith.constant 0 : index
    %71 = vector.load %arg21[%c0_58, %c0_59] : memref<1x256xf32, #tpu.memory_space<vmem>>, vector<1x256xf32>
    %72 = arith.addf %70, %71 : vector<1x256xf32>
    %cst_60 = arith.constant 0.000000e+00 : f32
    %73 = vector.broadcast %cst_60 : f32 to vector<1x256xf32>
    %74 = arith.maximumf %72, %73 : vector<1x256xf32>
    %75 = vector.shape_cast %74 : vector<1x256xf32> to vector<1x1x256xf32>
    %c0_61 = arith.constant 0 : index
    %c0_62 = arith.constant 0 : index
    %c0_63 = arith.constant 0 : index
    %76 = vector.load %arg22[%c0_61, %c0_62, %c0_63] : memref<1x1x256xf32, #tpu.memory_space<vmem>>, vector<1x1x256xf32>
    tpu.vector_store %arg22[%c0_61, %c0_62, %c0_63], %75 {strides = array<i32>} : memref<1x1x256xf32, #tpu.memory_space<vmem>>, vector<1x1x256xf32>,
    return
  }
  func.func @transform_0(%arg0: i32) -> (i32, i32, i32) {
    %c0_i32 = arith.constant 0 : i32
    %c0_i32_0 = arith.constant 0 : i32
    %c0_i32_1 = arith.constant 0 : i32
    return %arg0, %c0_i32, %c0_i32_0 : i32, i32, i32
  }
  func.func @transform_1(%arg0: i32) -> (i32, i32, i32) {
    %c0_i32 = arith.constant 0 : i32
    %c0_i32_0 = arith.constant 0 : i32
    %c0_i32_1 = arith.constant 0 : i32
    return %arg0, %c0_i32, %c0_i32_0 : i32, i32, i32
  }
  func.func @transform_2(%arg0: i32) -> (i32, i32, i32) {
    %c0_i32 = arith.constant 0 : i32
    %c0_i32_0 = arith.constant 0 : i32
    %c0_i32_1 = arith.constant 0 : i32
    return %arg0, %c0_i32, %c0_i32_0 : i32, i32, i32
  }
  func.func @transform_3(%arg0: i32) -> (i32, i32) {
    %c0_i32 = arith.constant 0 : i32
    %c0_i32_0 = arith.constant 0 : i32
    %c0_i32_1 = arith.constant 0 : i32
    return %c0_i32, %c0_i32_0 : i32, i32
  }
  func.func @transform_4(%arg0: i32) -> (i32, i32) {
    %c0_i32 = arith.constant 0 : i32
    %c0_i32_0 = arith.constant 0 : i32
    %c0_i32_1 = arith.constant 0 : i32
    return %c0_i32, %c0_i32_0 : i32, i32
  }
  func.func @transform_5(%arg0: i32) -> (i32, i32) {
    %c0_i32 = arith.constant 0 : i32
    %c0_i32_0 = arith.constant 0 : i32
    %c0_i32_1 = arith.constant 0 : i32
    return %c0_i32, %c0_i32_0 : i32, i32
  }
  func.func @transform_6(%arg0: i32) -> (i32, i32) {
    %c0_i32 = arith.constant 0 : i32
    %c0_i32_0 = arith.constant 0 : i32
    %c0_i32_1 = arith.constant 0 : i32
    return %c0_i32, %c0_i32_0 : i32, i32
  }
  func.func @transform_7(%arg0: i32) -> (i32, i32) {
    %c0_i32 = arith.constant 0 : i32
    %c0_i32_0 = arith.constant 0 : i32
    %c0_i32_1 = arith.constant 0 : i32
    return %c0_i32, %c0_i32_0 : i32, i32
  }
  func.func @transform_8(%arg0: i32) -> (i32, i32) {
    %c0_i32 = arith.constant 0 : i32
    %c0_i32_0 = arith.constant 0 : i32
    %c0_i32_1 = arith.constant 0 : i32
    return %c0_i32, %c0_i32_0 : i32, i32
  }
  func.func @transform_9(%arg0: i32) -> (i32, i32) {
    %c0_i32 = arith.constant 0 : i32
    %c0_i32_0 = arith.constant 0 : i32
    %c0_i32_1 = arith.constant 0 : i32
    return %c0_i32, %c0_i32_0 : i32, i32
  }
  func.func @transform_10(%arg0: i32) -> (i32, i32) {
    %c0_i32 = arith.constant 0 : i32
    %c0_i32_0 = arith.constant 0 : i32
    %c0_i32_1 = arith.constant 0 : i32
    return %c0_i32, %c0_i32_0 : i32, i32
  }
  func.func @transform_11(%arg0: i32) -> (i32, i32) {
    %c0_i32 = arith.constant 0 : i32
    %c0_i32_0 = arith.constant 0 : i32
    %c0_i32_1 = arith.constant 0 : i32
    return %c0_i32, %c0_i32_0 : i32, i32
  }
  func.func @transform_12(%arg0: i32) -> (i32, i32) {
    %c0_i32 = arith.constant 0 : i32
    %c0_i32_0 = arith.constant 0 : i32
    %c0_i32_1 = arith.constant 0 : i32
    return %c0_i32, %c0_i32_0 : i32, i32
  }
  func.func @transform_13(%arg0: i32) -> (i32, i32) {
    %c0_i32 = arith.constant 0 : i32
    %c0_i32_0 = arith.constant 0 : i32
    %c0_i32_1 = arith.constant 0 : i32
    return %c0_i32, %c0_i32_0 : i32, i32
  }
  func.func @transform_14(%arg0: i32) -> (i32, i32) {
    %c0_i32 = arith.constant 0 : i32
    %c0_i32_0 = arith.constant 0 : i32
    %c0_i32_1 = arith.constant 0 : i32
    return %c0_i32, %c0_i32_0 : i32, i32
  }
  func.func @transform_15(%arg0: i32) -> (i32, i32) {
    %c0_i32 = arith.constant 0 : i32
    %c0_i32_0 = arith.constant 0 : i32
    %c0_i32_1 = arith.constant 0 : i32
    return %c0_i32, %c0_i32_0 : i32, i32
  }
  func.func @transform_16(%arg0: i32) -> (i32, i32) {
    %c0_i32 = arith.constant 0 : i32
    %c0_i32_0 = arith.constant 0 : i32
    %c0_i32_1 = arith.constant 0 : i32
    return %c0_i32, %c0_i32_0 : i32, i32
  }
  func.func @transform_17(%arg0: i32) -> (i32, i32) {
    %c0_i32 = arith.constant 0 : i32
    %c0_i32_0 = arith.constant 0 : i32
    %c0_i32_1 = arith.constant 0 : i32
    return %c0_i32, %c0_i32_0 : i32, i32
  }
  func.func @transform_18(%arg0: i32) -> (i32, i32) {
    %c0_i32 = arith.constant 0 : i32
    %c0_i32_0 = arith.constant 0 : i32
    %c0_i32_1 = arith.constant 0 : i32
    return %c0_i32, %c0_i32_0 : i32, i32
  }
  func.func @transform_19(%arg0: i32) -> (i32, i32) {
    %c0_i32 = arith.constant 0 : i32
    %c0_i32_0 = arith.constant 0 : i32
    %c0_i32_1 = arith.constant 0 : i32
    return %c0_i32, %c0_i32_0 : i32, i32
  }
  func.func @transform_20(%arg0: i32) -> (i32, i32) {
    %c0_i32 = arith.constant 0 : i32
    %c0_i32_0 = arith.constant 0 : i32
    %c0_i32_1 = arith.constant 0 : i32
    return %c0_i32, %c0_i32_0 : i32, i32
  }
  func.func @transform_21(%arg0: i32) -> (i32, i32, i32) {
    %c0_i32 = arith.constant 0 : i32
    %c0_i32_0 = arith.constant 0 : i32
    %c0_i32_1 = arith.constant 0 : i32
    return %arg0, %c0_i32, %c0_i32_0 : i32, i32, i32
  }
}

</mosaic_0001>

<llo_original>
// kernel: tpu_custom_call.1
$region0: #{tpu_custom_call.1}
  #allocation0 [shape = 'u32[]', space=smem, size = 0x4, offset = 0x4, fixed_abs, tag = 'smem constant byte address 0x4 - core index']
  #allocation1 [shape = 'u32[144,128]{1,0:T(1,128)}', space=vmem, size = 0x12000, scoped, tag = 'internal scratch']
  %s0 = inlined_call_operand.vmem [shape: bf16[2,8,16], index: 0, kind: input, shape index: {}]
  %s1 = inlined_call_operand.vmem [shape: bf16[2,8,16], index: 1, kind: input, shape index: {}]
  %s2 = inlined_call_operand.vmem [shape: bf16[2,1,256], index: 2, kind: input, shape index: {}]
  %s3 = inlined_call_operand.vmem [shape: bf16[128,8], index: 3, kind: input, shape index: {}]
  %s4 = inlined_call_operand.vmem [shape: f32[128,1], index: 4, kind: input, shape index: {}]
  %s5 = inlined_call_operand.hbm [shape: bf16[128,128], index: 5, kind: input, shape index: {}]
  %s6 = inlined_call_operand.vmem [shape: f32[128,1], index: 6, kind: input, shape index: {}]
  %s7 = inlined_call_operand.vmem [shape: bf16[256,128], index: 7, kind: input, shape index: {}]
  %s8 = inlined_call_operand.vmem [shape: f32[256,1], index: 8, kind: input, shape index: {}]
  %s9 = inlined_call_operand.vmem [shape: bf16[128,8], index: 9, kind: input, shape index: {}]
  %s10 = inlined_call_operand.vmem [shape: f32[128,1], index: 10, kind: input, shape index: {}]
  %s11 = inlined_call_operand.hbm [shape: bf16[128,128], index: 11, kind: input, shape index: {}]
  %s12 = inlined_call_operand.vmem [shape: f32[128,1], index: 12, kind: input, shape index: {}]
  %s13 = inlined_call_operand.hbm [shape: bf16[256,128], index: 13, kind: input, shape index: {}]
  %s14 = inlined_call_operand.vmem [shape: f32[256,1], index: 14, kind: input, shape index: {}]
  %s15 = inlined_call_operand.vmem [shape: bf16[256,256], index: 15, kind: input, shape index: {}]
  %s16 = inlined_call_operand.vmem [shape: f32[1,256], index: 16, kind: input, shape index: {}]
  %s17 = inlined_call_operand.vmem [shape: bf16[256,256], index: 17, kind: input, shape index: {}]
  %s18 = inlined_call_operand.vmem [shape: bf16[256,256], index: 18, kind: input, shape index: {}]
  %s19 = inlined_call_operand.vmem [shape: bf16[256,256], index: 19, kind: input, shape index: {}]
  %s20 = inlined_call_operand.vmem [shape: f32[1,256], index: 20, kind: input, shape index: {}]
  %s21 = inlined_call_operand.hbm [shape: f32[2,1,256], index: 21, kind: output, shape index: {}]
  %s22 = sld [smem:[#allocation0]]
  $region129: #{tpu_custom_call.1} parent=0
    _
  %s24 = ssub.s32 1, %s22
  %s25 = scalar_select 0, %s24, %s22
  $region1: #{tpu_custom_call.1} parent=0
    #allocation2 [shape = 'u8[32768]{0}', space=vmem, size = 0x8000, scoped, tag = 'input window, operand 5, single buffered']
    #allocation3 [shape = 's32[2]{0}', space=sflag, size = 0x8, scoped, tag = 'scoped memory for tpu_custom_call.1']
    #allocation4 [shape = 's32[2]{0}', space=sflag, size = 0x8, scoped, tag = 'scoped memory for tpu_custom_call.1']
    #allocation5 [shape = 'u8[32768]{0}', space=vmem, size = 0x8000, scoped, tag = 'input window, operand 11, single buffered']
    #allocation6 [shape = 's32[1]{0}', space=sflag, size = 0x4, scoped, tag = 'scoped memory for tpu_custom_call.1']
    #allocation7 [shape = 'u8[65536]{0}', space=vmem, size = 0x10000, scoped, tag = 'input window, operand 13, single buffered']
    #allocation8 [shape = 'u8[2048]{0}', space=vmem, size = 0x800, scoped, tag = 'output window, operand 0']
    %26 = vsyncpa [#allocation3], 0
    %27 = vsyncpa [#allocation6], 0
    %28 = vsyncpa [#allocation4], 0
    %s29 = scalar_lea.sflag [#allocation4], 1
    %30 = vsyncpa %s29, 0
    loop: start=0, step=1, limit=4
    $region2: #{tpu_custom_call.1} parent=1 // loop_pre_header
      _
    $region3: #{tpu_custom_call.1} parent=1 // loop_header
      %s32 = sphi 0, %s36
      %p33 = scmp.ge.s32.totalorder %s32, 4
      %s42 = sphi 0, %s44
      %s45 = sphi 0, %s42
      %s46 = sphi 0, %s45
      %s62 = sphi 0, %s46
      %s68 = sphi 0, %s70
      %s71 = sphi 0, %s68
      %s72 = sphi 0, %s71
      %s88 = sphi 0, %s72
      %s94 = sphi 0, %s96
      %s97 = sphi 0, %s94
      %s98 = sphi 0, %s97
      %s114 = sphi 0, %s98
      %s118 = sphi 0, %s118
      %s120 = sphi 0, %s118
      %s121 = sphi 0, %s120
      %s135 = sphi 0, %s121
      %s139 = sphi 0, %s139
      %s141 = sphi 0, %s139
      %s142 = sphi 0, %s141
      %s156 = sphi 0, %s142
      %s160 = sphi 0, %s160
      %s162 = sphi 0, %s160
      %s163 = sphi 0, %s162
      %s177 = sphi 0, %s163
      %s181 = sphi 0, %s181
      %s183 = sphi 0, %s181
      %s184 = sphi 0, %s183
      %s198 = sphi 0, %s184
      %s202 = sphi 0, %s202
      %s204 = sphi 0, %s202
      %s205 = sphi 0, %s204
      %s219 = sphi 0, %s205
      %s223 = sphi 0, %s223
      %s225 = sphi 0, %s223
      %s226 = sphi 0, %s225
      %s240 = sphi 0, %s226
      %s244 = sphi 0, %s244
      %s246 = sphi 0, %s244
      %s247 = sphi 0, %s246
      %s261 = sphi 0, %s247
      %s265 = sphi 0, %s265
      %s267 = sphi 0, %s265
      %s268 = sphi 0, %s267
      %s282 = sphi 0, %s268
      %s286 = sphi 0, %s286
      %s288 = sphi 0, %s286
      %s289 = sphi 0, %s288
      %s303 = sphi 0, %s289
      %s307 = sphi 0, %s307
      %s309 = sphi 0, %s307
      %s310 = sphi 0, %s309
      %s324 = sphi 0, %s310
      %s328 = sphi 0, %s328
      %s330 = sphi 0, %s328
      %s331 = sphi 0, %s330
      %s345 = sphi 0, %s331
      %s349 = sphi 0, %s349
      %s351 = sphi 0, %s349
      %s352 = sphi 0, %s351
      %s366 = sphi 0, %s352
      %s370 = sphi 0, %s370
      %s372 = sphi 0, %s370
      %s373 = sphi 0, %s372
      %s387 = sphi 0, %s373
      %s391 = sphi 0, %s391
      %s393 = sphi 0, %s391
      %s394 = sphi 0, %s393
      %s408 = sphi 0, %s394
      %s412 = sphi 0, %s412
      %s414 = sphi 0, %s412
      %s415 = sphi 0, %s414
      %s429 = sphi 0, %s415
      %s433 = sphi 0, %s433
      %s435 = sphi 0, %s433
      %s436 = sphi 0, %s435
      %s450 = sphi 0, %s436
      %s454 = sphi 0, %s454
      %s456 = sphi 0, %s454
      %s457 = sphi 0, %s456
      %s471 = sphi 0, %s457
      %s475 = sphi 0, %s475
      %s477 = sphi 0, %s475
      %s478 = sphi 0, %s477
      %s492 = sphi 0, %s478
      %s498 = sphi 0, %s500
      %s501 = sphi 0, %s498
      %s502 = sphi 0, %s501
      %s518 = sphi 0, %s502
    $region4: #{tpu_custom_call.1} parent=1 // loop_header_branch
      %35 = sbr.rel (%p33) target = $region8
    $region5: #{tpu_custom_call.1} parent=1 // loop_body
      %s37 = ssub.s32 %s32, 1
      %s38 = ssub.s32 %s32, 2
      %s39 = sadd.s32 %s32, 1
      %s40 = ssub.s32 %s32, %s39
      %p41 = scmp.eq.s32.totalorder %s40, 0
      %s43 = sadd.s32 %s42, 1
      %s44 = scalar_select %p41, %s42, %s43
      %p47 = pneg %p41
      %p48 = scmp.eq.s32.totalorder %s32, 1
      %p49 = por %p47, %p48
      %p50 = scmp.ne.s32.totalorder %s42, %s45
      %p51 = scmp.eq.s32.totalorder %s32, 0
      %p52 = por %p50, %p51
      %p53 = scmp.ne.s32.totalorder %s42, %s45
      %p54 = scmp.eq.s32.totalorder %s37, 1
      %p55 = por %p53, %p54
      %p56 = scmp.ne.s32.totalorder %s45, %s46
      %p57 = scmp.eq.s32.totalorder %s37, 0
      %p58 = por %p56, %p57
      %p59 = scmp.ne.s32.totalorder %s45, %s46
      %p60 = scmp.eq.s32.totalorder %s38, 1
      %p61 = por %p59, %p60
      %p63 = scmp.ne.s32.totalorder %s46, %s62
      %p64 = scmp.eq.s32.totalorder %s38, 0
      %p65 = por %p63, %p64
      %s66 = ssub.s32 %s32, %s39
      %p67 = scmp.eq.s32.totalorder %s66, 0
      %s69 = sadd.s32 %s68, 1
      %s70 = scalar_select %p67, %s68, %s69
      %p73 = pneg %p67
      %p74 = scmp.eq.s32.totalorder %s32, 1
      %p75 = por %p73, %p74
      %p76 = scmp.ne.s32.totalorder %s68, %s71
      %p77 = scmp.eq.s32.totalorder %s32, 0
      %p78 = por %p76, %p77
      %p79 = scmp.ne.s32.totalorder %s68, %s71
      %p80 = scmp.eq.s32.totalorder %s37, 1
      %p81 = por %p79, %p80
      %p82 = scmp.ne.s32.totalorder %s71, %s72
      %p83 = scmp.eq.s32.totalorder %s37, 0
      %p84 = por %p82, %p83
      %p85 = scmp.ne.s32.totalorder %s71, %s72
      %p86 = scmp.eq.s32.totalorder %s38, 1
      %p87 = por %p85, %p86
      %p89 = scmp.ne.s32.totalorder %s72, %s88
      %p90 = scmp.eq.s32.totalorder %s38, 0
      %p91 = por %p89, %p90
      %s92 = ssub.s32 %s32, %s39
      %p93 = scmp.eq.s32.totalorder %s92, 0
      %s95 = sadd.s32 %s94, 1
      %s96 = scalar_select %p93, %s94, %s95
      %p99 = pneg %p93
      %p100 = scmp.eq.s32.totalorder %s32, 1
      %p101 = por %p99, %p100
      %p102 = scmp.ne.s32.totalorder %s94, %s97
      %p103 = scmp.eq.s32.totalorder %s32, 0
      %p104 = por %p102, %p103
      %p105 = scmp.ne.s32.totalorder %s94, %s97
      %p106 = scmp.eq.s32.totalorder %s37, 1
      %p107 = por %p105, %p106
      %p108 = scmp.ne.s32.totalorder %s97, %s98
      %p109 = scmp.eq.s32.totalorder %s37, 0
      %p110 = por %p108, %p109
      %p111 = scmp.ne.s32.totalorder %s97, %s98
      %p112 = scmp.eq.s32.totalorder %s38, 1
      %p113 = por %p111, %p112
      %p115 = scmp.ne.s32.totalorder %s98, %s114
      %p116 = scmp.eq.s32.totalorder %s38, 0
      %p117 = por %p115, %p116
      %s119 = sadd.s32 %s118, 1
      %p122 = scmp.eq.s32.totalorder %s32, 1
      %p123 = scmp.ne.s32.totalorder %s118, %s120
      %p124 = scmp.eq.s32.totalorder %s32, 0
      %p125 = por %p123, %p124
      %p126 = scmp.ne.s32.totalorder %s118, %s120
      %p127 = scmp.eq.s32.totalorder %s37, 1
      %p128 = por %p126, %p127
      %p129 = scmp.ne.s32.totalorder %s120, %s121
      %p130 = scmp.eq.s32.totalorder %s37, 0
      %p131 = por %p129, %p130
      %p132 = scmp.ne.s32.totalorder %s120, %s121
      %p133 = scmp.eq.s32.totalorder %s38, 1
      %p134 = por %p132, %p133
      %p136 = scmp.ne.s32.totalorder %s121, %s135
      %p137 = scmp.eq.s32.totalorder %s38, 0
      %p138 = por %p136, %p137
      %s140 = sadd.s32 %s139, 1
      %p143 = scmp.eq.s32.totalorder %s32, 1
      %p144 = scmp.ne.s32.totalorder %s139, %s141
      %p145 = scmp.eq.s32.totalorder %s32, 0
      %p146 = por %p144, %p145
      %p147 = scmp.ne.s32.totalorder %s139, %s141
      %p148 = scmp.eq.s32.totalorder %s37, 1
      %p149 = por %p147, %p148
      %p150 = scmp.ne.s32.totalorder %s141, %s142
      %p151 = scmp.eq.s32.totalorder %s37, 0
      %p152 = por %p150, %p151
      %p153 = scmp.ne.s32.totalorder %s141, %s142
      %p154 = scmp.eq.s32.totalorder %s38, 1
      %p155 = por %p153, %p154
      %p157 = scmp.ne.s32.totalorder %s142, %s156
      %p158 = scmp.eq.s32.totalorder %s38, 0
      %p159 = por %p157, %p158
      %s161 = sadd.s32 %s160, 1
      %p164 = scmp.eq.s32.totalorder %s32, 1
      %p165 = scmp.ne.s32.totalorder %s160, %s162
      %p166 = scmp.eq.s32.totalorder %s32, 0
      %p167 = por %p165, %p166
      %p168 = scmp.ne.s32.totalorder %s160, %s162
      %p169 = scmp.eq.s32.totalorder %s37, 1
      %p170 = por %p168, %p169
      %p171 = scmp.ne.s32.totalorder %s162, %s163
      %p172 = scmp.eq.s32.totalorder %s37, 0
      %p173 = por %p171, %p172
      %p174 = scmp.ne.s32.totalorder %s162, %s163
      %p175 = scmp.eq.s32.totalorder %s38, 1
      %p176 = por %p174, %p175
      %p178 = scmp.ne.s32.totalorder %s163, %s177
      %p179 = scmp.eq.s32.totalorder %s38, 0
      %p180 = por %p178, %p179
      %s182 = sadd.s32 %s181, 1
      %p185 = scmp.eq.s32.totalorder %s32, 1
      %p186 = scmp.ne.s32.totalorder %s181, %s183
      %p187 = scmp.eq.s32.totalorder %s32, 0
      %p188 = por %p186, %p187
      %p189 = scmp.ne.s32.totalorder %s181, %s183
      %p190 = scmp.eq.s32.totalorder %s37, 1
      %p191 = por %p189, %p190
      %p192 = scmp.ne.s32.totalorder %s183, %s184
      %p193 = scmp.eq.s32.totalorder %s37, 0
      %p194 = por %p192, %p193
      %p195 = scmp.ne.s32.totalorder %s183, %s184
      %p196 = scmp.eq.s32.totalorder %s38, 1
      %p197 = por %p195, %p196
      %p199 = scmp.ne.s32.totalorder %s184, %s198
      %p200 = scmp.eq.s32.totalorder %s38, 0
      %p201 = por %p199, %p200
      %s203 = sadd.s32 %s202, 1
      %p206 = scmp.eq.s32.totalorder %s32, 1
      %p207 = scmp.ne.s32.totalorder %s202, %s204
      %p208 = scmp.eq.s32.totalorder %s32, 0
      %p209 = por %p207, %p208
      %p210 = scmp.ne.s32.totalorder %s202, %s204
      %p211 = scmp.eq.s32.totalorder %s37, 1
      %p212 = por %p210, %p211
      %p213 = scmp.ne.s32.totalorder %s204, %s205
      %p214 = scmp.eq.s32.totalorder %s37, 0
      %p215 = por %p213, %p214
      %p216 = scmp.ne.s32.totalorder %s204, %s205
      %p217 = scmp.eq.s32.totalorder %s38, 1
      %p218 = por %p216, %p217
      %p220 = scmp.ne.s32.totalorder %s205, %s219
      %p221 = scmp.eq.s32.totalorder %s38, 0
      %p222 = por %p220, %p221
      %s224 = sadd.s32 %s223, 1
      %p227 = scmp.eq.s32.totalorder %s32, 1
      %p228 = scmp.ne.s32.totalorder %s223, %s225
      %p229 = scmp.eq.s32.totalorder %s32, 0
      %p230 = por %p228, %p229
      %p231 = scmp.ne.s32.totalorder %s223, %s225
      %p232 = scmp.eq.s32.totalorder %s37, 1
      %p233 = por %p231, %p232
      %p234 = scmp.ne.s32.totalorder %s225, %s226
      %p235 = scmp.eq.s32.totalorder %s37, 0
      %p236 = por %p234, %p235
      %p237 = scmp.ne.s32.totalorder %s225, %s226
      %p238 = scmp.eq.s32.totalorder %s38, 1
      %p239 = por %p237, %p238
      %p241 = scmp.ne.s32.totalorder %s226, %s240
      %p242 = scmp.eq.s32.totalorder %s38, 0
      %p243 = por %p241, %p242
      %s245 = sadd.s32 %s244, 1
      %p248 = scmp.eq.s32.totalorder %s32, 1
      %p249 = scmp.ne.s32.totalorder %s244, %s246
      %p250 = scmp.eq.s32.totalorder %s32, 0
      %p251 = por %p249, %p250
      %p252 = scmp.ne.s32.totalorder %s244, %s246
      %p253 = scmp.eq.s32.totalorder %s37, 1
      %p254 = por %p252, %p253
      %p255 = scmp.ne.s32.totalorder %s246, %s247
      %p256 = scmp.eq.s32.totalorder %s37, 0
      %p257 = por %p255, %p256
      %p258 = scmp.ne.s32.totalorder %s246, %s247
      %p259 = scmp.eq.s32.totalorder %s38, 1
      %p260 = por %p258, %p259
      %p262 = scmp.ne.s32.totalorder %s247, %s261
      %p263 = scmp.eq.s32.totalorder %s38, 0
      %p264 = por %p262, %p263
      %s266 = sadd.s32 %s265, 1
      %p269 = scmp.eq.s32.totalorder %s32, 1
      %p270 = scmp.ne.s32.totalorder %s265, %s267
      %p271 = scmp.eq.s32.totalorder %s32, 0
      %p272 = por %p270, %p271
      %p273 = scmp.ne.s32.totalorder %s265, %s267
      %p274 = scmp.eq.s32.totalorder %s37, 1
      %p275 = por %p273, %p274
      %p276 = scmp.ne.s32.totalorder %s267, %s268
      %p277 = scmp.eq.s32.totalorder %s37, 0
      %p278 = por %p276, %p277
      %p279 = scmp.ne.s32.totalorder %s267, %s268
      %p280 = scmp.eq.s32.totalorder %s38, 1
      %p281 = por %p279, %p280
      %p283 = scmp.ne.s32.totalorder %s268, %s282
      %p284 = scmp.eq.s32.totalorder %s38, 0
      %p285 = por %p283, %p284
      %s287 = sadd.s32 %s286, 1
      %p290 = scmp.eq.s32.totalorder %s32, 1
      %p291 = scmp.ne.s32.totalorder %s286, %s288
      %p292 = scmp.eq.s32.totalorder %s32, 0
      %p293 = por %p291, %p292
      %p294 = scmp.ne.s32.totalorder %s286, %s288
      %p295 = scmp.eq.s32.totalorder %s37, 1
      %p296 = por %p294, %p295
      %p297 = scmp.ne.s32.totalorder %s288, %s289
      %p298 = scmp.eq.s32.totalorder %s37, 0
      %p299 = por %p297, %p298
      %p300 = scmp.ne.s32.totalorder %s288, %s289
      %p301 = scmp.eq.s32.totalorder %s38, 1
      %p302 = por %p300, %p301
      %p304 = scmp.ne.s32.totalorder %s289, %s303
      %p305 = scmp.eq.s32.totalorder %s38, 0
      %p306 = por %p304, %p305
      %s308 = sadd.s32 %s307, 1
      %p311 = scmp.eq.s32.totalorder %s32, 1
      %p312 = scmp.ne.s32.totalorder %s307, %s309
      %p313 = scmp.eq.s32.totalorder %s32, 0
      %p314 = por %p312, %p313
      %p315 = scmp.ne.s32.totalorder %s307, %s309
      %p316 = scmp.eq.s32.totalorder %s37, 1
      %p317 = por %p315, %p316
      %p318 = scmp.ne.s32.totalorder %s309, %s310
      %p319 = scmp.eq.s32.totalorder %s37, 0
      %p320 = por %p318, %p319
      %p321 = scmp.ne.s32.totalorder %s309, %s310
      %p322 = scmp.eq.s32.totalorder %s38, 1
      %p323 = por %p321, %p322
      %p325 = scmp.ne.s32.totalorder %s310, %s324
      %p326 = scmp.eq.s32.totalorder %s38, 0
      %p327 = por %p325, %p326
      %s329 = sadd.s32 %s328, 1
      %p332 = scmp.eq.s32.totalorder %s32, 1
      %p333 = scmp.ne.s32.totalorder %s328, %s330
      %p334 = scmp.eq.s32.totalorder %s32, 0
      %p335 = por %p333, %p334
      %p336 = scmp.ne.s32.totalorder %s328, %s330
      %p337 = scmp.eq.s32.totalorder %s37, 1
      %p338 = por %p336, %p337
      %p339 = scmp.ne.s32.totalorder %s330, %s331
      %p340 = scmp.eq.s32.totalorder %s37, 0
      %p341 = por %p339, %p340
      %p342 = scmp.ne.s32.totalorder %s330, %s331
      %p343 = scmp.eq.s32.totalorder %s38, 1
      %p344 = por %p342, %p343
      %p346 = scmp.ne.s32.totalorder %s331, %s345
      %p347 = scmp.eq.s32.totalorder %s38, 0
      %p348 = por %p346, %p347
      %s350 = sadd.s32 %s349, 1
      %p353 = scmp.eq.s32.totalorder %s32, 1
      %p354 = scmp.ne.s32.totalorder %s349, %s351
      %p355 = scmp.eq.s32.totalorder %s32, 0
      %p356 = por %p354, %p355
      %p357 = scmp.ne.s32.totalorder %s349, %s351
      %p358 = scmp.eq.s32.totalorder %s37, 1
      %p359 = por %p357, %p358
      %p360 = scmp.ne.s32.totalorder %s351, %s352
      %p361 = scmp.eq.s32.totalorder %s37, 0
      %p362 = por %p360, %p361
      %p363 = scmp.ne.s32.totalorder %s351, %s352
      %p364 = scmp.eq.s32.totalorder %s38, 1
      %p365 = por %p363, %p364
      %p367 = scmp.ne.s32.totalorder %s352, %s366
      %p368 = scmp.eq.s32.totalorder %s38, 0
      %p369 = por %p367, %p368
      %s371 = sadd.s32 %s370, 1
      %p374 = scmp.eq.s32.totalorder %s32, 1
      %p375 = scmp.ne.s32.totalorder %s370, %s372
      %p376 = scmp.eq.s32.totalorder %s32, 0
      %p377 = por %p375, %p376
      %p378 = scmp.ne.s32.totalorder %s370, %s372
      %p379 = scmp.eq.s32.totalorder %s37, 1
      %p380 = por %p378, %p379
      %p381 = scmp.ne.s32.totalorder %s372, %s373
      %p382 = scmp.eq.s32.totalorder %s37, 0
      %p383 = por %p381, %p382
      %p384 = scmp.ne.s32.totalorder %s372, %s373
      %p385 = scmp.eq.s32.totalorder %s38, 1
      %p386 = por %p384, %p385
      %p388 = scmp.ne.s32.totalorder %s373, %s387
      %p389 = scmp.eq.s32.totalorder %s38, 0
      %p390 = por %p388, %p389
      %s392 = sadd.s32 %s391, 1
      %p395 = scmp.eq.s32.totalorder %s32, 1
      %p396 = scmp.ne.s32.totalorder %s391, %s393
      %p397 = scmp.eq.s32.totalorder %s32, 0
      %p398 = por %p396, %p397
      %p399 = scmp.ne.s32.totalorder %s391, %s393
      %p400 = scmp.eq.s32.totalorder %s37, 1
      %p401 = por %p399, %p400
      %p402 = scmp.ne.s32.totalorder %s393, %s394
      %p403 = scmp.eq.s32.totalorder %s37, 0
      %p404 = por %p402, %p403
      %p405 = scmp.ne.s32.totalorder %s393, %s394
      %p406 = scmp.eq.s32.totalorder %s38, 1
      %p407 = por %p405, %p406
      %p409 = scmp.ne.s32.totalorder %s394, %s408
      %p410 = scmp.eq.s32.totalorder %s38, 0
      %p411 = por %p409, %p410
      %s413 = sadd.s32 %s412, 1
      %p416 = scmp.eq.s32.totalorder %s32, 1
      %p417 = scmp.ne.s32.totalorder %s412, %s414
      %p418 = scmp.eq.s32.totalorder %s32, 0
      %p419 = por %p417, %p418
      %p420 = scmp.ne.s32.totalorder %s412, %s414
      %p421 = scmp.eq.s32.totalorder %s37, 1
      %p422 = por %p420, %p421
      %p423 = scmp.ne.s32.totalorder %s414, %s415
      %p424 = scmp.eq.s32.totalorder %s37, 0
      %p425 = por %p423, %p424
      %p426 = scmp.ne.s32.totalorder %s414, %s415
      %p427 = scmp.eq.s32.totalorder %s38, 1
      %p428 = por %p426, %p427
      %p430 = scmp.ne.s32.totalorder %s415, %s429
      %p431 = scmp.eq.s32.totalorder %s38, 0
      %p432 = por %p430, %p431
      %s434 = sadd.s32 %s433, 1
      %p437 = scmp.eq.s32.totalorder %s32, 1
      %p438 = scmp.ne.s32.totalorder %s433, %s435
      %p439 = scmp.eq.s32.totalorder %s32, 0
      %p440 = por %p438, %p439
      %p441 = scmp.ne.s32.totalorder %s433, %s435
      %p442 = scmp.eq.s32.totalorder %s37, 1
      %p443 = por %p441, %p442
      %p444 = scmp.ne.s32.totalorder %s435, %s436
      %p445 = scmp.eq.s32.totalorder %s37, 0
      %p446 = por %p444, %p445
      %p447 = scmp.ne.s32.totalorder %s435, %s436
      %p448 = scmp.eq.s32.totalorder %s38, 1
      %p449 = por %p447, %p448
      %p451 = scmp.ne.s32.totalorder %s436, %s450
      %p452 = scmp.eq.s32.totalorder %s38, 0
      %p453 = por %p451, %p452
      %s455 = sadd.s32 %s454, 1
      %p458 = scmp.eq.s32.totalorder %s32, 1
      %p459 = scmp.ne.s32.totalorder %s454, %s456
      %p460 = scmp.eq.s32.totalorder %s32, 0
      %p461 = por %p459, %p460
      %p462 = scmp.ne.s32.totalorder %s454, %s456
      %p463 = scmp.eq.s32.totalorder %s37, 1
      %p464 = por %p462, %p463
      %p465 = scmp.ne.s32.totalorder %s456, %s457
      %p466 = scmp.eq.s32.totalorder %s37, 0
      %p467 = por %p465, %p466
      %p468 = scmp.ne.s32.totalorder %s456, %s457
      %p469 = scmp.eq.s32.totalorder %s38, 1
      %p470 = por %p468, %p469
      %p472 = scmp.ne.s32.totalorder %s457, %s471
      %p473 = scmp.eq.s32.totalorder %s38, 0
      %p474 = por %p472, %p473
      %s476 = sadd.s32 %s475, 1
      %p479 = scmp.eq.s32.totalorder %s32, 1
      %p480 = scmp.ne.s32.totalorder %s475, %s477
      %p481 = scmp.eq.s32.totalorder %s32, 0
      %p482 = por %p480, %p481
      %p483 = scmp.ne.s32.totalorder %s475, %s477
      %p484 = scmp.eq.s32.totalorder %s37, 1
      %p485 = por %p483, %p484
      %p486 = scmp.ne.s32.totalorder %s477, %s478
      %p487 = scmp.eq.s32.totalorder %s37, 0
      %p488 = por %p486, %p487
      %p489 = scmp.ne.s32.totalorder %s477, %s478
      %p490 = scmp.eq.s32.totalorder %s38, 1
      %p491 = por %p489, %p490
      %p493 = scmp.ne.s32.totalorder %s478, %s492
      %p494 = scmp.eq.s32.totalorder %s38, 0
      %p495 = por %p493, %p494
      %s496 = ssub.s32 %s32, %s39
      %p497 = scmp.eq.s32.totalorder %s496, 0
      %s499 = sadd.s32 %s498, 1
      %s500 = scalar_select %p497, %s498, %s499
      %p503 = pneg %p497
      %p504 = scmp.eq.s32.totalorder %s32, 1
      %p505 = por %p503, %p504
      %p506 = scmp.ne.s32.totalorder %s498, %s501
      %p507 = scmp.eq.s32.totalorder %s32, 0
      %p508 = por %p506, %p507
      %p509 = scmp.ne.s32.totalorder %s498, %s501
      %p510 = scmp.eq.s32.totalorder %s37, 1
      %p511 = por %p509, %p510
      %p512 = scmp.ne.s32.totalorder %s501, %s502
      %p513 = scmp.eq.s32.totalorder %s37, 0
      %p514 = por %p512, %p513
      %p515 = scmp.ne.s32.totalorder %s501, %s502
      %p516 = scmp.eq.s32.totalorder %s38, 1
      %p517 = por %p515, %p516
      %p519 = scmp.ne.s32.totalorder %s502, %s518
      %p520 = scmp.eq.s32.totalorder %s38, 0
      %p521 = por %p519, %p520
      %p522 = scmp.le.s32.totalorder 1, %s32
      %p523 = scmp.lt.s32.totalorder %s32, 3
      %p524 = pnand %p522, %p523
      %p525 = pneg %p524
      // Predicated region
      $region9: #{tpu_custom_call.1} parent=5 // pred_check
        _
      $region10: #{tpu_custom_call.1} parent=5 // pred_check_branch
        %527 = sbr.rel (%p524) target = $region12
      $region11: #{tpu_custom_call.1} parent=5 // pred_region
        %s528 = ssub.s32 %s32, 1
        // Predicated region
        $region13: #{tpu_custom_call.1} parent=11 // pred_check
          %p529 = pneg %p131
        $region14: #{tpu_custom_call.1} parent=11 // pred_check_branch
          %531 = sbr.rel (%p529) target = $region16
        $region15: #{tpu_custom_call.1} parent=11 // pred_region
          _
        $region16: #{tpu_custom_call.1} parent=11 // pred_fallthru
          _
        // Predicated region
        $region17: #{tpu_custom_call.1} parent=11 // pred_check
          %p532 = pneg %p152
        $region18: #{tpu_custom_call.1} parent=11 // pred_check_branch
          %534 = sbr.rel (%p532) target = $region20
        $region19: #{tpu_custom_call.1} parent=11 // pred_region
          _
        $region20: #{tpu_custom_call.1} parent=11 // pred_fallthru
          _
        // Predicated region
        $region21: #{tpu_custom_call.1} parent=11 // pred_check
          %p535 = pneg %p173
        $region22: #{tpu_custom_call.1} parent=11 // pred_check_branch
          %537 = sbr.rel (%p535) target = $region24
        $region23: #{tpu_custom_call.1} parent=11 // pred_region
          %s539 = ssub.s32 1024, 1024
          %540 = vsyncadd [#allocation3], %s539
          %s541 = sshll.u32 [#allocation2], 4
          %s542 = int_to_ptr.vmem [resolvable:$true] %s541
          %547 = dma.hbm_to_vmem [thread:$0]  %s5, 1024, %s542, [#allocation3], 64, 64, 4
        $region24: #{tpu_custom_call.1} parent=11 // pred_fallthru
          _
        // Predicated region
        $region25: #{tpu_custom_call.1} parent=11 // pred_check
          %p548 = pneg %p194
        $region26: #{tpu_custom_call.1} parent=11 // pred_check_branch
          %550 = sbr.rel (%p548) target = $region28
        $region27: #{tpu_custom_call.1} parent=11 // pred_region
          _
        $region28: #{tpu_custom_call.1} parent=11 // pred_fallthru
          _
        // Predicated region
        $region29: #{tpu_custom_call.1} parent=11 // pred_check
          %p551 = pneg %p215
        $region30: #{tpu_custom_call.1} parent=11 // pred_check_branch
          %553 = sbr.rel (%p551) target = $region32
        $region31: #{tpu_custom_call.1} parent=11 // pred_region
          _
        $region32: #{tpu_custom_call.1} parent=11 // pred_fallthru
          _
        // Predicated region
        $region33: #{tpu_custom_call.1} parent=11 // pred_check
          %p554 = pneg %p236
        $region34: #{tpu_custom_call.1} parent=11 // pred_check_branch
          %556 = sbr.rel (%p554) target = $region36
        $region35: #{tpu_custom_call.1} parent=11 // pred_region
          _
        $region36: #{tpu_custom_call.1} parent=11 // pred_fallthru
          _
        // Predicated region
        $region37: #{tpu_custom_call.1} parent=11 // pred_check
          %p557 = pneg %p257
        $region38: #{tpu_custom_call.1} parent=11 // pred_check_branch
          %559 = sbr.rel (%p557) target = $region40
        $region39: #{tpu_custom_call.1} parent=11 // pred_region
          _
        $region40: #{tpu_custom_call.1} parent=11 // pred_fallthru
          _
        // Predicated region
        $region41: #{tpu_custom_call.1} parent=11 // pred_check
          %p560 = pneg %p278
        $region42: #{tpu_custom_call.1} parent=11 // pred_check_branch
          %562 = sbr.rel (%p560) target = $region44
        $region43: #{tpu_custom_call.1} parent=11 // pred_region
          _
        $region44: #{tpu_custom_call.1} parent=11 // pred_fallthru
          _
        // Predicated region
        $region45: #{tpu_custom_call.1} parent=11 // pred_check
          %p563 = pneg %p299
        $region46: #{tpu_custom_call.1} parent=11 // pred_check_branch
          %565 = sbr.rel (%p563) target = $region48
        $region47: #{tpu_custom_call.1} parent=11 // pred_region
          %s567 = ssub.s32 1024, 1024
          %568 = vsyncadd [#allocation6], %s567
          %s569 = sshll.u32 [#allocation5], 4
          %s570 = int_to_ptr.vmem [resolvable:$true] %s569
          %575 = dma.hbm_to_vmem [thread:$0]  %s11, 1024, %s570, [#allocation6], 64, 64, 4
        $region48: #{tpu_custom_call.1} parent=11 // pred_fallthru
          _
        // Predicated region
        $region49: #{tpu_custom_call.1} parent=11 // pred_check
          %p576 = pneg %p320
        $region50: #{tpu_custom_call.1} parent=11 // pred_check_branch
          %578 = sbr.rel (%p576) target = $region52
        $region51: #{tpu_custom_call.1} parent=11 // pred_region
          _
        $region52: #{tpu_custom_call.1} parent=11 // pred_fallthru
          _
        // Predicated region
        $region53: #{tpu_custom_call.1} parent=11 // pred_check
          %p579 = pneg %p341
        $region54: #{tpu_custom_call.1} parent=11 // pred_check_branch
          %581 = sbr.rel (%p579) target = $region56
        $region55: #{tpu_custom_call.1} parent=11 // pred_region
          %s583 = ssub.s32 2048, 2048
          %584 = vsyncadd [#allocation6], %s583
          %s585 = sshll.u32 [#allocation7], 4
          %s586 = int_to_ptr.vmem [resolvable:$true] %s585
          %591 = dma.hbm_to_vmem [thread:$0]  %s13, 2048, %s586, [#allocation6], 64, 64, 4
        $region56: #{tpu_custom_call.1} parent=11 // pred_fallthru
          _
        // Predicated region
        $region57: #{tpu_custom_call.1} parent=11 // pred_check
          %p592 = pneg %p362
        $region58: #{tpu_custom_call.1} parent=11 // pred_check_branch
          %594 = sbr.rel (%p592) target = $region60
        $region59: #{tpu_custom_call.1} parent=11 // pred_region
          _
        $region60: #{tpu_custom_call.1} parent=11 // pred_fallthru
          _
        // Predicated region
        $region61: #{tpu_custom_call.1} parent=11 // pred_check
          %p595 = pneg %p383
        $region62: #{tpu_custom_call.1} parent=11 // pred_check_branch
          %597 = sbr.rel (%p595) target = $region64
        $region63: #{tpu_custom_call.1} parent=11 // pred_region
          _
        $region64: #{tpu_custom_call.1} parent=11 // pred_fallthru
          _
        // Predicated region
        $region65: #{tpu_custom_call.1} parent=11 // pred_check
          %p598 = pneg %p404
        $region66: #{tpu_custom_call.1} parent=11 // pred_check_branch
          %600 = sbr.rel (%p598) target = $region68
        $region67: #{tpu_custom_call.1} parent=11 // pred_region
          _
        $region68: #{tpu_custom_call.1} parent=11 // pred_fallthru
          _
        // Predicated region
        $region69: #{tpu_custom_call.1} parent=11 // pred_check
          %p601 = pneg %p425
        $region70: #{tpu_custom_call.1} parent=11 // pred_check_branch
          %603 = sbr.rel (%p601) target = $region72
        $region71: #{tpu_custom_call.1} parent=11 // pred_region
          _
        $region72: #{tpu_custom_call.1} parent=11 // pred_fallthru
          _
        // Predicated region
        $region73: #{tpu_custom_call.1} parent=11 // pred_check
          %p604 = pneg %p446
        $region74: #{tpu_custom_call.1} parent=11 // pred_check_branch
          %606 = sbr.rel (%p604) target = $region76
        $region75: #{tpu_custom_call.1} parent=11 // pred_region
          _
        $region76: #{tpu_custom_call.1} parent=11 // pred_fallthru
          _
        // Predicated region
        $region77: #{tpu_custom_call.1} parent=11 // pred_check
          %p607 = pneg %p467
        $region78: #{tpu_custom_call.1} parent=11 // pred_check_branch
          %609 = sbr.rel (%p607) target = $region80
        $region79: #{tpu_custom_call.1} parent=11 // pred_region
          _
        $region80: #{tpu_custom_call.1} parent=11 // pred_fallthru
          _
        // Predicated region
        $region81: #{tpu_custom_call.1} parent=11 // pred_check
          %p610 = pneg %p488
        $region82: #{tpu_custom_call.1} parent=11 // pred_check_branch
          %612 = sbr.rel (%p610) target = $region84
        $region83: #{tpu_custom_call.1} parent=11 // pred_region
          _
        $region84: #{tpu_custom_call.1} parent=11 // pred_fallthru
          _
      $region12: #{tpu_custom_call.1} parent=5 // pred_fallthru
        _
      %p613 = scmp.lt.s32.totalorder %s32, 2
      // Predicated region
      $region85: #{tpu_custom_call.1} parent=5 // pred_check
        %p614 = pneg %p613
      $region86: #{tpu_custom_call.1} parent=5 // pred_check_branch
        %616 = sbr.rel (%p614) target = $region88
      $region87: #{tpu_custom_call.1} parent=5 // pred_region
        // Predicated region
        $region89: #{tpu_custom_call.1} parent=87 // pred_check
          %p617 = pneg %p52
        $region90: #{tpu_custom_call.1} parent=87 // pred_check_branch
          %619 = sbr.rel (%p617) target = $region92
        $region91: #{tpu_custom_call.1} parent=87 // pred_region
          %p620 = scmp.lt.s32.totalorder %s32, 1
          %s621 = scalar_select %p620, %s32, 1
          %s622 = smul.addr %s621, 4
          %s623 = scalar_lea.vmem %s0, %s622
        $region92: #{tpu_custom_call.1} parent=87 // pred_fallthru
          _
        // Predicated region
        $region93: #{tpu_custom_call.1} parent=87 // pred_check
          %p624 = pneg %p78
        $region94: #{tpu_custom_call.1} parent=87 // pred_check_branch
          %626 = sbr.rel (%p624) target = $region96
        $region95: #{tpu_custom_call.1} parent=87 // pred_region
          %p627 = scmp.lt.s32.totalorder %s32, 1
          %s628 = scalar_select %p627, %s32, 1
          %s629 = smul.addr %s628, 4
          %s630 = scalar_lea.vmem %s1, %s629
        $region96: #{tpu_custom_call.1} parent=87 // pred_fallthru
          _
        // Predicated region
        $region97: #{tpu_custom_call.1} parent=87 // pred_check
          %p631 = pneg %p104
        $region98: #{tpu_custom_call.1} parent=87 // pred_check_branch
          %633 = sbr.rel (%p631) target = $region100
        $region99: #{tpu_custom_call.1} parent=87 // pred_region
          %p634 = scmp.lt.s32.totalorder %s32, 1
          %s635 = scalar_select %p634, %s32, 1
          %s636 = smul.addr %s635, 2
          %s637 = scalar_lea.vmem %s2, %s636
        $region100: #{tpu_custom_call.1} parent=87 // pred_fallthru
          _
      $region88: #{tpu_custom_call.1} parent=5 // pred_fallthru
        _
      %p638 = scmp.le.s32.totalorder 1, %s32
      %p639 = scmp.lt.s32.totalorder %s32, 3
      %p640 = pnand %p638, %p639
      %p641 = pneg %p640
      // Predicated region
      $region101: #{tpu_custom_call.1} parent=5 // pred_check
        _
      $region102: #{tpu_custom_call.1} parent=5 // pred_check_branch
        %643 = sbr.rel (%p640) target = $region104
      $region103: #{tpu_custom_call.1} parent=5 // pred_region
        %s644 = ssub.s32 %s32, 1
        // Predicated region
        $region105: #{tpu_custom_call.1} parent=103 // pred_check
          %p645 = pneg %p173
        $region106: #{tpu_custom_call.1} parent=103 // pred_check_branch
          %647 = sbr.rel (%p645) target = $region108
        $region107: #{tpu_custom_call.1} parent=103 // pred_region
          %648 = dma.done [#allocation3], 1024
        $region108: #{tpu_custom_call.1} parent=103 // pred_fallthru
          _
        // Predicated region
        $region109: #{tpu_custom_call.1} parent=103 // pred_check
          %p649 = pneg %p299
        $region110: #{tpu_custom_call.1} parent=103 // pred_check_branch
          %651 = sbr.rel (%p649) target = $region112
        $region111: #{tpu_custom_call.1} parent=103 // pred_region
          %652 = dma.done [#allocation6], 1024
        $region112: #{tpu_custom_call.1} parent=103 // pred_fallthru
          _
        // Predicated region
        $region113: #{tpu_custom_call.1} parent=103 // pred_check
          %p653 = pneg %p341
        $region114: #{tpu_custom_call.1} parent=103 // pred_check_branch
          %655 = sbr.rel (%p653) target = $region116
        $region115: #{tpu_custom_call.1} parent=103 // pred_region
          %656 = dma.done [#allocation6], 2048
        $region116: #{tpu_custom_call.1} parent=103 // pred_fallthru
          _
        %p657 = scmp.lt.s32.totalorder %s37, 1
        %s658 = scalar_select %p657, %s37, 1
        %s659 = smul.addr %s658, 4
        %s660 = scalar_lea.vmem %s0, %s659
        %p661 = pneg %p58
        %p662 = pneg %p55
        %p663 = scmp.lt.s32.totalorder %s37, 1
        %s664 = scalar_select %p663, %s37, 1
        %s665 = smul.addr %s664, 4
        %s666 = scalar_lea.vmem %s1, %s665
        %p667 = pneg %p84
        %p668 = pneg %p81
        %p669 = scmp.lt.s32.totalorder %s37, 1
        %s670 = scalar_select %p669, %s37, 1
        %s671 = smul.addr %s670, 2
        %s672 = scalar_lea.vmem %s2, %s671
        %p673 = pneg %p110
        %p674 = pneg %p107
        %p675 = pneg %p131
        %p676 = pneg %p128
        %p677 = pneg %p152
        %p678 = pneg %p149
        %p679 = pneg %p173
        %p680 = pneg %p170
        %p681 = pneg %p194
        %p682 = pneg %p191
        %p683 = pneg %p215
        %p684 = pneg %p212
        %p685 = pneg %p236
        %p686 = pneg %p233
        %p687 = pneg %p257
        %p688 = pneg %p254
        %p689 = pneg %p278
        %p690 = pneg %p275
        %p691 = pneg %p299
        %p692 = pneg %p296
        %p693 = pneg %p320
        %p694 = pneg %p317
        %p695 = pneg %p341
        %p696 = pneg %p338
        %p697 = pneg %p362
        %p698 = pneg %p359
        %p699 = pneg %p383
        %p700 = pneg %p380
        %p701 = pneg %p404
        %p702 = pneg %p401
        %p703 = pneg %p425
        %p704 = pneg %p422
        %p705 = pneg %p446
        %p706 = pneg %p443
        %p707 = pneg %p467
        %p708 = pneg %p464
        %p709 = pneg %p488
        %p710 = pneg %p485
        %p711 = pneg %p514
        %p712 = pneg %p511
        %s713 = sand.u32 %s501, 1
        %s714 = scalar_lea.sflag [#allocation4], %s713
        %s715 = sand.u32 %s501, 1
        %s716 = smul.addr %s715, 2
        %s717 = scalar_lea.vmem [#allocation8], %s716
        %p718 = scmp.lt.s32.totalorder %s37, 1
        %s719 = scalar_select %p718, %s37, 1
        %s720 = smul.addr %s719, 4
        %s721 = scalar_lea.vmem %s0, %s720
        %p722 = scmp.lt.s32.totalorder %s37, 1
        %s723 = scalar_select %p722, %s37, 1
        %s724 = smul.addr %s723, 4
        %s725 = scalar_lea.vmem %s1, %s724
        %p726 = scmp.lt.s32.totalorder %s37, 1
        %s727 = scalar_select %p726, %s37, 1
        %s728 = smul.addr %s727, 2
        %s729 = scalar_lea.vmem %s2, %s728
        %v731 = vld [vmem:[%s3] sm:$0xf]
        %v732 = vld [vmem:[%s3 + $0x4] sm:$0xf]
        %v733 = vld [vmem:[%s3 + $0x8] sm:$0xf]
        %v734 = vld [vmem:[%s3 + $0xc] sm:$0xf]
        %v735 = vld [vmem:[%s3 + $0x10] sm:$0xf]
        %v736 = vld [vmem:[%s3 + $0x14] sm:$0xf]
        %v737 = vld [vmem:[%s3 + $0x18] sm:$0xf]
        %v738 = vld [vmem:[%s3 + $0x1c] sm:$0xf]
        %v739 = vld [vmem:[%s3 + $0x20] sm:$0xf]
        %v740 = vld [vmem:[%s3 + $0x24] sm:$0xf]
        %v741 = vld [vmem:[%s3 + $0x28] sm:$0xf]
        %v742 = vld [vmem:[%s3 + $0x2c] sm:$0xf]
        %v743 = vld [vmem:[%s3 + $0x30] sm:$0xf]
        %v744 = vld [vmem:[%s3 + $0x34] sm:$0xf]
        %v745 = vld [vmem:[%s3 + $0x38] sm:$0xf]
        %v746 = vld [vmem:[%s3 + $0x3c] sm:$0xf]
        %v747 = vld [vmem:[#allocation2] sm:$0xf]
        %v748 = vld [vmem:[#allocation2 + $0x4] sm:$0xf]
        %v749 = vld [vmem:[#allocation2 + $0x8] sm:$0xf]
        %v750 = vld [vmem:[#allocation2 + $0xc] sm:$0xf]
        %v751 = vld [vmem:[#allocation2 + $0x10] sm:$0xf]
        %v752 = vld [vmem:[#allocation2 + $0x14] sm:$0xf]
        %v753 = vld [vmem:[#allocation2 + $0x18] sm:$0xf]
        %v754 = vld [vmem:[#allocation2 + $0x1c] sm:$0xf]
        %v755 = vld [vmem:[#allocation2 + $0x20] sm:$0xf]
        %v756 = vld [vmem:[#allocation2 + $0x24] sm:$0xf]
        %v757 = vld [vmem:[#allocation2 + $0x28] sm:$0xf]
        %v758 = vld [vmem:[#allocation2 + $0x2c] sm:$0xf]
        %v759 = vld [vmem:[#allocation2 + $0x30] sm:$0xf]
        %v760 = vld [vmem:[#allocation2 + $0x34] sm:$0xf]
        %v761 = vld [vmem:[#allocation2 + $0x38] sm:$0xf]
        %v762 = vld [vmem:[#allocation2 + $0x3c] sm:$0xf]
        %v763 = vld [vmem:[%s7] sm:$0xf]
        %v764 = vld [vmem:[%s7 + $0x4] sm:$0xf]
        %v765 = vld [vmem:[%s7 + $0x8] sm:$0xf]
        %v766 = vld [vmem:[%s7 + $0xc] sm:$0xf]
        %v767 = vld [vmem:[%s7 + $0x10] sm:$0xf]
        %v768 = vld [vmem:[%s7 + $0x14] sm:$0xf]
        %v769 = vld [vmem:[%s7 + $0x18] sm:$0xf]
        %v770 = vld [vmem:[%s7 + $0x1c] sm:$0xf]
        %v771 = vld [vmem:[%s7 + $0x20] sm:$0xf]
        %v772 = vld [vmem:[%s7 + $0x24] sm:$0xf]
        %v773 = vld [vmem:[%s7 + $0x28] sm:$0xf]
        %v774 = vld [vmem:[%s7 + $0x2c] sm:$0xf]
        %v775 = vld [vmem:[%s7 + $0x30] sm:$0xf]
        %v776 = vld [vmem:[%s7 + $0x34] sm:$0xf]
        %v777 = vld [vmem:[%s7 + $0x38] sm:$0xf]
        %v778 = vld [vmem:[%s7 + $0x3c] sm:$0xf]
        %v779 = vld [vmem:[%s7 + $0x40] sm:$0xf]
        %v780 = vld [vmem:[%s7 + $0x44] sm:$0xf]
        %v781 = vld [vmem:[%s7 + $0x48] sm:$0xf]
        %v782 = vld [vmem:[%s7 + $0x4c] sm:$0xf]
        %v783 = vld [vmem:[%s7 + $0x50] sm:$0xf]
        %v784 = vld [vmem:[%s7 + $0x54] sm:$0xf]
        %v785 = vld [vmem:[%s7 + $0x58] sm:$0xf]
        %v786 = vld [vmem:[%s7 + $0x5c] sm:$0xf]
        %v787 = vld [vmem:[%s7 + $0x60] sm:$0xf]
        %v788 = vld [vmem:[%s7 + $0x64] sm:$0xf]
        %v789 = vld [vmem:[%s7 + $0x68] sm:$0xf]
        %v790 = vld [vmem:[%s7 + $0x6c] sm:$0xf]
        %v791 = vld [vmem:[%s7 + $0x70] sm:$0xf]
        %v792 = vld [vmem:[%s7 + $0x74] sm:$0xf]
        %v793 = vld [vmem:[%s7 + $0x78] sm:$0xf]
        %v794 = vld [vmem:[%s7 + $0x7c] sm:$0xf]
        %v795 = vld [vmem:[%s4] sm:$0xff]
        %v796 = vld [vmem:[%s4 + $0x8] sm:$0xff]
        %v797 = vld [vmem:[%s4 + $0x10] sm:$0xff]
        %v798 = vld [vmem:[%s4 + $0x18] sm:$0xff]
        %v799 = vld [vmem:[%s4 + $0x20] sm:$0xff]
        %v800 = vld [vmem:[%s4 + $0x28] sm:$0xff]
        %v801 = vld [vmem:[%s4 + $0x30] sm:$0xff]
        %v802 = vld [vmem:[%s4 + $0x38] sm:$0xff]
        %v803 = vld [vmem:[%s4 + $0x40] sm:$0xff]
        %v804 = vld [vmem:[%s4 + $0x48] sm:$0xff]
        %v805 = vld [vmem:[%s4 + $0x50] sm:$0xff]
        %v806 = vld [vmem:[%s4 + $0x58] sm:$0xff]
        %v807 = vld [vmem:[%s4 + $0x60] sm:$0xff]
        %v808 = vld [vmem:[%s4 + $0x68] sm:$0xff]
        %v809 = vld [vmem:[%s4 + $0x70] sm:$0xff]
        %v810 = vld [vmem:[%s4 + $0x78] sm:$0xff]
        %v811 = vld [vmem:[%s6] sm:$0xff]
        %v812 = vld [vmem:[%s6 + $0x8] sm:$0xff]
        %v813 = vld [vmem:[%s6 + $0x10] sm:$0xff]
        %v814 = vld [vmem:[%s6 + $0x18] sm:$0xff]
        %v815 = vld [vmem:[%s6 + $0x20] sm:$0xff]
        %v816 = vld [vmem:[%s6 + $0x28] sm:$0xff]
        %v817 = vld [vmem:[%s6 + $0x30] sm:$0xff]
        %v818 = vld [vmem:[%s6 + $0x38] sm:$0xff]
        %v819 = vld [vmem:[%s6 + $0x40] sm:$0xff]
        %v820 = vld [vmem:[%s6 + $0x48] sm:$0xff]
        %v821 = vld [vmem:[%s6 + $0x50] sm:$0xff]
        %v822 = vld [vmem:[%s6 + $0x58] sm:$0xff]
        %v823 = vld [vmem:[%s6 + $0x60] sm:$0xff]
        %v824 = vld [vmem:[%s6 + $0x68] sm:$0xff]
        %v825 = vld [vmem:[%s6 + $0x70] sm:$0xff]
        %v826 = vld [vmem:[%s6 + $0x78] sm:$0xff]
        %v827 = vld [vmem:[%s8] sm:$0xff]
        %v828 = vld [vmem:[%s8 + $0x8] sm:$0xff]
        %v829 = vld [vmem:[%s8 + $0x10] sm:$0xff]
        %v830 = vld [vmem:[%s8 + $0x18] sm:$0xff]
        %v831 = vld [vmem:[%s8 + $0x20] sm:$0xff]
        %v832 = vld [vmem:[%s8 + $0x28] sm:$0xff]
        %v833 = vld [vmem:[%s8 + $0x30] sm:$0xff]
        %v834 = vld [vmem:[%s8 + $0x38] sm:$0xff]
        %v835 = vld [vmem:[%s8 + $0x40] sm:$0xff]
        %v836 = vld [vmem:[%s8 + $0x48] sm:$0xff]
        %v837 = vld [vmem:[%s8 + $0x50] sm:$0xff]
        %v838 = vld [vmem:[%s8 + $0x58] sm:$0xff]
        %v839 = vld [vmem:[%s8 + $0x60] sm:$0xff]
        %v840 = vld [vmem:[%s8 + $0x68] sm:$0xff]
        %v841 = vld [vmem:[%s8 + $0x70] sm:$0xff]
        %v842 = vld [vmem:[%s8 + $0x78] sm:$0xff]
        %v843 = vld [vmem:[%s8 + $0x80] sm:$0xff]
        %v844 = vld [vmem:[%s8 + $0x88] sm:$0xff]
        %v845 = vld [vmem:[%s8 + $0x90] sm:$0xff]
        %v846 = vld [vmem:[%s8 + $0x98] sm:$0xff]
        %v847 = vld [vmem:[%s8 + $0xa0] sm:$0xff]
        %v848 = vld [vmem:[%s8 + $0xa8] sm:$0xff]
        %v849 = vld [vmem:[%s8 + $0xb0] sm:$0xff]
        %v850 = vld [vmem:[%s8 + $0xb8] sm:$0xff]
        %v851 = vld [vmem:[%s8 + $0xc0] sm:$0xff]
        %v852 = vld [vmem:[%s8 + $0xc8] sm:$0xff]
        %v853 = vld [vmem:[%s8 + $0xd0] sm:$0xff]
        %v854 = vld [vmem:[%s8 + $0xd8] sm:$0xff]
        %v855 = vld [vmem:[%s8 + $0xe0] sm:$0xff]
        %v856 = vld [vmem:[%s8 + $0xe8] sm:$0xff]
        %v857 = vld [vmem:[%s8 + $0xf0] sm:$0xff]
        %v858 = vld [vmem:[%s8 + $0xf8] sm:$0xff]
        %v859 = vld [vmem:[%s721] sm:$0xf]
        %861 = vset.pattern.permute.xlu0 0
        %862 = vperm.xlu0 %861, %v795
        %v863 = vpop.permute.xlu0 %862
        %866 = vset.pattern.permute.xlu0 0
        %867 = vperm.xlu0 %866, %v796
        %v868 = vpop.permute.xlu0 %867
        %871 = vset.pattern.permute.xlu0 0
        %872 = vperm.xlu0 %871, %v797
        %v873 = vpop.permute.xlu0 %872
        %876 = vset.pattern.permute.xlu0 0
        %877 = vperm.xlu0 %876, %v798
        %v878 = vpop.permute.xlu0 %877
        %881 = vset.pattern.permute.xlu0 0
        %882 = vperm.xlu0 %881, %v799
        %v883 = vpop.permute.xlu0 %882
        %886 = vset.pattern.permute.xlu0 0
        %887 = vperm.xlu0 %886, %v800
        %v888 = vpop.permute.xlu0 %887
        %891 = vset.pattern.permute.xlu0 0
        %892 = vperm.xlu0 %891, %v801
        %v893 = vpop.permute.xlu0 %892
        %896 = vset.pattern.permute.xlu0 0
        %897 = vperm.xlu0 %896, %v802
        %v898 = vpop.permute.xlu0 %897
        %901 = vset.pattern.permute.xlu0 0
        %902 = vperm.xlu0 %901, %v803
        %v903 = vpop.permute.xlu0 %902
        %906 = vset.pattern.permute.xlu0 0
        %907 = vperm.xlu0 %906, %v804
        %v908 = vpop.permute.xlu0 %907
        %911 = vset.pattern.permute.xlu0 0
        %912 = vperm.xlu0 %911, %v805
        %v913 = vpop.permute.xlu0 %912
        %916 = vset.pattern.permute.xlu0 0
        %917 = vperm.xlu0 %916, %v806
        %v918 = vpop.permute.xlu0 %917
        %921 = vset.pattern.permute.xlu0 0
        %922 = vperm.xlu0 %921, %v807
        %v923 = vpop.permute.xlu0 %922
        %926 = vset.pattern.permute.xlu0 0
        %927 = vperm.xlu0 %926, %v808
        %v928 = vpop.permute.xlu0 %927
        %931 = vset.pattern.permute.xlu0 0
        %932 = vperm.xlu0 %931, %v809
        %v933 = vpop.permute.xlu0 %932
        %936 = vset.pattern.permute.xlu0 0
        %937 = vperm.xlu0 %936, %v810
        %v938 = vpop.permute.xlu0 %937
        %v956 = vunpack.c.l.b16 %v731
        %v957 = vunpack.c.l.b16 %v732
        %v958 = vunpack.c.l.b16 %v733
        %v959 = vunpack.c.l.b16 %v734
        %v960 = vunpack.c.l.b16 %v735
        %v961 = vunpack.c.l.b16 %v736
        %v962 = vunpack.c.l.b16 %v737
        %v963 = vunpack.c.l.b16 %v738
        %v964 = vunpack.c.l.b16 %v739
        %v965 = vunpack.c.l.b16 %v740
        %v966 = vunpack.c.l.b16 %v741
        %v967 = vunpack.c.l.b16 %v742
        %v968 = vunpack.c.l.b16 %v743
        %v969 = vunpack.c.l.b16 %v744
        %v970 = vunpack.c.l.b16 %v745
        %v971 = vunpack.c.l.b16 %v746
        %v972 = vpack.c.b16 %v957, %v956
        %v973 = vpack.c.b16 %v959, %v958
        %v974 = vpack.c.b16 %v961, %v960
        %v975 = vpack.c.b16 %v963, %v962
        %v976 = vpack.c.b16 %v965, %v964
        %v977 = vpack.c.b16 %v967, %v966
        %v978 = vpack.c.b16 %v969, %v968
        %v979 = vpack.c.b16 %v971, %v970
        %vm980 = vcmask 64512
        %v982 = vsel %vm980, %v972, 0
        %v985 = vsel %vm980, %v973, 0
        %v988 = vsel %vm980, %v974, 0
        %v991 = vsel %vm980, %v975, 0
        %v994 = vsel %vm980, %v976, 0
        %v997 = vsel %vm980, %v977, 0
        %v1000 = vsel %vm980, %v978, 0
        %v1003 = vsel %vm980, %v979, 0
        %vm1005 = vcmask 1043456
        %v1007 = vsel %vm1005, %v859, 0
        %1009 = vmatprep.subr.bf16.mxu0 0
        %1010 = vmatpush1.bf16.msra.mxu0 %v1007
        %1011 = vmatprep.subr.bf16.mxu0 0
        %1012 = vmatpush1.bf16.msra.mxu0 0
        %1013 = vmatprep.subr.bf16.mxu0 0
        %1014 = vmatpush1.bf16.msra.mxu0 0
        %1015 = vmatprep.subr.bf16.mxu0 0
        %1016 = vmatpush1.bf16.msra.mxu0 0
        %1017 = vmatprep.subr.bf16.mxu0 0
        %1018 = vmatpush1.bf16.msra.mxu0 0
        %1019 = vmatprep.subr.bf16.mxu0 0
        %1020 = vmatpush1.bf16.msra.mxu0 0
        %1021 = vmatprep.subr.bf16.mxu0 0
        %1022 = vmatpush1.bf16.msra.mxu0 0
        %1023 = vmatprep.subr.bf16.mxu0 0
        %1024 = vmatpush1.bf16.msra.mxu0 0
        %1025 = vmatprep.subr.bf16.mxu0 0
        %1026 = vmatpush1.bf16.msra.mxu0 0
        %1027 = vmatprep.subr.bf16.mxu0 0
        %1028 = vmatpush1.bf16.msra.mxu0 0
        %1029 = vmatprep.subr.bf16.mxu0 0
        %1030 = vmatpush1.bf16.msra.mxu0 0
        %1031 = vmatprep.subr.bf16.mxu0 0
        %1032 = vmatpush1.bf16.msra.mxu0 0
        %1033 = vmatprep.subr.bf16.mxu0 0
        %1034 = vmatpush1.bf16.msra.mxu0 0
        %1035 = vmatprep.subr.bf16.mxu0 0
        %1036 = vmatpush1.bf16.msra.mxu0 0
        %1037 = vmatprep.subr.bf16.mxu0 0
        %1038 = vmatpush1.bf16.msra.mxu0 0
        %1039 = vmatprep.subr.bf16.mxu0 0
        %1040 = vmatpush1.bf16.msra.mxu0 0
        %1041 = vmatprep.mubr.bf16.mxu0 0
        %1042 = vmatmul.mubr.bf16.gmra.mrb[0].mxu0 %v982
        %v1043 = vpop.f32.mrb[0].mxu0
        %v1044 = vadd.f32 %v863, %v1043
        %v1045 = vpop.f32.mrb[0].mxu0
        %v1046 = vpop.f32.mrb[0].mxu0
        %v1047 = vadd.f32 %v868, %v1046
        %v1048 = vpop.f32.mrb[0].mxu0
        %1049 = vmatprep.mubr.bf16.mxu0 0
        %1050 = vmatmul.mubr.bf16.gmra.mrb[0].mxu0 %v985
        %v1051 = vpop.f32.mrb[0].mxu0
        %v1052 = vadd.f32 %v873, %v1051
        %v1053 = vpop.f32.mrb[0].mxu0
        %v1054 = vpop.f32.mrb[0].mxu0
        %v1055 = vadd.f32 %v878, %v1054
        %v1056 = vpop.f32.mrb[0].mxu0
        %1057 = vmatprep.mubr.bf16.mxu0 0
        %1058 = vmatmul.mubr.bf16.gmra.mrb[0].mxu0 %v988
        %v1059 = vpop.f32.mrb[0].mxu0
        %v1060 = vadd.f32 %v883, %v1059
        %v1061 = vpop.f32.mrb[0].mxu0
        %v1062 = vpop.f32.mrb[0].mxu0
        %v1063 = vadd.f32 %v888, %v1062
        %v1064 = vpop.f32.mrb[0].mxu0
        %1065 = vmatprep.mubr.bf16.mxu0 0
        %1066 = vmatmul.mubr.bf16.gmra.mrb[0].mxu0 %v991
        %v1067 = vpop.f32.mrb[0].mxu0
        %v1068 = vadd.f32 %v893, %v1067
        %v1069 = vpop.f32.mrb[0].mxu0
        %v1070 = vpop.f32.mrb[0].mxu0
        %v1071 = vadd.f32 %v898, %v1070
        %v1072 = vpop.f32.mrb[0].mxu0
        %1073 = vmatprep.mubr.bf16.mxu0 0
        %1074 = vmatmul.mubr.bf16.gmra.mrb[0].mxu0 %v994
        %v1075 = vpop.f32.mrb[0].mxu0
        %v1076 = vadd.f32 %v903, %v1075
        %v1077 = vpop.f32.mrb[0].mxu0
        %v1078 = vpop.f32.mrb[0].mxu0
        %v1079 = vadd.f32 %v908, %v1078
        %v1080 = vpop.f32.mrb[0].mxu0
        %1081 = vmatprep.mubr.bf16.mxu0 0
        %1082 = vmatmul.mubr.bf16.gmra.mrb[0].mxu0 %v997
        %v1083 = vpop.f32.mrb[0].mxu0
        %v1084 = vadd.f32 %v913, %v1083
        %v1085 = vpop.f32.mrb[0].mxu0
        %v1086 = vpop.f32.mrb[0].mxu0
        %v1087 = vadd.f32 %v918, %v1086
        %v1088 = vpop.f32.mrb[0].mxu0
        %1089 = vmatprep.mubr.bf16.mxu0 0
        %1090 = vmatmul.mubr.bf16.gmra.mrb[0].mxu0 %v1000
        %v1091 = vpop.f32.mrb[0].mxu0
        %v1092 = vadd.f32 %v923, %v1091
        %v1093 = vpop.f32.mrb[0].mxu0
        %v1094 = vpop.f32.mrb[0].mxu0
        %v1095 = vadd.f32 %v928, %v1094
        %v1096 = vpop.f32.mrb[0].mxu0
        %1097 = vmatprep.mubr.bf16.mxu0 0
        %1098 = vmatmul.mubr.bf16.gmra.mrb[0].mxu0 %v1003
        %v1099 = vpop.f32.mrb[0].mxu0
        %v1100 = vadd.f32 %v933, %v1099
        %v1101 = vpop.f32.mrb[0].mxu0
        %v1102 = vpop.f32.mrb[0].mxu0
        %v1103 = vadd.f32 %v938, %v1102
        %v1104 = vpop.f32.mrb[0].mxu0
        %1105 = vdwg.mxu0
        %v1106 = vmax.f32 %v1044, 0.0
        %v1107 = vmax.f32 %v1047, 0.0
        %v1108 = vmax.f32 %v1052, 0.0
        %v1109 = vmax.f32 %v1055, 0.0
        %v1110 = vmax.f32 %v1060, 0.0
        %v1111 = vmax.f32 %v1063, 0.0
        %v1112 = vmax.f32 %v1068, 0.0
        %v1113 = vmax.f32 %v1071, 0.0
        %v1114 = vmax.f32 %v1076, 0.0
        %v1115 = vmax.f32 %v1079, 0.0
        %v1116 = vmax.f32 %v1084, 0.0
        %v1117 = vmax.f32 %v1087, 0.0
        %v1118 = vmax.f32 %v1092, 0.0
        %v1119 = vmax.f32 %v1095, 0.0
        %v1120 = vmax.f32 %v1100, 0.0
        %v1121 = vmax.f32 %v1103, 0.0
        %v1122 = vpack.c.bf16 %v1107, %v1106
        %v1123 = vpack.c.bf16 %v1109, %v1108
        %v1124 = vpack.c.bf16 %v1111, %v1110
        %v1125 = vpack.c.bf16 %v1113, %v1112
        %v1126 = vpack.c.bf16 %v1115, %v1114
        %v1127 = vpack.c.bf16 %v1117, %v1116
        %v1128 = vpack.c.bf16 %v1119, %v1118
        %v1129 = vpack.c.bf16 %v1121, %v1120
        %1131 = vset.pattern.permute.xlu0 0
        %1132 = vperm.xlu0 %1131, %v811
        %v1133 = vpop.permute.xlu0 %1132
        %1136 = vset.pattern.permute.xlu0 0
        %1137 = vperm.xlu0 %1136, %v812
        %v1138 = vpop.permute.xlu0 %1137
        %1141 = vset.pattern.permute.xlu0 0
        %1142 = vperm.xlu0 %1141, %v813
        %v1143 = vpop.permute.xlu0 %1142
        %1146 = vset.pattern.permute.xlu0 0
        %1147 = vperm.xlu0 %1146, %v814
        %v1148 = vpop.permute.xlu0 %1147
        %1151 = vset.pattern.permute.xlu0 0
        %1152 = vperm.xlu0 %1151, %v815
        %v1153 = vpop.permute.xlu0 %1152
        %1156 = vset.pattern.permute.xlu0 0
        %1157 = vperm.xlu0 %1156, %v816
        %v1158 = vpop.permute.xlu0 %1157
        %1161 = vset.pattern.permute.xlu0 0
        %1162 = vperm.xlu0 %1161, %v817
        %v1163 = vpop.permute.xlu0 %1162
        %1166 = vset.pattern.permute.xlu0 0
        %1167 = vperm.xlu0 %1166, %v818
        %v1168 = vpop.permute.xlu0 %1167
        %1171 = vset.pattern.permute.xlu0 0
        %1172 = vperm.xlu0 %1171, %v819
        %v1173 = vpop.permute.xlu0 %1172
        %1176 = vset.pattern.permute.xlu0 0
        %1177 = vperm.xlu0 %1176, %v820
        %v1178 = vpop.permute.xlu0 %1177
        %1181 = vset.pattern.permute.xlu0 0
        %1182 = vperm.xlu0 %1181, %v821
        %v1183 = vpop.permute.xlu0 %1182
        %1186 = vset.pattern.permute.xlu0 0
        %1187 = vperm.xlu0 %1186, %v822
        %v1188 = vpop.permute.xlu0 %1187
        %1191 = vset.pattern.permute.xlu0 0
        %1192 = vperm.xlu0 %1191, %v823
        %v1193 = vpop.permute.xlu0 %1192
        %1196 = vset.pattern.permute.xlu0 0
        %1197 = vperm.xlu0 %1196, %v824
        %v1198 = vpop.permute.xlu0 %1197
        %1201 = vset.pattern.permute.xlu0 0
        %1202 = vperm.xlu0 %1201, %v825
        %v1203 = vpop.permute.xlu0 %1202
        %1206 = vset.pattern.permute.xlu0 0
        %1207 = vperm.xlu0 %1206, %v826
        %v1208 = vpop.permute.xlu0 %1207
        %v1226 = vunpack.c.l.b16 %v747
        %v1227 = vunpack.c.l.b16 %v748
        %v1228 = vunpack.c.l.b16 %v749
        %v1229 = vunpack.c.l.b16 %v750
        %v1230 = vunpack.c.l.b16 %v751
        %v1231 = vunpack.c.l.b16 %v752
        %v1232 = vunpack.c.l.b16 %v753
        %v1233 = vunpack.c.l.b16 %v754
        %v1234 = vunpack.c.l.b16 %v755
        %v1235 = vunpack.c.l.b16 %v756
        %v1236 = vunpack.c.l.b16 %v757
        %v1237 = vunpack.c.l.b16 %v758
        %v1238 = vunpack.c.l.b16 %v759
        %v1239 = vunpack.c.l.b16 %v760
        %v1240 = vunpack.c.l.b16 %v761
        %v1241 = vunpack.c.l.b16 %v762
        %v1242 = vpack.c.b16 %v1227, %v1226
        %v1243 = vpack.c.b16 %v1229, %v1228
        %v1244 = vpack.c.b16 %v1231, %v1230
        %v1245 = vpack.c.b16 %v1233, %v1232
        %v1246 = vpack.c.b16 %v1235, %v1234
        %v1247 = vpack.c.b16 %v1237, %v1236
        %v1248 = vpack.c.b16 %v1239, %v1238
        %v1249 = vpack.c.b16 %v1241, %v1240
        %1258 = vmatprep.subr.bf16.mxu0 0
        %1259 = vmatpush1.bf16.msra.mxu0 %v1122
        %1260 = vmatprep.subr.bf16.mxu0 0
        %1261 = vmatpush1.bf16.msra.mxu0 %v1123
        %1262 = vmatprep.subr.bf16.mxu0 0
        %1263 = vmatpush1.bf16.msra.mxu0 %v1124
        %1264 = vmatprep.subr.bf16.mxu0 0
        %1265 = vmatpush1.bf16.msra.mxu0 %v1125
        %1266 = vmatprep.subr.bf16.mxu0 0
        %1267 = vmatpush1.bf16.msra.mxu0 %v1126
        %1268 = vmatprep.subr.bf16.mxu0 0
        %1269 = vmatpush1.bf16.msra.mxu0 %v1127
        %1270 = vmatprep.subr.bf16.mxu0 0
        %1271 = vmatpush1.bf16.msra.mxu0 %v1128
        %1272 = vmatprep.subr.bf16.mxu0 0
        %1273 = vmatpush1.bf16.msra.mxu0 %v1129
        %1274 = vmatprep.subr.bf16.mxu0 0
        %1275 = vmatpush1.bf16.msra.mxu0 0
        %1276 = vmatprep.subr.bf16.mxu0 0
        %1277 = vmatpush1.bf16.msra.mxu0 0
        %1278 = vmatprep.subr.bf16.mxu0 0
        %1279 = vmatpush1.bf16.msra.mxu0 0
        %1280 = vmatprep.subr.bf16.mxu0 0
        %1281 = vmatpush1.bf16.msra.mxu0 0
        %1282 = vmatprep.subr.bf16.mxu0 0
        %1283 = vmatpush1.bf16.msra.mxu0 0
        %1284 = vmatprep.subr.bf16.mxu0 0
        %1285 = vmatpush1.bf16.msra.mxu0 0
        %1286 = vmatprep.subr.bf16.mxu0 0
        %1287 = vmatpush1.bf16.msra.mxu0 0
        %1288 = vmatprep.subr.bf16.mxu0 0
        %1289 = vmatpush1.bf16.msra.mxu0 0
        %1290 = vmatprep.mubr.bf16.mxu0 0
        %1291 = vmatmul.mubr.bf16.gmra.mrb[0].mxu0 %v1242
        %v1292 = vpop.f32.mrb[0].mxu0
        %v1293 = vadd.f32 %v1133, %v1292
        %v1294 = vpop.f32.mrb[0].mxu0
        %v1295 = vpop.f32.mrb[0].mxu0
        %v1296 = vadd.f32 %v1138, %v1295
        %v1297 = vpop.f32.mrb[0].mxu0
        %1298 = vmatprep.mubr.bf16.mxu0 0
        %1299 = vmatmul.mubr.bf16.gmra.mrb[0].mxu0 %v1243
        %v1300 = vpop.f32.mrb[0].mxu0
        %v1301 = vadd.f32 %v1143, %v1300
        %v1302 = vpop.f32.mrb[0].mxu0
        %v1303 = vpop.f32.mrb[0].mxu0
        %v1304 = vadd.f32 %v1148, %v1303
        %v1305 = vpop.f32.mrb[0].mxu0
        %1306 = vmatprep.mubr.bf16.mxu0 0
        %1307 = vmatmul.mubr.bf16.gmra.mrb[0].mxu0 %v1244
        %v1308 = vpop.f32.mrb[0].mxu0
        %v1309 = vadd.f32 %v1153, %v1308
        %v1310 = vpop.f32.mrb[0].mxu0
        %v1311 = vpop.f32.mrb[0].mxu0
        %v1312 = vadd.f32 %v1158, %v1311
        %v1313 = vpop.f32.mrb[0].mxu0
        %1314 = vmatprep.mubr.bf16.mxu0 0
        %1315 = vmatmul.mubr.bf16.gmra.mrb[0].mxu0 %v1245
        %v1316 = vpop.f32.mrb[0].mxu0
        %v1317 = vadd.f32 %v1163, %v1316
        %v1318 = vpop.f32.mrb[0].mxu0
        %v1319 = vpop.f32.mrb[0].mxu0
        %v1320 = vadd.f32 %v1168, %v1319
        %v1321 = vpop.f32.mrb[0].mxu0
        %1322 = vmatprep.mubr.bf16.mxu0 0
        %1323 = vmatmul.mubr.bf16.gmra.mrb[0].mxu0 %v1246
        %v1324 = vpop.f32.mrb[0].mxu0
        %v1325 = vadd.f32 %v1173, %v1324
        %v1326 = vpop.f32.mrb[0].mxu0
        %v1327 = vpop.f32.mrb[0].mxu0
        %v1328 = vadd.f32 %v1178, %v1327
        %v1329 = vpop.f32.mrb[0].mxu0
        %1330 = vmatprep.mubr.bf16.mxu0 0
        %1331 = vmatmul.mubr.bf16.gmra.mrb[0].mxu0 %v1247
        %v1332 = vpop.f32.mrb[0].mxu0
        %v1333 = vadd.f32 %v1183, %v1332
        %v1334 = vpop.f32.mrb[0].mxu0
        %v1335 = vpop.f32.mrb[0].mxu0
        %v1336 = vadd.f32 %v1188, %v1335
        %v1337 = vpop.f32.mrb[0].mxu0
        %1338 = vmatprep.mubr.bf16.mxu0 0
        %1339 = vmatmul.mubr.bf16.gmra.mrb[0].mxu0 %v1248
        %v1340 = vpop.f32.mrb[0].mxu0
        %v1341 = vadd.f32 %v1193, %v1340
        %v1342 = vpop.f32.mrb[0].mxu0
        %v1343 = vpop.f32.mrb[0].mxu0
        %v1344 = vadd.f32 %v1198, %v1343
        %v1345 = vpop.f32.mrb[0].mxu0
        %1346 = vmatprep.mubr.bf16.mxu0 0
        %1347 = vmatmul.mubr.bf16.gmra.mrb[0].mxu0 %v1249
        %v1348 = vpop.f32.mrb[0].mxu0
        %v1349 = vadd.f32 %v1203, %v1348
        %v1350 = vpop.f32.mrb[0].mxu0
        %v1351 = vpop.f32.mrb[0].mxu0
        %v1352 = vadd.f32 %v1208, %v1351
        %v1353 = vpop.f32.mrb[0].mxu0
        %1354 = vdwg.mxu0
        %v1355 = vmax.f32 %v1293, 0.0
        %v1356 = vmax.f32 %v1296, 0.0
        %v1357 = vmax.f32 %v1301, 0.0
        %v1358 = vmax.f32 %v1304, 0.0
        %v1359 = vmax.f32 %v1309, 0.0
        %v1360 = vmax.f32 %v1312, 0.0
        %v1361 = vmax.f32 %v1317, 0.0
        %v1362 = vmax.f32 %v1320, 0.0
        %v1363 = vmax.f32 %v1325, 0.0
        %v1364 = vmax.f32 %v1328, 0.0
        %v1365 = vmax.f32 %v1333, 0.0
        %v1366 = vmax.f32 %v1336, 0.0
        %v1367 = vmax.f32 %v1341, 0.0
        %v1368 = vmax.f32 %v1344, 0.0
        %v1369 = vmax.f32 %v1349, 0.0
        %v1370 = vmax.f32 %v1352, 0.0
        %v1371 = vpack.c.bf16 %v1356, %v1355
        %v1372 = vpack.c.bf16 %v1358, %v1357
        %v1373 = vpack.c.bf16 %v1360, %v1359
        %v1374 = vpack.c.bf16 %v1362, %v1361
        %v1375 = vpack.c.bf16 %v1364, %v1363
        %v1376 = vpack.c.bf16 %v1366, %v1365
        %v1377 = vpack.c.bf16 %v1368, %v1367
        %v1378 = vpack.c.bf16 %v1370, %v1369
        %1380 = vset.pattern.permute.xlu0 0
        %1381 = vperm.xlu0 %1380, %v827
        %v1382 = vpop.permute.xlu0 %1381
        %1385 = vset.pattern.permute.xlu0 0
        %1386 = vperm.xlu0 %1385, %v828
        %v1387 = vpop.permute.xlu0 %1386
        %1390 = vset.pattern.permute.xlu0 0
        %1391 = vperm.xlu0 %1390, %v829
        %v1392 = vpop.permute.xlu0 %1391
        %1395 = vset.pattern.permute.xlu0 0
        %1396 = vperm.xlu0 %1395, %v830
        %v1397 = vpop.permute.xlu0 %1396
        %1400 = vset.pattern.permute.xlu0 0
        %1401 = vperm.xlu0 %1400, %v831
        %v1402 = vpop.permute.xlu0 %1401
        %1405 = vset.pattern.permute.xlu0 0
        %1406 = vperm.xlu0 %1405, %v832
        %v1407 = vpop.permute.xlu0 %1406
        %1410 = vset.pattern.permute.xlu0 0
        %1411 = vperm.xlu0 %1410, %v833
        %v1412 = vpop.permute.xlu0 %1411
        %1415 = vset.pattern.permute.xlu0 0
        %1416 = vperm.xlu0 %1415, %v834
        %v1417 = vpop.permute.xlu0 %1416
        %1420 = vset.pattern.permute.xlu0 0
        %1421 = vperm.xlu0 %1420, %v835
        %v1422 = vpop.permute.xlu0 %1421
        %1425 = vset.pattern.permute.xlu0 0
        %1426 = vperm.xlu0 %1425, %v836
        %v1427 = vpop.permute.xlu0 %1426
        %1430 = vset.pattern.permute.xlu0 0
        %1431 = vperm.xlu0 %1430, %v837
        %v1432 = vpop.permute.xlu0 %1431
        %1435 = vset.pattern.permute.xlu0 0
        %1436 = vperm.xlu0 %1435, %v838
        %v1437 = vpop.permute.xlu0 %1436
        %1440 = vset.pattern.permute.xlu0 0
        %1441 = vperm.xlu0 %1440, %v839
        %v1442 = vpop.permute.xlu0 %1441
        %1445 = vset.pattern.permute.xlu0 0
        %1446 = vperm.xlu0 %1445, %v840
        %v1447 = vpop.permute.xlu0 %1446
        %1450 = vset.pattern.permute.xlu0 0
        %1451 = vperm.xlu0 %1450, %v841
        %v1452 = vpop.permute.xlu0 %1451
        %1455 = vset.pattern.permute.xlu0 0
        %1456 = vperm.xlu0 %1455, %v842
        %v1457 = vpop.permute.xlu0 %1456
        %1460 = vset.pattern.permute.xlu0 0
        %1461 = vperm.xlu0 %1460, %v843
        %v1462 = vpop.permute.xlu0 %1461
        %1465 = vset.pattern.permute.xlu0 0
        %1466 = vperm.xlu0 %1465, %v844
        %v1467 = vpop.permute.xlu0 %1466
        %1470 = vset.pattern.permute.xlu0 0
        %1471 = vperm.xlu0 %1470, %v845
        %v1472 = vpop.permute.xlu0 %1471
        %1475 = vset.pattern.permute.xlu0 0
        %1476 = vperm.xlu0 %1475, %v846
        %v1477 = vpop.permute.xlu0 %1476
        %1480 = vset.pattern.permute.xlu0 0
        %1481 = vperm.xlu0 %1480, %v847
        %v1482 = vpop.permute.xlu0 %1481
        %1485 = vset.pattern.permute.xlu0 0
        %1486 = vperm.xlu0 %1485, %v848
        %v1487 = vpop.permute.xlu0 %1486
        %1490 = vset.pattern.permute.xlu0 0
        %1491 = vperm.xlu0 %1490, %v849
        %v1492 = vpop.permute.xlu0 %1491
        %1495 = vset.pattern.permute.xlu0 0
        %1496 = vperm.xlu0 %1495, %v850
        %v1497 = vpop.permute.xlu0 %1496
        %1500 = vset.pattern.permute.xlu0 0
        %1501 = vperm.xlu0 %1500, %v851
        %v1502 = vpop.permute.xlu0 %1501
        %1505 = vset.pattern.permute.xlu0 0
        %1506 = vperm.xlu0 %1505, %v852
        %v1507 = vpop.permute.xlu0 %1506
        %1510 = vset.pattern.permute.xlu0 0
        %1511 = vperm.xlu0 %1510, %v853
        %v1512 = vpop.permute.xlu0 %1511
        %1515 = vset.pattern.permute.xlu0 0
        %1516 = vperm.xlu0 %1515, %v854
        %v1517 = vpop.permute.xlu0 %1516
        %1520 = vset.pattern.permute.xlu0 0
        %1521 = vperm.xlu0 %1520, %v855
        %v1522 = vpop.permute.xlu0 %1521
        %1525 = vset.pattern.permute.xlu0 0
        %1526 = vperm.xlu0 %1525, %v856
        %v1527 = vpop.permute.xlu0 %1526
        %1530 = vset.pattern.permute.xlu0 0
        %1531 = vperm.xlu0 %1530, %v857
        %v1532 = vpop.permute.xlu0 %1531
        %1535 = vset.pattern.permute.xlu0 0
        %1536 = vperm.xlu0 %1535, %v858
        %v1537 = vpop.permute.xlu0 %1536
        %v1571 = vunpack.c.l.b16 %v763
        %v1572 = vunpack.c.l.b16 %v764
        %v1573 = vunpack.c.l.b16 %v765
        %v1574 = vunpack.c.l.b16 %v766
        %v1575 = vunpack.c.l.b16 %v767
        %v1576 = vunpack.c.l.b16 %v768
        %v1577 = vunpack.c.l.b16 %v769
        %v1578 = vunpack.c.l.b16 %v770
        %v1579 = vunpack.c.l.b16 %v771
        %v1580 = vunpack.c.l.b16 %v772
        %v1581 = vunpack.c.l.b16 %v773
        %v1582 = vunpack.c.l.b16 %v774
        %v1583 = vunpack.c.l.b16 %v775
        %v1584 = vunpack.c.l.b16 %v776
        %v1585 = vunpack.c.l.b16 %v777
        %v1586 = vunpack.c.l.b16 %v778
        %v1587 = vunpack.c.l.b16 %v779
        %v1588 = vunpack.c.l.b16 %v780
        %v1589 = vunpack.c.l.b16 %v781
        %v1590 = vunpack.c.l.b16 %v782
        %v1591 = vunpack.c.l.b16 %v783
        %v1592 = vunpack.c.l.b16 %v784
        %v1593 = vunpack.c.l.b16 %v785
        %v1594 = vunpack.c.l.b16 %v786
        %v1595 = vunpack.c.l.b16 %v787
        %v1596 = vunpack.c.l.b16 %v788
        %v1597 = vunpack.c.l.b16 %v789
        %v1598 = vunpack.c.l.b16 %v790
        %v1599 = vunpack.c.l.b16 %v791
        %v1600 = vunpack.c.l.b16 %v792
        %v1601 = vunpack.c.l.b16 %v793
        %v1602 = vunpack.c.l.b16 %v794
        %v1603 = vpack.c.b16 %v1572, %v1571
        %v1604 = vpack.c.b16 %v1574, %v1573
        %v1605 = vpack.c.b16 %v1576, %v1575
        %v1606 = vpack.c.b16 %v1578, %v1577
        %v1607 = vpack.c.b16 %v1580, %v1579
        %v1608 = vpack.c.b16 %v1582, %v1581
        %v1609 = vpack.c.b16 %v1584, %v1583
        %v1610 = vpack.c.b16 %v1586, %v1585
        %v1611 = vpack.c.b16 %v1588, %v1587
        %v1612 = vpack.c.b16 %v1590, %v1589
        %v1613 = vpack.c.b16 %v1592, %v1591
        %v1614 = vpack.c.b16 %v1594, %v1593
        %v1615 = vpack.c.b16 %v1596, %v1595
        %v1616 = vpack.c.b16 %v1598, %v1597
        %v1617 = vpack.c.b16 %v1600, %v1599
        %v1618 = vpack.c.b16 %v1602, %v1601
        %1635 = vmatprep.subr.bf16.mxu0 0
        %1636 = vmatpush1.bf16.msra.mxu0 %v1371
        %1637 = vmatprep.subr.bf16.mxu0 0
        %1638 = vmatpush1.bf16.msra.mxu0 %v1372
        %1639 = vmatprep.subr.bf16.mxu0 0
        %1640 = vmatpush1.bf16.msra.mxu0 %v1373
        %1641 = vmatprep.subr.bf16.mxu0 0
        %1642 = vmatpush1.bf16.msra.mxu0 %v1374
        %1643 = vmatprep.subr.bf16.mxu0 0
        %1644 = vmatpush1.bf16.msra.mxu0 %v1375
        %1645 = vmatprep.subr.bf16.mxu0 0
        %1646 = vmatpush1.bf16.msra.mxu0 %v1376
        %1647 = vmatprep.subr.bf16.mxu0 0
        %1648 = vmatpush1.bf16.msra.mxu0 %v1377
        %1649 = vmatprep.subr.bf16.mxu0 0
        %1650 = vmatpush1.bf16.msra.mxu0 %v1378
        %1651 = vmatprep.subr.bf16.mxu0 0
        %1652 = vmatpush1.bf16.msra.mxu0 0
        %1653 = vmatprep.subr.bf16.mxu0 0
        %1654 = vmatpush1.bf16.msra.mxu0 0
        %1655 = vmatprep.subr.bf16.mxu0 0
        %1656 = vmatpush1.bf16.msra.mxu0 0
        %1657 = vmatprep.subr.bf16.mxu0 0
        %1658 = vmatpush1.bf16.msra.mxu0 0
        %1659 = vmatprep.subr.bf16.mxu0 0
        %1660 = vmatpush1.bf16.msra.mxu0 0
        %1661 = vmatprep.subr.bf16.mxu0 0
        %1662 = vmatpush1.bf16.msra.mxu0 0
        %1663 = vmatprep.subr.bf16.mxu0 0
        %1664 = vmatpush1.bf16.msra.mxu0 0
        %1665 = vmatprep.subr.bf16.mxu0 0
        %1666 = vmatpush1.bf16.msra.mxu0 0
        %1667 = vmatprep.mubr.bf16.mxu0 0
        %1668 = vmatmul.mubr.bf16.gmra.mrb[0].mxu0 %v1603
        %v1669 = vpop.f32.mrb[0].mxu0
        %v1670 = vadd.f32 %v1382, %v1669
        %v1671 = vpop.f32.mrb[0].mxu0
        %v1672 = vpop.f32.mrb[0].mxu0
        %v1673 = vadd.f32 %v1387, %v1672
        %v1674 = vpop.f32.mrb[0].mxu0
        %1675 = vmatprep.mubr.bf16.mxu0 0
        %1676 = vmatmul.mubr.bf16.gmra.mrb[0].mxu0 %v1604
        %v1677 = vpop.f32.mrb[0].mxu0
        %v1678 = vadd.f32 %v1392, %v1677
        %v1679 = vpop.f32.mrb[0].mxu0
        %v1680 = vpop.f32.mrb[0].mxu0
        %v1681 = vadd.f32 %v1397, %v1680
        %v1682 = vpop.f32.mrb[0].mxu0
        %1683 = vmatprep.mubr.bf16.mxu0 0
        %1684 = vmatmul.mubr.bf16.gmra.mrb[0].mxu0 %v1605
        %v1685 = vpop.f32.mrb[0].mxu0
        %v1686 = vadd.f32 %v1402, %v1685
        %v1687 = vpop.f32.mrb[0].mxu0
        %v1688 = vpop.f32.mrb[0].mxu0
        %v1689 = vadd.f32 %v1407, %v1688
        %v1690 = vpop.f32.mrb[0].mxu0
        %1691 = vmatprep.mubr.bf16.mxu0 0
        %1692 = vmatmul.mubr.bf16.gmra.mrb[0].mxu0 %v1606
        %v1693 = vpop.f32.mrb[0].mxu0
        %v1694 = vadd.f32 %v1412, %v1693
        %v1695 = vpop.f32.mrb[0].mxu0
        %v1696 = vpop.f32.mrb[0].mxu0
        %v1697 = vadd.f32 %v1417, %v1696
        %v1698 = vpop.f32.mrb[0].mxu0
        %1699 = vmatprep.mubr.bf16.mxu0 0
        %1700 = vmatmul.mubr.bf16.gmra.mrb[0].mxu0 %v1607
        %v1701 = vpop.f32.mrb[0].mxu0
        %v1702 = vadd.f32 %v1422, %v1701
        %v1703 = vpop.f32.mrb[0].mxu0
        %v1704 = vpop.f32.mrb[0].mxu0
        %v1705 = vadd.f32 %v1427, %v1704
        %v1706 = vpop.f32.mrb[0].mxu0
        %1707 = vmatprep.mubr.bf16.mxu0 0
        %1708 = vmatmul.mubr.bf16.gmra.mrb[0].mxu0 %v1608
        %v1709 = vpop.f32.mrb[0].mxu0
        %v1710 = vadd.f32 %v1432, %v1709
        %v1711 = vpop.f32.mrb[0].mxu0
        %v1712 = vpop.f32.mrb[0].mxu0
        %v1713 = vadd.f32 %v1437, %v1712
        %v1714 = vpop.f32.mrb[0].mxu0
        %1715 = vmatprep.mubr.bf16.mxu0 0
        %1716 = vmatmul.mubr.bf16.gmra.mrb[0].mxu0 %v1609
        %v1717 = vpop.f32.mrb[0].mxu0
        %v1718 = vadd.f32 %v1442, %v1717
        %v1719 = vpop.f32.mrb[0].mxu0
        %v1720 = vpop.f32.mrb[0].mxu0
        %v1721 = vadd.f32 %v1447, %v1720
        %v1722 = vpop.f32.mrb[0].mxu0
        %1723 = vmatprep.mubr.bf16.mxu0 0
        %1724 = vmatmul.mubr.bf16.gmra.mrb[0].mxu0 %v1610
        %v1725 = vpop.f32.mrb[0].mxu0
        %v1726 = vadd.f32 %v1452, %v1725
        %v1727 = vpop.f32.mrb[0].mxu0
        %v1728 = vpop.f32.mrb[0].mxu0
        %v1729 = vadd.f32 %v1457, %v1728
        %v1730 = vpop.f32.mrb[0].mxu0
        %1731 = vmatprep.mubr.bf16.mxu0 0
        %1732 = vmatmul.mubr.bf16.gmra.mrb[0].mxu0 %v1611
        %v1733 = vpop.f32.mrb[0].mxu0
        %v1734 = vadd.f32 %v1462, %v1733
        %v1735 = vpop.f32.mrb[0].mxu0
        %v1736 = vpop.f32.mrb[0].mxu0
        %v1737 = vadd.f32 %v1467, %v1736
        %v1738 = vpop.f32.mrb[0].mxu0
        %1739 = vmatprep.mubr.bf16.mxu0 0
        %1740 = vmatmul.mubr.bf16.gmra.mrb[0].mxu0 %v1612
        %v1741 = vpop.f32.mrb[0].mxu0
        %v1742 = vadd.f32 %v1472, %v1741
        %v1743 = vpop.f32.mrb[0].mxu0
        %v1744 = vpop.f32.mrb[0].mxu0
        %v1745 = vadd.f32 %v1477, %v1744
        %v1746 = vpop.f32.mrb[0].mxu0
        %1747 = vmatprep.mubr.bf16.mxu0 0
        %1748 = vmatmul.mubr.bf16.gmra.mrb[0].mxu0 %v1613
        %v1749 = vpop.f32.mrb[0].mxu0
        %v1750 = vadd.f32 %v1482, %v1749
        %v1751 = vpop.f32.mrb[0].mxu0
        %v1752 = vpop.f32.mrb[0].mxu0
        %v1753 = vadd.f32 %v1487, %v1752
        %v1754 = vpop.f32.mrb[0].mxu0
        %1755 = vmatprep.mubr.bf16.mxu0 0
        %1756 = vmatmul.mubr.bf16.gmra.mrb[0].mxu0 %v1614
        %v1757 = vpop.f32.mrb[0].mxu0
        %v1758 = vadd.f32 %v1492, %v1757
        %v1759 = vpop.f32.mrb[0].mxu0
        %v1760 = vpop.f32.mrb[0].mxu0
        %v1761 = vadd.f32 %v1497, %v1760
        %v1762 = vpop.f32.mrb[0].mxu0
        %1763 = vmatprep.mubr.bf16.mxu0 0
        %1764 = vmatmul.mubr.bf16.gmra.mrb[0].mxu0 %v1615
        %v1765 = vpop.f32.mrb[0].mxu0
        %v1766 = vadd.f32 %v1502, %v1765
        %v1767 = vpop.f32.mrb[0].mxu0
        %v1768 = vpop.f32.mrb[0].mxu0
        %v1769 = vadd.f32 %v1507, %v1768
        %v1770 = vpop.f32.mrb[0].mxu0
        %1771 = vmatprep.mubr.bf16.mxu0 0
        %1772 = vmatmul.mubr.bf16.gmra.mrb[0].mxu0 %v1616
        %v1773 = vpop.f32.mrb[0].mxu0
        %v1774 = vadd.f32 %v1512, %v1773
        %v1775 = vpop.f32.mrb[0].mxu0
        %v1776 = vpop.f32.mrb[0].mxu0
        %v1777 = vadd.f32 %v1517, %v1776
        %v1778 = vpop.f32.mrb[0].mxu0
        %1779 = vmatprep.mubr.bf16.mxu0 0
        %1780 = vmatmul.mubr.bf16.gmra.mrb[0].mxu0 %v1617
        %v1781 = vpop.f32.mrb[0].mxu0
        %v1782 = vadd.f32 %v1522, %v1781
        %v1783 = vpop.f32.mrb[0].mxu0
        %v1784 = vpop.f32.mrb[0].mxu0
        %v1785 = vadd.f32 %v1527, %v1784
        %v1786 = vpop.f32.mrb[0].mxu0
        %1787 = vmatprep.mubr.bf16.mxu0 0
        %1788 = vmatmul.mubr.bf16.gmra.mrb[0].mxu0 %v1618
        %v1789 = vpop.f32.mrb[0].mxu0
        %v1790 = vadd.f32 %v1532, %v1789
        %v1791 = vpop.f32.mrb[0].mxu0
        %v1792 = vpop.f32.mrb[0].mxu0
        %v1793 = vadd.f32 %v1537, %v1792
        %v1794 = vpop.f32.mrb[0].mxu0
        %1795 = vdwg.mxu0
        %vm1796 = vcmask 130048
        %v1797 = vsel %vm1796, %v1670, -inf
        %1798 = vmax.xlane.f32.xlu0 %v1797
        %v1799 = vpop.xlane.xlu0 %1798
        %v1800 = vsel %vm1796, %v1673, -inf
        %1801 = vmax.xlane.f32.xlu0 %v1800
        %v1802 = vpop.xlane.xlu0 %1801
        %v1803 = vsel %vm1796, %v1678, -inf
        %1804 = vmax.xlane.f32.xlu0 %v1803
        %v1805 = vpop.xlane.xlu0 %1804
        %v1806 = vsel %vm1796, %v1681, -inf
        %1807 = vmax.xlane.f32.xlu0 %v1806
        %v1808 = vpop.xlane.xlu0 %1807
        %v1809 = vsel %vm1796, %v1686, -inf
        %1810 = vmax.xlane.f32.xlu0 %v1809
        %v1811 = vpop.xlane.xlu0 %1810
        %v1812 = vsel %vm1796, %v1689, -inf
        %1813 = vmax.xlane.f32.xlu0 %v1812
        %v1814 = vpop.xlane.xlu0 %1813
        %v1815 = vsel %vm1796, %v1694, -inf
        %1816 = vmax.xlane.f32.xlu0 %v1815
        %v1817 = vpop.xlane.xlu0 %1816
        %v1818 = vsel %vm1796, %v1697, -inf
        %1819 = vmax.xlane.f32.xlu0 %v1818
        %v1820 = vpop.xlane.xlu0 %1819
        %v1821 = vsel %vm1796, %v1702, -inf
        %1822 = vmax.xlane.f32.xlu0 %v1821
        %v1823 = vpop.xlane.xlu0 %1822
        %v1824 = vsel %vm1796, %v1705, -inf
        %1825 = vmax.xlane.f32.xlu0 %v1824
        %v1826 = vpop.xlane.xlu0 %1825
        %v1827 = vsel %vm1796, %v1710, -inf
        %1828 = vmax.xlane.f32.xlu0 %v1827
        %v1829 = vpop.xlane.xlu0 %1828
        %v1830 = vsel %vm1796, %v1713, -inf
        %1831 = vmax.xlane.f32.xlu0 %v1830
        %v1832 = vpop.xlane.xlu0 %1831
        %v1833 = vsel %vm1796, %v1718, -inf
        %1834 = vmax.xlane.f32.xlu0 %v1833
        %v1835 = vpop.xlane.xlu0 %1834
        %v1836 = vsel %vm1796, %v1721, -inf
        %1837 = vmax.xlane.f32.xlu0 %v1836
        %v1838 = vpop.xlane.xlu0 %1837
        %v1839 = vsel %vm1796, %v1726, -inf
        %1840 = vmax.xlane.f32.xlu0 %v1839
        %v1841 = vpop.xlane.xlu0 %1840
        %v1842 = vsel %vm1796, %v1729, -inf
        %1843 = vmax.xlane.f32.xlu0 %v1842
        %v1844 = vpop.xlane.xlu0 %1843
        %v1845 = vsel %vm1796, %v1734, -inf
        %1846 = vmax.xlane.f32.xlu0 %v1845
        %v1847 = vpop.xlane.xlu0 %1846
        %v1848 = vsel %vm1796, %v1737, -inf
        %1849 = vmax.xlane.f32.xlu0 %v1848
        %v1850 = vpop.xlane.xlu0 %1849
        %v1851 = vsel %vm1796, %v1742, -inf
        %1852 = vmax.xlane.f32.xlu0 %v1851
        %v1853 = vpop.xlane.xlu0 %1852
        %v1854 = vsel %vm1796, %v1745, -inf
        %1855 = vmax.xlane.f32.xlu0 %v1854
        %v1856 = vpop.xlane.xlu0 %1855
        %v1857 = vsel %vm1796, %v1750, -inf
        %1858 = vmax.xlane.f32.xlu0 %v1857
        %v1859 = vpop.xlane.xlu0 %1858
        %v1860 = vsel %vm1796, %v1753, -inf
        %1861 = vmax.xlane.f32.xlu0 %v1860
        %v1862 = vpop.xlane.xlu0 %1861
        %v1863 = vsel %vm1796, %v1758, -inf
        %1864 = vmax.xlane.f32.xlu0 %v1863
        %v1865 = vpop.xlane.xlu0 %1864
        %v1866 = vsel %vm1796, %v1761, -inf
        %1867 = vmax.xlane.f32.xlu0 %v1866
        %v1868 = vpop.xlane.xlu0 %1867
        %v1869 = vsel %vm1796, %v1766, -inf
        %1870 = vmax.xlane.f32.xlu0 %v1869
        %v1871 = vpop.xlane.xlu0 %1870
        %v1872 = vsel %vm1796, %v1769, -inf
        %1873 = vmax.xlane.f32.xlu0 %v1872
        %v1874 = vpop.xlane.xlu0 %1873
        %v1875 = vsel %vm1796, %v1774, -inf
        %1876 = vmax.xlane.f32.xlu0 %v1875
        %v1877 = vpop.xlane.xlu0 %1876
        %v1878 = vsel %vm1796, %v1777, -inf
        %1879 = vmax.xlane.f32.xlu0 %v1878
        %v1880 = vpop.xlane.xlu0 %1879
        %v1881 = vsel %vm1796, %v1782, -inf
        %1882 = vmax.xlane.f32.xlu0 %v1881
        %v1883 = vpop.xlane.xlu0 %1882
        %v1884 = vsel %vm1796, %v1785, -inf
        %1885 = vmax.xlane.f32.xlu0 %v1884
        %v1886 = vpop.xlane.xlu0 %1885
        %v1887 = vsel %vm1796, %v1790, -inf
        %1888 = vmax.xlane.f32.xlu0 %v1887
        %v1889 = vpop.xlane.xlu0 %1888
        %v1890 = vsel %vm1796, %v1793, -inf
        %1891 = vmax.xlane.f32.xlu0 %v1890
        %v1892 = vpop.xlane.xlu0 %1891
        %1893 = vxpose.xlu0.b32.start [1/16] %v1799, 128
        %1894 = vxpose.xlu0.b32.cont [2/16] %v1802, 128
        %1895 = vxpose.xlu0.b32.cont [3/16] %v1805, 128
        %1896 = vxpose.xlu0.b32.cont [4/16] %v1808, 128
        %1897 = vxpose.xlu0.b32.cont [5/16] %v1811, 128
        %1898 = vxpose.xlu0.b32.cont [6/16] %v1814, 128
        %1899 = vxpose.xlu0.b32.cont [7/16] %v1817, 128
        %1900 = vxpose.xlu0.b32.cont [8/16] %v1820, 128
        %1901 = vxpose.xlu0.b32.cont [9/16] %v1823, 128
        %1902 = vxpose.xlu0.b32.cont [10/16] %v1826, 128
        %1903 = vxpose.xlu0.b32.cont [11/16] %v1829, 128
        %1904 = vxpose.xlu0.b32.cont [12/16] %v1832, 128
        %1905 = vxpose.xlu0.b32.cont [13/16] %v1835, 128
        %1906 = vxpose.xlu0.b32.cont [14/16] %v1838, 128
        %1907 = vxpose.xlu0.b32.cont [15/16] %v1841, 128
        %1908 = vxpose.xlu0.b32.end [16/16] %v1844, 128
        %v1909 = vpop.trf.xlu0
        %v1910 = vpop.trf.xlu0
        %v1911 = vpop.trf.xlu0
        %v1912 = vpop.trf.xlu0
        %v1913 = vpop.trf.xlu0
        %v1914 = vpop.trf.xlu0
        %v1915 = vpop.trf.xlu0
        %v1916 = vpop.trf.xlu0
        %v1917 = vpop.trf.xlu0
        %v1918 = vpop.trf.xlu0
        %v1919 = vpop.trf.xlu0
        %v1920 = vpop.trf.xlu0
        %v1921 = vpop.trf.xlu0
        %v1922 = vpop.trf.xlu0
        %v1923 = vpop.trf.xlu0
        %v1924 = vpop.trf.xlu0
        %1925 = vxpose.xlu0.b32.start [1/16] %v1847, 128
        %1926 = vxpose.xlu0.b32.cont [2/16] %v1850, 128
        %1927 = vxpose.xlu0.b32.cont [3/16] %v1853, 128
        %1928 = vxpose.xlu0.b32.cont [4/16] %v1856, 128
        %1929 = vxpose.xlu0.b32.cont [5/16] %v1859, 128
        %1930 = vxpose.xlu0.b32.cont [6/16] %v1862, 128
        %1931 = vxpose.xlu0.b32.cont [7/16] %v1865, 128
        %1932 = vxpose.xlu0.b32.cont [8/16] %v1868, 128
        %1933 = vxpose.xlu0.b32.cont [9/16] %v1871, 128
        %1934 = vxpose.xlu0.b32.cont [10/16] %v1874, 128
        %1935 = vxpose.xlu0.b32.cont [11/16] %v1877, 128
        %1936 = vxpose.xlu0.b32.cont [12/16] %v1880, 128
        %1937 = vxpose.xlu0.b32.cont [13/16] %v1883, 128
        %1938 = vxpose.xlu0.b32.cont [14/16] %v1886, 128
        %1939 = vxpose.xlu0.b32.cont [15/16] %v1889, 128
        %1940 = vxpose.xlu0.b32.end [16/16] %v1892, 128
        %v1941 = vpop.trf.xlu0
        %v1942 = vpop.trf.xlu0
        %v1943 = vpop.trf.xlu0
        %v1944 = vpop.trf.xlu0
        %v1945 = vpop.trf.xlu0
        %v1946 = vpop.trf.xlu0
        %v1947 = vpop.trf.xlu0
        %v1948 = vpop.trf.xlu0
        %v1949 = vpop.trf.xlu0
        %v1950 = vpop.trf.xlu0
        %v1951 = vpop.trf.xlu0
        %v1952 = vpop.trf.xlu0
        %v1953 = vpop.trf.xlu0
        %v1954 = vpop.trf.xlu0
        %v1955 = vpop.trf.xlu0
        %v1956 = vpop.trf.xlu0
        %v1957 = vld [vmem:[%s9] sm:$0xf]
        %v1958 = vld [vmem:[%s9 + $0x4] sm:$0xf]
        %v1959 = vld [vmem:[%s9 + $0x8] sm:$0xf]
        %v1960 = vld [vmem:[%s9 + $0xc] sm:$0xf]
        %v1961 = vld [vmem:[%s9 + $0x10] sm:$0xf]
        %v1962 = vld [vmem:[%s9 + $0x14] sm:$0xf]
        %v1963 = vld [vmem:[%s9 + $0x18] sm:$0xf]
        %v1964 = vld [vmem:[%s9 + $0x1c] sm:$0xf]
        %v1965 = vld [vmem:[%s9 + $0x20] sm:$0xf]
        %v1966 = vld [vmem:[%s9 + $0x24] sm:$0xf]
        %v1967 = vld [vmem:[%s9 + $0x28] sm:$0xf]
        %v1968 = vld [vmem:[%s9 + $0x2c] sm:$0xf]
        %v1969 = vld [vmem:[%s9 + $0x30] sm:$0xf]
        %v1970 = vld [vmem:[%s9 + $0x34] sm:$0xf]
        %v1971 = vld [vmem:[%s9 + $0x38] sm:$0xf]
        %v1972 = vld [vmem:[%s9 + $0x3c] sm:$0xf]
        %v1973 = vld [vmem:[#allocation5] sm:$0xf]
        %v1974 = vld [vmem:[#allocation5 + $0x4] sm:$0xf]
        %v1975 = vld [vmem:[#allocation5 + $0x8] sm:$0xf]
        %v1976 = vld [vmem:[#allocation5 + $0xc] sm:$0xf]
        %v1977 = vld [vmem:[#allocation5 + $0x10] sm:$0xf]
        %v1978 = vld [vmem:[#allocation5 + $0x14] sm:$0xf]
        %v1979 = vld [vmem:[#allocation5 + $0x18] sm:$0xf]
        %v1980 = vld [vmem:[#allocation5 + $0x1c] sm:$0xf]
        %v1981 = vld [vmem:[#allocation5 + $0x20] sm:$0xf]
        %v1982 = vld [vmem:[#allocation5 + $0x24] sm:$0xf]
        %v1983 = vld [vmem:[#allocation5 + $0x28] sm:$0xf]
        %v1984 = vld [vmem:[#allocation5 + $0x2c] sm:$0xf]
        %v1985 = vld [vmem:[#allocation5 + $0x30] sm:$0xf]
        %v1986 = vld [vmem:[#allocation5 + $0x34] sm:$0xf]
        %v1987 = vld [vmem:[#allocation5 + $0x38] sm:$0xf]
        %v1988 = vld [vmem:[#allocation5 + $0x3c] sm:$0xf]
        %v1989 = vld [vmem:[#allocation7] sm:$0xf]
        %v1990 = vld [vmem:[#allocation7 + $0x4] sm:$0xf]
        %v1991 = vld [vmem:[#allocation7 + $0x8] sm:$0xf]
        %v1992 = vld [vmem:[#allocation7 + $0xc] sm:$0xf]
        %v1993 = vld [vmem:[#allocation7 + $0x10] sm:$0xf]
        %v1994 = vld [vmem:[#allocation7 + $0x14] sm:$0xf]
        %v1995 = vld [vmem:[#allocation7 + $0x18] sm:$0xf]
        %v1996 = vld [vmem:[#allocation7 + $0x1c] sm:$0xf]
        %v1997 = vld [vmem:[#allocation7 + $0x20] sm:$0xf]
        %v1998 = vld [vmem:[#allocation7 + $0x24] sm:$0xf]
        %v1999 = vld [vmem:[#allocation7 + $0x28] sm:$0xf]
        %v2000 = vld [vmem:[#allocation7 + $0x2c] sm:$0xf]
        %v2001 = vld [vmem:[#allocation7 + $0x30] sm:$0xf]
        %v2002 = vld [vmem:[#allocation7 + $0x34] sm:$0xf]
        %v2003 = vld [vmem:[#allocation7 + $0x38] sm:$0xf]
        %v2004 = vld [vmem:[#allocation7 + $0x3c] sm:$0xf]
        %v2005 = vld [vmem:[#allocation7 + $0x40] sm:$0xf]
        %v2006 = vld [vmem:[#allocation7 + $0x44] sm:$0xf]
        %v2007 = vld [vmem:[#allocation7 + $0x48] sm:$0xf]
        %v2008 = vld [vmem:[#allocation7 + $0x4c] sm:$0xf]
        %v2009 = vld [vmem:[#allocation7 + $0x50] sm:$0xf]
        %v2010 = vld [vmem:[#allocation7 + $0x54] sm:$0xf]
        %v2011 = vld [vmem:[#allocation7 + $0x58] sm:$0xf]
        %v2012 = vld [vmem:[#allocation7 + $0x5c] sm:$0xf]
        %v2013 = vld [vmem:[#allocation7 + $0x60] sm:$0xf]
        %v2014 = vld [vmem:[#allocation7 + $0x64] sm:$0xf]
        %v2015 = vld [vmem:[#allocation7 + $0x68] sm:$0xf]
        %v2016 = vld [vmem:[#allocation7 + $0x6c] sm:$0xf]
        %v2017 = vld [vmem:[#allocation7 + $0x70] sm:$0xf]
        %v2018 = vld [vmem:[#allocation7 + $0x74] sm:$0xf]
        %v2019 = vld [vmem:[#allocation7 + $0x78] sm:$0xf]
        %v2020 = vld [vmem:[#allocation7 + $0x7c] sm:$0xf]
        %v2021 = vld [vmem:[%s10] sm:$0xff]
        %v2022 = vld [vmem:[%s10 + $0x8] sm:$0xff]
        %v2023 = vld [vmem:[%s10 + $0x10] sm:$0xff]
        %v2024 = vld [vmem:[%s10 + $0x18] sm:$0xff]
        %v2025 = vld [vmem:[%s10 + $0x20] sm:$0xff]
        %v2026 = vld [vmem:[%s10 + $0x28] sm:$0xff]
        %v2027 = vld [vmem:[%s10 + $0x30] sm:$0xff]
        %v2028 = vld [vmem:[%s10 + $0x38] sm:$0xff]
        %v2029 = vld [vmem:[%s10 + $0x40] sm:$0xff]
        %v2030 = vld [vmem:[%s10 + $0x48] sm:$0xff]
        %v2031 = vld [vmem:[%s10 + $0x50] sm:$0xff]
        %v2032 = vld [vmem:[%s10 + $0x58] sm:$0xff]
        %v2033 = vld [vmem:[%s10 + $0x60] sm:$0xff]
        %v2034 = vld [vmem:[%s10 + $0x68] sm:$0xff]
        %v2035 = vld [vmem:[%s10 + $0x70] sm:$0xff]
        %v2036 = vld [vmem:[%s10 + $0x78] sm:$0xff]
        %v2037 = vld [vmem:[%s12] sm:$0xff]
        %v2038 = vld [vmem:[%s12 + $0x8] sm:$0xff]
        %v2039 = vld [vmem:[%s12 + $0x10] sm:$0xff]
        %v2040 = vld [vmem:[%s12 + $0x18] sm:$0xff]
        %v2041 = vld [vmem:[%s12 + $0x20] sm:$0xff]
        %v2042 = vld [vmem:[%s12 + $0x28] sm:$0xff]
        %v2043 = vld [vmem:[%s12 + $0x30] sm:$0xff]
        %v2044 = vld [vmem:[%s12 + $0x38] sm:$0xff]
        %v2045 = vld [vmem:[%s12 + $0x40] sm:$0xff]
        %v2046 = vld [vmem:[%s12 + $0x48] sm:$0xff]
        %v2047 = vld [vmem:[%s12 + $0x50] sm:$0xff]
        %v2048 = vld [vmem:[%s12 + $0x58] sm:$0xff]
        %v2049 = vld [vmem:[%s12 + $0x60] sm:$0xff]
        %v2050 = vld [vmem:[%s12 + $0x68] sm:$0xff]
        %v2051 = vld [vmem:[%s12 + $0x70] sm:$0xff]
        %v2052 = vld [vmem:[%s12 + $0x78] sm:$0xff]
        %v2053 = vld [vmem:[%s14] sm:$0xff]
        %v2054 = vld [vmem:[%s14 + $0x8] sm:$0xff]
        %v2055 = vld [vmem:[%s14 + $0x10] sm:$0xff]
        %v2056 = vld [vmem:[%s14 + $0x18] sm:$0xff]
        %v2057 = vld [vmem:[%s14 + $0x20] sm:$0xff]
        %v2058 = vld [vmem:[%s14 + $0x28] sm:$0xff]
        %v2059 = vld [vmem:[%s14 + $0x30] sm:$0xff]
        %v2060 = vld [vmem:[%s14 + $0x38] sm:$0xff]
        %v2061 = vld [vmem:[%s14 + $0x40] sm:$0xff]
        %v2062 = vld [vmem:[%s14 + $0x48] sm:$0xff]
        %v2063 = vld [vmem:[%s14 + $0x50] sm:$0xff]
        %v2064 = vld [vmem:[%s14 + $0x58] sm:$0xff]
        %v2065 = vld [vmem:[%s14 + $0x60] sm:$0xff]
        %v2066 = vld [vmem:[%s14 + $0x68] sm:$0xff]
        %v2067 = vld [vmem:[%s14 + $0x70] sm:$0xff]
        %v2068 = vld [vmem:[%s14 + $0x78] sm:$0xff]
        %v2069 = vld [vmem:[%s14 + $0x80] sm:$0xff]
        %v2070 = vld [vmem:[%s14 + $0x88] sm:$0xff]
        %v2071 = vld [vmem:[%s14 + $0x90] sm:$0xff]
        %v2072 = vld [vmem:[%s14 + $0x98] sm:$0xff]
        %v2073 = vld [vmem:[%s14 + $0xa0] sm:$0xff]
        %v2074 = vld [vmem:[%s14 + $0xa8] sm:$0xff]
        %v2075 = vld [vmem:[%s14 + $0xb0] sm:$0xff]
        %v2076 = vld [vmem:[%s14 + $0xb8] sm:$0xff]
        %v2077 = vld [vmem:[%s14 + $0xc0] sm:$0xff]
        %v2078 = vld [vmem:[%s14 + $0xc8] sm:$0xff]
        %v2079 = vld [vmem:[%s14 + $0xd0] sm:$0xff]
        %v2080 = vld [vmem:[%s14 + $0xd8] sm:$0xff]
        %v2081 = vld [vmem:[%s14 + $0xe0] sm:$0xff]
        %v2082 = vld [vmem:[%s14 + $0xe8] sm:$0xff]
        %v2083 = vld [vmem:[%s14 + $0xf0] sm:$0xff]
        %v2084 = vld [vmem:[%s14 + $0xf8] sm:$0xff]
        %v2085 = vld [vmem:[%s725] sm:$0xf]
        %2087 = vset.pattern.permute.xlu0 0
        %2088 = vperm.xlu0 %2087, %v2021
        %v2089 = vpop.permute.xlu0 %2088
        %2092 = vset.pattern.permute.xlu0 0
        %2093 = vperm.xlu0 %2092, %v2022
        %v2094 = vpop.permute.xlu0 %2093
        %2097 = vset.pattern.permute.xlu0 0
        %2098 = vperm.xlu0 %2097, %v2023
        %v2099 = vpop.permute.xlu0 %2098
        %2102 = vset.pattern.permute.xlu0 0
        %2103 = vperm.xlu0 %2102, %v2024
        %v2104 = vpop.permute.xlu0 %2103
        %2107 = vset.pattern.permute.xlu0 0
        %2108 = vperm.xlu0 %2107, %v2025
        %v2109 = vpop.permute.xlu0 %2108
        %2112 = vset.pattern.permute.xlu0 0
        %2113 = vperm.xlu0 %2112, %v2026
        %v2114 = vpop.permute.xlu0 %2113
        %2117 = vset.pattern.permute.xlu0 0
        %2118 = vperm.xlu0 %2117, %v2027
        %v2119 = vpop.permute.xlu0 %2118
        %2122 = vset.pattern.permute.xlu0 0
        %2123 = vperm.xlu0 %2122, %v2028
        %v2124 = vpop.permute.xlu0 %2123
        %2127 = vset.pattern.permute.xlu0 0
        %2128 = vperm.xlu0 %2127, %v2029
        %v2129 = vpop.permute.xlu0 %2128
        %2132 = vset.pattern.permute.xlu0 0
        %2133 = vperm.xlu0 %2132, %v2030
        %v2134 = vpop.permute.xlu0 %2133
        %2137 = vset.pattern.permute.xlu0 0
        %2138 = vperm.xlu0 %2137, %v2031
        %v2139 = vpop.permute.xlu0 %2138
        %2142 = vset.pattern.permute.xlu0 0
        %2143 = vperm.xlu0 %2142, %v2032
        %v2144 = vpop.permute.xlu0 %2143
        %2147 = vset.pattern.permute.xlu0 0
        %2148 = vperm.xlu0 %2147, %v2033
        %v2149 = vpop.permute.xlu0 %2148
        %2152 = vset.pattern.permute.xlu0 0
        %2153 = vperm.xlu0 %2152, %v2034
        %v2154 = vpop.permute.xlu0 %2153
        %2157 = vset.pattern.permute.xlu0 0
        %2158 = vperm.xlu0 %2157, %v2035
        %v2159 = vpop.permute.xlu0 %2158
        %2162 = vset.pattern.permute.xlu0 0
        %2163 = vperm.xlu0 %2162, %v2036
        %v2164 = vpop.permute.xlu0 %2163
        %v2182 = vunpack.c.l.b16 %v1957
        %v2183 = vunpack.c.l.b16 %v1958
        %v2184 = vunpack.c.l.b16 %v1959
        %v2185 = vunpack.c.l.b16 %v1960
        %v2186 = vunpack.c.l.b16 %v1961
        %v2187 = vunpack.c.l.b16 %v1962
        %v2188 = vunpack.c.l.b16 %v1963
        %v2189 = vunpack.c.l.b16 %v1964
        %v2190 = vunpack.c.l.b16 %v1965
        %v2191 = vunpack.c.l.b16 %v1966
        %v2192 = vunpack.c.l.b16 %v1967
        %v2193 = vunpack.c.l.b16 %v1968
        %v2194 = vunpack.c.l.b16 %v1969
        %v2195 = vunpack.c.l.b16 %v1970
        %v2196 = vunpack.c.l.b16 %v1971
        %v2197 = vunpack.c.l.b16 %v1972
        %v2198 = vpack.c.b16 %v2183, %v2182
        %v2199 = vpack.c.b16 %v2185, %v2184
        %v2200 = vpack.c.b16 %v2187, %v2186
        %v2201 = vpack.c.b16 %v2189, %v2188
        %v2202 = vpack.c.b16 %v2191, %v2190
        %v2203 = vpack.c.b16 %v2193, %v2192
        %v2204 = vpack.c.b16 %v2195, %v2194
        %v2205 = vpack.c.b16 %v2197, %v2196
        %v2207 = vsel %vm980, %v2198, 0
        %v2210 = vsel %vm980, %v2199, 0
        %v2213 = vsel %vm980, %v2200, 0
        %v2216 = vsel %vm980, %v2201, 0
        %v2219 = vsel %vm980, %v2202, 0
        %v2222 = vsel %vm980, %v2203, 0
        %v2225 = vsel %vm980, %v2204, 0
        %v2228 = vsel %vm980, %v2205, 0
        %v2231 = vsel %vm1005, %v2085, 0
        %2233 = vmatprep.subr.bf16.mxu0 0
        %2234 = vmatpush1.bf16.msra.mxu0 %v2231
        %2235 = vmatprep.subr.bf16.mxu0 0
        %2236 = vmatpush1.bf16.msra.mxu0 0
        %2237 = vmatprep.subr.bf16.mxu0 0
        %2238 = vmatpush1.bf16.msra.mxu0 0
        %2239 = vmatprep.subr.bf16.mxu0 0
        %2240 = vmatpush1.bf16.msra.mxu0 0
        %2241 = vmatprep.subr.bf16.mxu0 0
        %2242 = vmatpush1.bf16.msra.mxu0 0
        %2243 = vmatprep.subr.bf16.mxu0 0
        %2244 = vmatpush1.bf16.msra.mxu0 0
        %2245 = vmatprep.subr.bf16.mxu0 0
        %2246 = vmatpush1.bf16.msra.mxu0 0
        %2247 = vmatprep.subr.bf16.mxu0 0
        %2248 = vmatpush1.bf16.msra.mxu0 0
        %2249 = vmatprep.subr.bf16.mxu0 0
        %2250 = vmatpush1.bf16.msra.mxu0 0
        %2251 = vmatprep.subr.bf16.mxu0 0
        %2252 = vmatpush1.bf16.msra.mxu0 0
        %2253 = vmatprep.subr.bf16.mxu0 0
        %2254 = vmatpush1.bf16.msra.mxu0 0
        %2255 = vmatprep.subr.bf16.mxu0 0
        %2256 = vmatpush1.bf16.msra.mxu0 0
        %2257 = vmatprep.subr.bf16.mxu0 0
        %2258 = vmatpush1.bf16.msra.mxu0 0
        %2259 = vmatprep.subr.bf16.mxu0 0
        %2260 = vmatpush1.bf16.msra.mxu0 0
        %2261 = vmatprep.subr.bf16.mxu0 0
        %2262 = vmatpush1.bf16.msra.mxu0 0
        %2263 = vmatprep.subr.bf16.mxu0 0
        %2264 = vmatpush1.bf16.msra.mxu0 0
        %2265 = vmatprep.mubr.bf16.mxu0 0
        %2266 = vmatmul.mubr.bf16.gmra.mrb[0].mxu0 %v2207
        %v2267 = vpop.f32.mrb[0].mxu0
        %v2268 = vadd.f32 %v2089, %v2267
        %v2269 = vpop.f32.mrb[0].mxu0
        %v2270 = vpop.f32.mrb[0].mxu0
        %v2271 = vadd.f32 %v2094, %v2270
        %v2272 = vpop.f32.mrb[0].mxu0
        %2273 = vmatprep.mubr.bf16.mxu0 0
        %2274 = vmatmul.mubr.bf16.gmra.mrb[0].mxu0 %v2210
        %v2275 = vpop.f32.mrb[0].mxu0
        %v2276 = vadd.f32 %v2099, %v2275
        %v2277 = vpop.f32.mrb[0].mxu0
        %v2278 = vpop.f32.mrb[0].mxu0
        %v2279 = vadd.f32 %v2104, %v2278
        %v2280 = vpop.f32.mrb[0].mxu0
        %2281 = vmatprep.mubr.bf16.mxu0 0
        %2282 = vmatmul.mubr.bf16.gmra.mrb[0].mxu0 %v2213
        %v2283 = vpop.f32.mrb[0].mxu0
        %v2284 = vadd.f32 %v2109, %v2283
        %v2285 = vpop.f32.mrb[0].mxu0
        %v2286 = vpop.f32.mrb[0].mxu0
        %v2287 = vadd.f32 %v2114, %v2286
        %v2288 = vpop.f32.mrb[0].mxu0
        %2289 = vmatprep.mubr.bf16.mxu0 0
        %2290 = vmatmul.mubr.bf16.gmra.mrb[0].mxu0 %v2216
        %v2291 = vpop.f32.mrb[0].mxu0
        %v2292 = vadd.f32 %v2119, %v2291
        %v2293 = vpop.f32.mrb[0].mxu0
        %v2294 = vpop.f32.mrb[0].mxu0
        %v2295 = vadd.f32 %v2124, %v2294
        %v2296 = vpop.f32.mrb[0].mxu0
        %2297 = vmatprep.mubr.bf16.mxu0 0
        %2298 = vmatmul.mubr.bf16.gmra.mrb[0].mxu0 %v2219
        %v2299 = vpop.f32.mrb[0].mxu0
        %v2300 = vadd.f32 %v2129, %v2299
        %v2301 = vpop.f32.mrb[0].mxu0
        %v2302 = vpop.f32.mrb[0].mxu0
        %v2303 = vadd.f32 %v2134, %v2302
        %v2304 = vpop.f32.mrb[0].mxu0
        %2305 = vmatprep.mubr.bf16.mxu0 0
        %2306 = vmatmul.mubr.bf16.gmra.mrb[0].mxu0 %v2222
        %v2307 = vpop.f32.mrb[0].mxu0
        %v2308 = vadd.f32 %v2139, %v2307
        %v2309 = vpop.f32.mrb[0].mxu0
        %v2310 = vpop.f32.mrb[0].mxu0
        %v2311 = vadd.f32 %v2144, %v2310
        %v2312 = vpop.f32.mrb[0].mxu0
        %2313 = vmatprep.mubr.bf16.mxu0 0
        %2314 = vmatmul.mubr.bf16.gmra.mrb[0].mxu0 %v2225
        %v2315 = vpop.f32.mrb[0].mxu0
        %v2316 = vadd.f32 %v2149, %v2315
        %v2317 = vpop.f32.mrb[0].mxu0
        %v2318 = vpop.f32.mrb[0].mxu0
        %v2319 = vadd.f32 %v2154, %v2318
        %v2320 = vpop.f32.mrb[0].mxu0
        %2321 = vmatprep.mubr.bf16.mxu0 0
        %2322 = vmatmul.mubr.bf16.gmra.mrb[0].mxu0 %v2228
        %v2323 = vpop.f32.mrb[0].mxu0
        %v2324 = vadd.f32 %v2159, %v2323
        %v2325 = vpop.f32.mrb[0].mxu0
        %v2326 = vpop.f32.mrb[0].mxu0
        %v2327 = vadd.f32 %v2164, %v2326
        %v2328 = vpop.f32.mrb[0].mxu0
        %2329 = vdwg.mxu0
        %v2330 = vmax.f32 %v2268, 0.0
        %v2331 = vmax.f32 %v2271, 0.0
        %v2332 = vmax.f32 %v2276, 0.0
        %v2333 = vmax.f32 %v2279, 0.0
        %v2334 = vmax.f32 %v2284, 0.0
        %v2335 = vmax.f32 %v2287, 0.0
        %v2336 = vmax.f32 %v2292, 0.0
        %v2337 = vmax.f32 %v2295, 0.0
        %v2338 = vmax.f32 %v2300, 0.0
        %v2339 = vmax.f32 %v2303, 0.0
        %v2340 = vmax.f32 %v2308, 0.0
        %v2341 = vmax.f32 %v2311, 0.0
        %v2342 = vmax.f32 %v2316, 0.0
        %v2343 = vmax.f32 %v2319, 0.0
        %v2344 = vmax.f32 %v2324, 0.0
        %v2345 = vmax.f32 %v2327, 0.0
        %v2346 = vpack.c.bf16 %v2331, %v2330
        %v2347 = vpack.c.bf16 %v2333, %v2332
        %v2348 = vpack.c.bf16 %v2335, %v2334
        %v2349 = vpack.c.bf16 %v2337, %v2336
        %v2350 = vpack.c.bf16 %v2339, %v2338
        %v2351 = vpack.c.bf16 %v2341, %v2340
        %v2352 = vpack.c.bf16 %v2343, %v2342
        %v2353 = vpack.c.bf16 %v2345, %v2344
        %2355 = vset.pattern.permute.xlu0 0
        %2356 = vperm.xlu0 %2355, %v2037
        %v2357 = vpop.permute.xlu0 %2356
        %2360 = vset.pattern.permute.xlu0 0
        %2361 = vperm.xlu0 %2360, %v2038
        %v2362 = vpop.permute.xlu0 %2361
        %2365 = vset.pattern.permute.xlu0 0
        %2366 = vperm.xlu0 %2365, %v2039
        %v2367 = vpop.permute.xlu0 %2366
        %2370 = vset.pattern.permute.xlu0 0
        %2371 = vperm.xlu0 %2370, %v2040
        %v2372 = vpop.permute.xlu0 %2371
        %2375 = vset.pattern.permute.xlu0 0
        %2376 = vperm.xlu0 %2375, %v2041
        %v2377 = vpop.permute.xlu0 %2376
        %2380 = vset.pattern.permute.xlu0 0
        %2381 = vperm.xlu0 %2380, %v2042
        %v2382 = vpop.permute.xlu0 %2381
        %2385 = vset.pattern.permute.xlu0 0
        %2386 = vperm.xlu0 %2385, %v2043
        %v2387 = vpop.permute.xlu0 %2386
        %2390 = vset.pattern.permute.xlu0 0
        %2391 = vperm.xlu0 %2390, %v2044
        %v2392 = vpop.permute.xlu0 %2391
        %2395 = vset.pattern.permute.xlu0 0
        %2396 = vperm.xlu0 %2395, %v2045
        %v2397 = vpop.permute.xlu0 %2396
        %2400 = vset.pattern.permute.xlu0 0
        %2401 = vperm.xlu0 %2400, %v2046
        %v2402 = vpop.permute.xlu0 %2401
        %2405 = vset.pattern.permute.xlu0 0
        %2406 = vperm.xlu0 %2405, %v2047
        %v2407 = vpop.permute.xlu0 %2406
        %2410 = vset.pattern.permute.xlu0 0
        %2411 = vperm.xlu0 %2410, %v2048
        %v2412 = vpop.permute.xlu0 %2411
        %2415 = vset.pattern.permute.xlu0 0
        %2416 = vperm.xlu0 %2415, %v2049
        %v2417 = vpop.permute.xlu0 %2416
        %2420 = vset.pattern.permute.xlu0 0
        %2421 = vperm.xlu0 %2420, %v2050
        %v2422 = vpop.permute.xlu0 %2421
        %2425 = vset.pattern.permute.xlu0 0
        %2426 = vperm.xlu0 %2425, %v2051
        %v2427 = vpop.permute.xlu0 %2426
        %2430 = vset.pattern.permute.xlu0 0
        %2431 = vperm.xlu0 %2430, %v2052
        %v2432 = vpop.permute.xlu0 %2431
        %v2450 = vunpack.c.l.b16 %v1973
        %v2451 = vunpack.c.l.b16 %v1974
        %v2452 = vunpack.c.l.b16 %v1975
        %v2453 = vunpack.c.l.b16 %v1976
        %v2454 = vunpack.c.l.b16 %v1977
        %v2455 = vunpack.c.l.b16 %v1978
        %v2456 = vunpack.c.l.b16 %v1979
        %v2457 = vunpack.c.l.b16 %v1980
        %v2458 = vunpack.c.l.b16 %v1981
        %v2459 = vunpack.c.l.b16 %v1982
        %v2460 = vunpack.c.l.b16 %v1983
        %v2461 = vunpack.c.l.b16 %v1984
        %v2462 = vunpack.c.l.b16 %v1985
        %v2463 = vunpack.c.l.b16 %v1986
        %v2464 = vunpack.c.l.b16 %v1987
        %v2465 = vunpack.c.l.b16 %v1988
        %v2466 = vpack.c.b16 %v2451, %v2450
        %v2467 = vpack.c.b16 %v2453, %v2452
        %v2468 = vpack.c.b16 %v2455, %v2454
        %v2469 = vpack.c.b16 %v2457, %v2456
        %v2470 = vpack.c.b16 %v2459, %v2458
        %v2471 = vpack.c.b16 %v2461, %v2460
        %v2472 = vpack.c.b16 %v2463, %v2462
        %v2473 = vpack.c.b16 %v2465, %v2464
        %2482 = vmatprep.subr.bf16.mxu0 0
        %2483 = vmatpush1.bf16.msra.mxu0 %v2346
        %2484 = vmatprep.subr.bf16.mxu0 0
        %2485 = vmatpush1.bf16.msra.mxu0 %v2347
        %2486 = vmatprep.subr.bf16.mxu0 0
        %2487 = vmatpush1.bf16.msra.mxu0 %v2348
        %2488 = vmatprep.subr.bf16.mxu0 0
        %2489 = vmatpush1.bf16.msra.mxu0 %v2349
        %2490 = vmatprep.subr.bf16.mxu0 0
        %2491 = vmatpush1.bf16.msra.mxu0 %v2350
        %2492 = vmatprep.subr.bf16.mxu0 0
        %2493 = vmatpush1.bf16.msra.mxu0 %v2351
        %2494 = vmatprep.subr.bf16.mxu0 0
        %2495 = vmatpush1.bf16.msra.mxu0 %v2352
        %2496 = vmatprep.subr.bf16.mxu0 0
        %2497 = vmatpush1.bf16.msra.mxu0 %v2353
        %2498 = vmatprep.subr.bf16.mxu0 0
        %2499 = vmatpush1.bf16.msra.mxu0 0
        %2500 = vmatprep.subr.bf16.mxu0 0
        %2501 = vmatpush1.bf16.msra.mxu0 0
        %2502 = vmatprep.subr.bf16.mxu0 0
        %2503 = vmatpush1.bf16.msra.mxu0 0
        %2504 = vmatprep.subr.bf16.mxu0 0
        %2505 = vmatpush1.bf16.msra.mxu0 0
        %2506 = vmatprep.subr.bf16.mxu0 0
        %2507 = vmatpush1.bf16.msra.mxu0 0
        %2508 = vmatprep.subr.bf16.mxu0 0
        %2509 = vmatpush1.bf16.msra.mxu0 0
        %2510 = vmatprep.subr.bf16.mxu0 0
        %2511 = vmatpush1.bf16.msra.mxu0 0
        %2512 = vmatprep.subr.bf16.mxu0 0
        %2513 = vmatpush1.bf16.msra.mxu0 0
        %2514 = vmatprep.mubr.bf16.mxu0 0
        %2515 = vmatmul.mubr.bf16.gmra.mrb[0].mxu0 %v2466
        %v2516 = vpop.f32.mrb[0].mxu0
        %v2517 = vadd.f32 %v2357, %v2516
        %v2518 = vpop.f32.mrb[0].mxu0
        %v2519 = vpop.f32.mrb[0].mxu0
        %v2520 = vadd.f32 %v2362, %v2519
        %v2521 = vpop.f32.mrb[0].mxu0
        %2522 = vmatprep.mubr.bf16.mxu0 0
        %2523 = vmatmul.mubr.bf16.gmra.mrb[0].mxu0 %v2467
        %v2524 = vpop.f32.mrb[0].mxu0
        %v2525 = vadd.f32 %v2367, %v2524
        %v2526 = vpop.f32.mrb[0].mxu0
        %v2527 = vpop.f32.mrb[0].mxu0
        %v2528 = vadd.f32 %v2372, %v2527
        %v2529 = vpop.f32.mrb[0].mxu0
        %2530 = vmatprep.mubr.bf16.mxu0 0
        %2531 = vmatmul.mubr.bf16.gmra.mrb[0].mxu0 %v2468
        %v2532 = vpop.f32.mrb[0].mxu0
        %v2533 = vadd.f32 %v2377, %v2532
        %v2534 = vpop.f32.mrb[0].mxu0
        %v2535 = vpop.f32.mrb[0].mxu0
        %v2536 = vadd.f32 %v2382, %v2535
        %v2537 = vpop.f32.mrb[0].mxu0
        %2538 = vmatprep.mubr.bf16.mxu0 0
        %2539 = vmatmul.mubr.bf16.gmra.mrb[0].mxu0 %v2469
        %v2540 = vpop.f32.mrb[0].mxu0
        %v2541 = vadd.f32 %v2387, %v2540
        %v2542 = vpop.f32.mrb[0].mxu0
        %v2543 = vpop.f32.mrb[0].mxu0
        %v2544 = vadd.f32 %v2392, %v2543
        %v2545 = vpop.f32.mrb[0].mxu0
        %2546 = vmatprep.mubr.bf16.mxu0 0
        %2547 = vmatmul.mubr.bf16.gmra.mrb[0].mxu0 %v2470
        %v2548 = vpop.f32.mrb[0].mxu0
        %v2549 = vadd.f32 %v2397, %v2548
        %v2550 = vpop.f32.mrb[0].mxu0
        %v2551 = vpop.f32.mrb[0].mxu0
        %v2552 = vadd.f32 %v2402, %v2551
        %v2553 = vpop.f32.mrb[0].mxu0
        %2554 = vmatprep.mubr.bf16.mxu0 0
        %2555 = vmatmul.mubr.bf16.gmra.mrb[0].mxu0 %v2471
        %v2556 = vpop.f32.mrb[0].mxu0
        %v2557 = vadd.f32 %v2407, %v2556
        %v2558 = vpop.f32.mrb[0].mxu0
        %v2559 = vpop.f32.mrb[0].mxu0
        %v2560 = vadd.f32 %v2412, %v2559
        %v2561 = vpop.f32.mrb[0].mxu0
        %2562 = vmatprep.mubr.bf16.mxu0 0
        %2563 = vmatmul.mubr.bf16.gmra.mrb[0].mxu0 %v2472
        %v2564 = vpop.f32.mrb[0].mxu0
        %v2565 = vadd.f32 %v2417, %v2564
        %v2566 = vpop.f32.mrb[0].mxu0
        %v2567 = vpop.f32.mrb[0].mxu0
        %v2568 = vadd.f32 %v2422, %v2567
        %v2569 = vpop.f32.mrb[0].mxu0
        %2570 = vmatprep.mubr.bf16.mxu0 0
        %2571 = vmatmul.mubr.bf16.gmra.mrb[0].mxu0 %v2473
        %v2572 = vpop.f32.mrb[0].mxu0
        %v2573 = vadd.f32 %v2427, %v2572
        %v2574 = vpop.f32.mrb[0].mxu0
        %v2575 = vpop.f32.mrb[0].mxu0
        %v2576 = vadd.f32 %v2432, %v2575
        %v2577 = vpop.f32.mrb[0].mxu0
        %2578 = vdwg.mxu0
        %v2579 = vmax.f32 %v2517, 0.0
        %v2580 = vmax.f32 %v2520, 0.0
        %v2581 = vmax.f32 %v2525, 0.0
        %v2582 = vmax.f32 %v2528, 0.0
        %v2583 = vmax.f32 %v2533, 0.0
        %v2584 = vmax.f32 %v2536, 0.0
        %v2585 = vmax.f32 %v2541, 0.0
        %v2586 = vmax.f32 %v2544, 0.0
        %v2587 = vmax.f32 %v2549, 0.0
        %v2588 = vmax.f32 %v2552, 0.0
        %v2589 = vmax.f32 %v2557, 0.0
        %v2590 = vmax.f32 %v2560, 0.0
        %v2591 = vmax.f32 %v2565, 0.0
        %v2592 = vmax.f32 %v2568, 0.0
        %v2593 = vmax.f32 %v2573, 0.0
        %v2594 = vmax.f32 %v2576, 0.0
        %v2595 = vpack.c.bf16 %v2580, %v2579
        %v2596 = vpack.c.bf16 %v2582, %v2581
        %v2597 = vpack.c.bf16 %v2584, %v2583
        %v2598 = vpack.c.bf16 %v2586, %v2585
        %v2599 = vpack.c.bf16 %v2588, %v2587
        %v2600 = vpack.c.bf16 %v2590, %v2589
        %v2601 = vpack.c.bf16 %v2592, %v2591
        %v2602 = vpack.c.bf16 %v2594, %v2593
        %2604 = vset.pattern.permute.xlu0 0
        %2605 = vperm.xlu0 %2604, %v2053
        %v2606 = vpop.permute.xlu0 %2605
        %2609 = vset.pattern.permute.xlu0 0
        %2610 = vperm.xlu0 %2609, %v2054
        %v2611 = vpop.permute.xlu0 %2610
        %2614 = vset.pattern.permute.xlu0 0
        %2615 = vperm.xlu0 %2614, %v2055
        %v2616 = vpop.permute.xlu0 %2615
        %2619 = vset.pattern.permute.xlu0 0
        %2620 = vperm.xlu0 %2619, %v2056
        %v2621 = vpop.permute.xlu0 %2620
        %2624 = vset.pattern.permute.xlu0 0
        %2625 = vperm.xlu0 %2624, %v2057
        %v2626 = vpop.permute.xlu0 %2625
        %2629 = vset.pattern.permute.xlu0 0
        %2630 = vperm.xlu0 %2629, %v2058
        %v2631 = vpop.permute.xlu0 %2630
        %2634 = vset.pattern.permute.xlu0 0
        %2635 = vperm.xlu0 %2634, %v2059
        %v2636 = vpop.permute.xlu0 %2635
        %2639 = vset.pattern.permute.xlu0 0
        %2640 = vperm.xlu0 %2639, %v2060
        %v2641 = vpop.permute.xlu0 %2640
        %2644 = vset.pattern.permute.xlu0 0
        %2645 = vperm.xlu0 %2644, %v2061
        %v2646 = vpop.permute.xlu0 %2645
        %2649 = vset.pattern.permute.xlu0 0
        %2650 = vperm.xlu0 %2649, %v2062
        %v2651 = vpop.permute.xlu0 %2650
        %2654 = vset.pattern.permute.xlu0 0
        %2655 = vperm.xlu0 %2654, %v2063
        %v2656 = vpop.permute.xlu0 %2655
        %2659 = vset.pattern.permute.xlu0 0
        %2660 = vperm.xlu0 %2659, %v2064
        %v2661 = vpop.permute.xlu0 %2660
        %2664 = vset.pattern.permute.xlu0 0
        %2665 = vperm.xlu0 %2664, %v2065
        %v2666 = vpop.permute.xlu0 %2665
        %2669 = vset.pattern.permute.xlu0 0
        %2670 = vperm.xlu0 %2669, %v2066
        %v2671 = vpop.permute.xlu0 %2670
        %2674 = vset.pattern.permute.xlu0 0
        %2675 = vperm.xlu0 %2674, %v2067
        %v2676 = vpop.permute.xlu0 %2675
        %2679 = vset.pattern.permute.xlu0 0
        %2680 = vperm.xlu0 %2679, %v2068
        %v2681 = vpop.permute.xlu0 %2680
        %2684 = vset.pattern.permute.xlu0 0
        %2685 = vperm.xlu0 %2684, %v2069
        %v2686 = vpop.permute.xlu0 %2685
        %2689 = vset.pattern.permute.xlu0 0
        %2690 = vperm.xlu0 %2689, %v2070
        %v2691 = vpop.permute.xlu0 %2690
        %2694 = vset.pattern.permute.xlu0 0
        %2695 = vperm.xlu0 %2694, %v2071
        %v2696 = vpop.permute.xlu0 %2695
        %2699 = vset.pattern.permute.xlu0 0
        %2700 = vperm.xlu0 %2699, %v2072
        %v2701 = vpop.permute.xlu0 %2700
        %2704 = vset.pattern.permute.xlu0 0
        %2705 = vperm.xlu0 %2704, %v2073
        %v2706 = vpop.permute.xlu0 %2705
        %2709 = vset.pattern.permute.xlu0 0
        %2710 = vperm.xlu0 %2709, %v2074
        %v2711 = vpop.permute.xlu0 %2710
        %2714 = vset.pattern.permute.xlu0 0
        %2715 = vperm.xlu0 %2714, %v2075
        %v2716 = vpop.permute.xlu0 %2715
        %2719 = vset.pattern.permute.xlu0 0
        %2720 = vperm.xlu0 %2719, %v2076
        %v2721 = vpop.permute.xlu0 %2720
        %2724 = vset.pattern.permute.xlu0 0
        %2725 = vperm.xlu0 %2724, %v2077
        %v2726 = vpop.permute.xlu0 %2725
        %2729 = vset.pattern.permute.xlu0 0
        %2730 = vperm.xlu0 %2729, %v2078
        %v2731 = vpop.permute.xlu0 %2730
        %2734 = vset.pattern.permute.xlu0 0
        %2735 = vperm.xlu0 %2734, %v2079
        %v2736 = vpop.permute.xlu0 %2735
        %2739 = vset.pattern.permute.xlu0 0
        %2740 = vperm.xlu0 %2739, %v2080
        %v2741 = vpop.permute.xlu0 %2740
        %2744 = vset.pattern.permute.xlu0 0
        %2745 = vperm.xlu0 %2744, %v2081
        %v2746 = vpop.permute.xlu0 %2745
        %2749 = vset.pattern.permute.xlu0 0
        %2750 = vperm.xlu0 %2749, %v2082
        %v2751 = vpop.permute.xlu0 %2750
        %2754 = vset.pattern.permute.xlu0 0
        %2755 = vperm.xlu0 %2754, %v2083
        %v2756 = vpop.permute.xlu0 %2755
        %2759 = vset.pattern.permute.xlu0 0
        %2760 = vperm.xlu0 %2759, %v2084
        %v2761 = vpop.permute.xlu0 %2760
        %v2795 = vunpack.c.l.b16 %v1989
        %v2796 = vunpack.c.l.b16 %v1990
        %v2797 = vunpack.c.l.b16 %v1991
        %v2798 = vunpack.c.l.b16 %v1992
        %v2799 = vunpack.c.l.b16 %v1993
        %v2800 = vunpack.c.l.b16 %v1994
        %v2801 = vunpack.c.l.b16 %v1995
        %v2802 = vunpack.c.l.b16 %v1996
        %v2803 = vunpack.c.l.b16 %v1997
        %v2804 = vunpack.c.l.b16 %v1998
        %v2805 = vunpack.c.l.b16 %v1999
        %v2806 = vunpack.c.l.b16 %v2000
        %v2807 = vunpack.c.l.b16 %v2001
        %v2808 = vunpack.c.l.b16 %v2002
        %v2809 = vunpack.c.l.b16 %v2003
        %v2810 = vunpack.c.l.b16 %v2004
        %v2811 = vunpack.c.l.b16 %v2005
        %v2812 = vunpack.c.l.b16 %v2006
        %v2813 = vunpack.c.l.b16 %v2007
        %v2814 = vunpack.c.l.b16 %v2008
        %v2815 = vunpack.c.l.b16 %v2009
        %v2816 = vunpack.c.l.b16 %v2010
        %v2817 = vunpack.c.l.b16 %v2011
        %v2818 = vunpack.c.l.b16 %v2012
        %v2819 = vunpack.c.l.b16 %v2013
        %v2820 = vunpack.c.l.b16 %v2014
        %v2821 = vunpack.c.l.b16 %v2015
        %v2822 = vunpack.c.l.b16 %v2016
        %v2823 = vunpack.c.l.b16 %v2017
        %v2824 = vunpack.c.l.b16 %v2018
        %v2825 = vunpack.c.l.b16 %v2019
        %v2826 = vunpack.c.l.b16 %v2020
        %v2827 = vpack.c.b16 %v2796, %v2795
        %v2828 = vpack.c.b16 %v2798, %v2797
        %v2829 = vpack.c.b16 %v2800, %v2799
        %v2830 = vpack.c.b16 %v2802, %v2801
        %v2831 = vpack.c.b16 %v2804, %v2803
        %v2832 = vpack.c.b16 %v2806, %v2805
        %v2833 = vpack.c.b16 %v2808, %v2807
        %v2834 = vpack.c.b16 %v2810, %v2809
        %v2835 = vpack.c.b16 %v2812, %v2811
        %v2836 = vpack.c.b16 %v2814, %v2813
        %v2837 = vpack.c.b16 %v2816, %v2815
        %v2838 = vpack.c.b16 %v2818, %v2817
        %v2839 = vpack.c.b16 %v2820, %v2819
        %v2840 = vpack.c.b16 %v2822, %v2821
        %v2841 = vpack.c.b16 %v2824, %v2823
        %v2842 = vpack.c.b16 %v2826, %v2825
        %2859 = vmatprep.subr.bf16.mxu0 0
        %2860 = vmatpush1.bf16.msra.mxu0 %v2595
        %2861 = vmatprep.subr.bf16.mxu0 0
        %2862 = vmatpush1.bf16.msra.mxu0 %v2596
        %2863 = vmatprep.subr.bf16.mxu0 0
        %2864 = vmatpush1.bf16.msra.mxu0 %v2597
        %2865 = vmatprep.subr.bf16.mxu0 0
        %2866 = vmatpush1.bf16.msra.mxu0 %v2598
        %2867 = vmatprep.subr.bf16.mxu0 0
        %2868 = vmatpush1.bf16.msra.mxu0 %v2599
        %2869 = vmatprep.subr.bf16.mxu0 0
        %2870 = vmatpush1.bf16.msra.mxu0 %v2600
        %2871 = vmatprep.subr.bf16.mxu0 0
        %2872 = vmatpush1.bf16.msra.mxu0 %v2601
        %2873 = vmatprep.subr.bf16.mxu0 0
        %2874 = vmatpush1.bf16.msra.mxu0 %v2602
        %2875 = vmatprep.subr.bf16.mxu0 0
        %2876 = vmatpush1.bf16.msra.mxu0 0
        %2877 = vmatprep.subr.bf16.mxu0 0
        %2878 = vmatpush1.bf16.msra.mxu0 0
        %2879 = vmatprep.subr.bf16.mxu0 0
        %2880 = vmatpush1.bf16.msra.mxu0 0
        %2881 = vmatprep.subr.bf16.mxu0 0
        %2882 = vmatpush1.bf16.msra.mxu0 0
        %2883 = vmatprep.subr.bf16.mxu0 0
        %2884 = vmatpush1.bf16.msra.mxu0 0
        %2885 = vmatprep.subr.bf16.mxu0 0
        %2886 = vmatpush1.bf16.msra.mxu0 0
        %2887 = vmatprep.subr.bf16.mxu0 0
        %2888 = vmatpush1.bf16.msra.mxu0 0
        %2889 = vmatprep.subr.bf16.mxu0 0
        %2890 = vmatpush1.bf16.msra.mxu0 0
        %2891 = vmatprep.mubr.bf16.mxu0 0
        %2892 = vmatmul.mubr.bf16.gmra.mrb[0].mxu0 %v2827
        %v2893 = vpop.f32.mrb[0].mxu0
        %v2894 = vadd.f32 %v2606, %v2893
        %v2895 = vpop.f32.mrb[0].mxu0
        %v2896 = vpop.f32.mrb[0].mxu0
        %v2897 = vadd.f32 %v2611, %v2896
        %v2898 = vpop.f32.mrb[0].mxu0
        %2899 = vmatprep.mubr.bf16.mxu0 0
        %2900 = vmatmul.mubr.bf16.gmra.mrb[0].mxu0 %v2828
        %v2901 = vpop.f32.mrb[0].mxu0
        %v2902 = vadd.f32 %v2616, %v2901
        %v2903 = vpop.f32.mrb[0].mxu0
        %v2904 = vpop.f32.mrb[0].mxu0
        %v2905 = vadd.f32 %v2621, %v2904
        %v2906 = vpop.f32.mrb[0].mxu0
        %2907 = vmatprep.mubr.bf16.mxu0 0
        %2908 = vmatmul.mubr.bf16.gmra.mrb[0].mxu0 %v2829
        %v2909 = vpop.f32.mrb[0].mxu0
        %v2910 = vadd.f32 %v2626, %v2909
        %v2911 = vpop.f32.mrb[0].mxu0
        %v2912 = vpop.f32.mrb[0].mxu0
        %v2913 = vadd.f32 %v2631, %v2912
        %v2914 = vpop.f32.mrb[0].mxu0
        %2915 = vmatprep.mubr.bf16.mxu0 0
        %2916 = vmatmul.mubr.bf16.gmra.mrb[0].mxu0 %v2830
        %v2917 = vpop.f32.mrb[0].mxu0
        %v2918 = vadd.f32 %v2636, %v2917
        %v2919 = vpop.f32.mrb[0].mxu0
        %v2920 = vpop.f32.mrb[0].mxu0
        %v2921 = vadd.f32 %v2641, %v2920
        %v2922 = vpop.f32.mrb[0].mxu0
        %2923 = vmatprep.mubr.bf16.mxu0 0
        %2924 = vmatmul.mubr.bf16.gmra.mrb[0].mxu0 %v2831
        %v2925 = vpop.f32.mrb[0].mxu0
        %v2926 = vadd.f32 %v2646, %v2925
        %v2927 = vpop.f32.mrb[0].mxu0
        %v2928 = vpop.f32.mrb[0].mxu0
        %v2929 = vadd.f32 %v2651, %v2928
        %v2930 = vpop.f32.mrb[0].mxu0
        %2931 = vmatprep.mubr.bf16.mxu0 0
        %2932 = vmatmul.mubr.bf16.gmra.mrb[0].mxu0 %v2832
        %v2933 = vpop.f32.mrb[0].mxu0
        %v2934 = vadd.f32 %v2656, %v2933
        %v2935 = vpop.f32.mrb[0].mxu0
        %v2936 = vpop.f32.mrb[0].mxu0
        %v2937 = vadd.f32 %v2661, %v2936
        %v2938 = vpop.f32.mrb[0].mxu0
        %2939 = vmatprep.mubr.bf16.mxu0 0
        %2940 = vmatmul.mubr.bf16.gmra.mrb[0].mxu0 %v2833
        %v2941 = vpop.f32.mrb[0].mxu0
        %v2942 = vadd.f32 %v2666, %v2941
        %v2943 = vpop.f32.mrb[0].mxu0
        %v2944 = vpop.f32.mrb[0].mxu0
        %v2945 = vadd.f32 %v2671, %v2944
        %v2946 = vpop.f32.mrb[0].mxu0
        %2947 = vmatprep.mubr.bf16.mxu0 0
        %2948 = vmatmul.mubr.bf16.gmra.mrb[0].mxu0 %v2834
        %v2949 = vpop.f32.mrb[0].mxu0
        %v2950 = vadd.f32 %v2676, %v2949
        %v2951 = vpop.f32.mrb[0].mxu0
        %v2952 = vpop.f32.mrb[0].mxu0
        %v2953 = vadd.f32 %v2681, %v2952
        %v2954 = vpop.f32.mrb[0].mxu0
        %2955 = vmatprep.mubr.bf16.mxu0 0
        %2956 = vmatmul.mubr.bf16.gmra.mrb[0].mxu0 %v2835
        %v2957 = vpop.f32.mrb[0].mxu0
        %v2958 = vadd.f32 %v2686, %v2957
        %v2959 = vpop.f32.mrb[0].mxu0
        %v2960 = vpop.f32.mrb[0].mxu0
        %v2961 = vadd.f32 %v2691, %v2960
        %v2962 = vpop.f32.mrb[0].mxu0
        %2963 = vmatprep.mubr.bf16.mxu0 0
        %2964 = vmatmul.mubr.bf16.gmra.mrb[0].mxu0 %v2836
        %v2965 = vpop.f32.mrb[0].mxu0
        %v2966 = vadd.f32 %v2696, %v2965
        %v2967 = vpop.f32.mrb[0].mxu0
        %v2968 = vpop.f32.mrb[0].mxu0
        %v2969 = vadd.f32 %v2701, %v2968
        %v2970 = vpop.f32.mrb[0].mxu0
        %2971 = vmatprep.mubr.bf16.mxu0 0
        %2972 = vmatmul.mubr.bf16.gmra.mrb[0].mxu0 %v2837
        %v2973 = vpop.f32.mrb[0].mxu0
        %v2974 = vadd.f32 %v2706, %v2973
        %v2975 = vpop.f32.mrb[0].mxu0
        %v2976 = vpop.f32.mrb[0].mxu0
        %v2977 = vadd.f32 %v2711, %v2976
        %v2978 = vpop.f32.mrb[0].mxu0
        %2979 = vmatprep.mubr.bf16.mxu0 0
        %2980 = vmatmul.mubr.bf16.gmra.mrb[0].mxu0 %v2838
        %v2981 = vpop.f32.mrb[0].mxu0
        %v2982 = vadd.f32 %v2716, %v2981
        %v2983 = vpop.f32.mrb[0].mxu0
        %v2984 = vpop.f32.mrb[0].mxu0
        %v2985 = vadd.f32 %v2721, %v2984
        %v2986 = vpop.f32.mrb[0].mxu0
        %2987 = vmatprep.mubr.bf16.mxu0 0
        %2988 = vmatmul.mubr.bf16.gmra.mrb[0].mxu0 %v2839
        %v2989 = vpop.f32.mrb[0].mxu0
        %v2990 = vadd.f32 %v2726, %v2989
        %v2991 = vpop.f32.mrb[0].mxu0
        %v2992 = vpop.f32.mrb[0].mxu0
        %v2993 = vadd.f32 %v2731, %v2992
        %v2994 = vpop.f32.mrb[0].mxu0
        %2995 = vmatprep.mubr.bf16.mxu0 0
        %2996 = vmatmul.mubr.bf16.gmra.mrb[0].mxu0 %v2840
        %v2997 = vpop.f32.mrb[0].mxu0
        %v2998 = vadd.f32 %v2736, %v2997
        %v2999 = vpop.f32.mrb[0].mxu0
        %v3000 = vpop.f32.mrb[0].mxu0
        %v3001 = vadd.f32 %v2741, %v3000
        %v3002 = vpop.f32.mrb[0].mxu0
        %3003 = vmatprep.mubr.bf16.mxu0 0
        %3004 = vmatmul.mubr.bf16.gmra.mrb[0].mxu0 %v2841
        %v3005 = vpop.f32.mrb[0].mxu0
        %v3006 = vadd.f32 %v2746, %v3005
        %v3007 = vpop.f32.mrb[0].mxu0
        %v3008 = vpop.f32.mrb[0].mxu0
        %v3009 = vadd.f32 %v2751, %v3008
        %v3010 = vpop.f32.mrb[0].mxu0
        %3011 = vmatprep.mubr.bf16.mxu0 0
        %3012 = vmatmul.mubr.bf16.gmra.mrb[0].mxu0 %v2842
        %v3013 = vpop.f32.mrb[0].mxu0
        %v3014 = vadd.f32 %v2756, %v3013
        %v3015 = vpop.f32.mrb[0].mxu0
        %v3016 = vpop.f32.mrb[0].mxu0
        %v3017 = vadd.f32 %v2761, %v3016
        %v3018 = vpop.f32.mrb[0].mxu0
        %3019 = vdwg.mxu0
        %v3020 = vsel %vm1796, %v2894, -inf
        %3021 = vmax.xlane.f32.xlu0 %v3020
        %v3022 = vpop.xlane.xlu0 %3021
        %v3023 = vsel %vm1796, %v2897, -inf
        %3024 = vmax.xlane.f32.xlu0 %v3023
        %v3025 = vpop.xlane.xlu0 %3024
        %v3026 = vsel %vm1796, %v2902, -inf
        %3027 = vmax.xlane.f32.xlu0 %v3026
        %v3028 = vpop.xlane.xlu0 %3027
        %v3029 = vsel %vm1796, %v2905, -inf
        %3030 = vmax.xlane.f32.xlu0 %v3029
        %v3031 = vpop.xlane.xlu0 %3030
        %v3032 = vsel %vm1796, %v2910, -inf
        %3033 = vmax.xlane.f32.xlu0 %v3032
        %v3034 = vpop.xlane.xlu0 %3033
        %v3035 = vsel %vm1796, %v2913, -inf
        %3036 = vmax.xlane.f32.xlu0 %v3035
        %v3037 = vpop.xlane.xlu0 %3036
        %v3038 = vsel %vm1796, %v2918, -inf
        %3039 = vmax.xlane.f32.xlu0 %v3038
        %v3040 = vpop.xlane.xlu0 %3039
        %v3041 = vsel %vm1796, %v2921, -inf
        %3042 = vmax.xlane.f32.xlu0 %v3041
        %v3043 = vpop.xlane.xlu0 %3042
        %v3044 = vsel %vm1796, %v2926, -inf
        %3045 = vmax.xlane.f32.xlu0 %v3044
        %v3046 = vpop.xlane.xlu0 %3045
        %v3047 = vsel %vm1796, %v2929, -inf
        %3048 = vmax.xlane.f32.xlu0 %v3047
        %v3049 = vpop.xlane.xlu0 %3048
        %v3050 = vsel %vm1796, %v2934, -inf
        %3051 = vmax.xlane.f32.xlu0 %v3050
        %v3052 = vpop.xlane.xlu0 %3051
        %v3053 = vsel %vm1796, %v2937, -inf
        %3054 = vmax.xlane.f32.xlu0 %v3053
        %v3055 = vpop.xlane.xlu0 %3054
        %v3056 = vsel %vm1796, %v2942, -inf
        %3057 = vmax.xlane.f32.xlu0 %v3056
        %v3058 = vpop.xlane.xlu0 %3057
        %v3059 = vsel %vm1796, %v2945, -inf
        %3060 = vmax.xlane.f32.xlu0 %v3059
        %v3061 = vpop.xlane.xlu0 %3060
        %v3062 = vsel %vm1796, %v2950, -inf
        %3063 = vmax.xlane.f32.xlu0 %v3062
        %v3064 = vpop.xlane.xlu0 %3063
        %v3065 = vsel %vm1796, %v2953, -inf
        %3066 = vmax.xlane.f32.xlu0 %v3065
        %v3067 = vpop.xlane.xlu0 %3066
        %v3068 = vsel %vm1796, %v2958, -inf
        %3069 = vmax.xlane.f32.xlu0 %v3068
        %v3070 = vpop.xlane.xlu0 %3069
        %v3071 = vsel %vm1796, %v2961, -inf
        %3072 = vmax.xlane.f32.xlu0 %v3071
        %v3073 = vpop.xlane.xlu0 %3072
        %v3074 = vsel %vm1796, %v2966, -inf
        %3075 = vmax.xlane.f32.xlu0 %v3074
        %v3076 = vpop.xlane.xlu0 %3075
        %v3077 = vsel %vm1796, %v2969, -inf
        %3078 = vmax.xlane.f32.xlu0 %v3077
        %v3079 = vpop.xlane.xlu0 %3078
        %v3080 = vsel %vm1796, %v2974, -inf
        %3081 = vmax.xlane.f32.xlu0 %v3080
        %v3082 = vpop.xlane.xlu0 %3081
        %v3083 = vsel %vm1796, %v2977, -inf
        %3084 = vmax.xlane.f32.xlu0 %v3083
        %v3085 = vpop.xlane.xlu0 %3084
        %v3086 = vsel %vm1796, %v2982, -inf
        %3087 = vmax.xlane.f32.xlu0 %v3086
        %v3088 = vpop.xlane.xlu0 %3087
        %v3089 = vsel %vm1796, %v2985, -inf
        %3090 = vmax.xlane.f32.xlu0 %v3089
        %v3091 = vpop.xlane.xlu0 %3090
        %v3092 = vsel %vm1796, %v2990, -inf
        %3093 = vmax.xlane.f32.xlu0 %v3092
        %v3094 = vpop.xlane.xlu0 %3093
        %v3095 = vsel %vm1796, %v2993, -inf
        %3096 = vmax.xlane.f32.xlu0 %v3095
        %v3097 = vpop.xlane.xlu0 %3096
        %v3098 = vsel %vm1796, %v2998, -inf
        %3099 = vmax.xlane.f32.xlu0 %v3098
        %v3100 = vpop.xlane.xlu0 %3099
        %v3101 = vsel %vm1796, %v3001, -inf
        %3102 = vmax.xlane.f32.xlu0 %v3101
        %v3103 = vpop.xlane.xlu0 %3102
        %v3104 = vsel %vm1796, %v3006, -inf
        %3105 = vmax.xlane.f32.xlu0 %v3104
        %v3106 = vpop.xlane.xlu0 %3105
        %v3107 = vsel %vm1796, %v3009, -inf
        %3108 = vmax.xlane.f32.xlu0 %v3107
        %v3109 = vpop.xlane.xlu0 %3108
        %v3110 = vsel %vm1796, %v3014, -inf
        %3111 = vmax.xlane.f32.xlu0 %v3110
        %v3112 = vpop.xlane.xlu0 %3111
        %v3113 = vsel %vm1796, %v3017, -inf
        %3114 = vmax.xlane.f32.xlu0 %v3113
        %v3115 = vpop.xlane.xlu0 %3114
        %3116 = vxpose.xlu0.b32.start [1/16] %v3022, 128
        %3117 = vxpose.xlu0.b32.cont [2/16] %v3025, 128
        %3118 = vxpose.xlu0.b32.cont [3/16] %v3028, 128
        %3119 = vxpose.xlu0.b32.cont [4/16] %v3031, 128
        %3120 = vxpose.xlu0.b32.cont [5/16] %v3034, 128
        %3121 = vxpose.xlu0.b32.cont [6/16] %v3037, 128
        %3122 = vxpose.xlu0.b32.cont [7/16] %v3040, 128
        %3123 = vxpose.xlu0.b32.cont [8/16] %v3043, 128
        %3124 = vxpose.xlu0.b32.cont [9/16] %v3046, 128
        %3125 = vxpose.xlu0.b32.cont [10/16] %v3049, 128
        %3126 = vxpose.xlu0.b32.cont [11/16] %v3052, 128
        %3127 = vxpose.xlu0.b32.cont [12/16] %v3055, 128
        %3128 = vxpose.xlu0.b32.cont [13/16] %v3058, 128
        %3129 = vxpose.xlu0.b32.cont [14/16] %v3061, 128
        %3130 = vxpose.xlu0.b32.cont [15/16] %v3064, 128
        %3131 = vxpose.xlu0.b32.end [16/16] %v3067, 128
        %v3132 = vpop.trf.xlu0
        %v3133 = vpop.trf.xlu0
        %v3134 = vpop.trf.xlu0
        %v3135 = vpop.trf.xlu0
        %v3136 = vpop.trf.xlu0
        %v3137 = vpop.trf.xlu0
        %v3138 = vpop.trf.xlu0
        %v3139 = vpop.trf.xlu0
        %v3140 = vpop.trf.xlu0
        %v3141 = vpop.trf.xlu0
        %v3142 = vpop.trf.xlu0
        %v3143 = vpop.trf.xlu0
        %v3144 = vpop.trf.xlu0
        %v3145 = vpop.trf.xlu0
        %v3146 = vpop.trf.xlu0
        %v3147 = vpop.trf.xlu0
        %3148 = vxpose.xlu0.b32.start [1/16] %v3070, 128
        %3149 = vxpose.xlu0.b32.cont [2/16] %v3073, 128
        %3150 = vxpose.xlu0.b32.cont [3/16] %v3076, 128
        %3151 = vxpose.xlu0.b32.cont [4/16] %v3079, 128
        %3152 = vxpose.xlu0.b32.cont [5/16] %v3082, 128
        %3153 = vxpose.xlu0.b32.cont [6/16] %v3085, 128
        %3154 = vxpose.xlu0.b32.cont [7/16] %v3088, 128
        %3155 = vxpose.xlu0.b32.cont [8/16] %v3091, 128
        %3156 = vxpose.xlu0.b32.cont [9/16] %v3094, 128
        %3157 = vxpose.xlu0.b32.cont [10/16] %v3097, 128
        %3158 = vxpose.xlu0.b32.cont [11/16] %v3100, 128
        %3159 = vxpose.xlu0.b32.cont [12/16] %v3103, 128
        %3160 = vxpose.xlu0.b32.cont [13/16] %v3106, 128
        %3161 = vxpose.xlu0.b32.cont [14/16] %v3109, 128
        %3162 = vxpose.xlu0.b32.cont [15/16] %v3112, 128
        %3163 = vxpose.xlu0.b32.end [16/16] %v3115, 128
        %v3164 = vpop.trf.xlu0
        %v3165 = vpop.trf.xlu0
        %v3166 = vpop.trf.xlu0
        %v3167 = vpop.trf.xlu0
        %v3168 = vpop.trf.xlu0
        %v3169 = vpop.trf.xlu0
        %v3170 = vpop.trf.xlu0
        %v3171 = vpop.trf.xlu0
        %v3172 = vpop.trf.xlu0
        %v3173 = vpop.trf.xlu0
        %v3174 = vpop.trf.xlu0
        %v3175 = vpop.trf.xlu0
        %v3176 = vpop.trf.xlu0
        %v3177 = vpop.trf.xlu0
        %v3178 = vpop.trf.xlu0
        %v3179 = vpop.trf.xlu0
        %v3180 = vld [vmem:[%s729] sm:$0x3]
        %v3181 = vld [vmem:[%s15] sm:$0xff]
        %v3182 = vld [vmem:[%s15 + $0x8] sm:$0xff]
        %v3183 = vld [vmem:[%s15 + $0x10] sm:$0xff]
        %v3184 = vld [vmem:[%s15 + $0x18] sm:$0xff]
        %v3185 = vld [vmem:[%s15 + $0x20] sm:$0xff]
        %v3186 = vld [vmem:[%s15 + $0x28] sm:$0xff]
        %v3187 = vld [vmem:[%s15 + $0x30] sm:$0xff]
        %v3188 = vld [vmem:[%s15 + $0x38] sm:$0xff]
        %v3189 = vld [vmem:[%s15 + $0x40] sm:$0xff]
        %v3190 = vld [vmem:[%s15 + $0x48] sm:$0xff]
        %v3191 = vld [vmem:[%s15 + $0x50] sm:$0xff]
        %v3192 = vld [vmem:[%s15 + $0x58] sm:$0xff]
        %v3193 = vld [vmem:[%s15 + $0x60] sm:$0xff]
        %v3194 = vld [vmem:[%s15 + $0x68] sm:$0xff]
        %v3195 = vld [vmem:[%s15 + $0x70] sm:$0xff]
        %v3196 = vld [vmem:[%s15 + $0x78] sm:$0xff]
        %v3197 = vld [vmem:[%s15 + $0x80] sm:$0xff]
        %v3198 = vld [vmem:[%s15 + $0x88] sm:$0xff]
        %v3199 = vld [vmem:[%s15 + $0x90] sm:$0xff]
        %v3200 = vld [vmem:[%s15 + $0x98] sm:$0xff]
        %v3201 = vld [vmem:[%s15 + $0xa0] sm:$0xff]
        %v3202 = vld [vmem:[%s15 + $0xa8] sm:$0xff]
        %v3203 = vld [vmem:[%s15 + $0xb0] sm:$0xff]
        %v3204 = vld [vmem:[%s15 + $0xb8] sm:$0xff]
        %v3205 = vld [vmem:[%s15 + $0xc0] sm:$0xff]
        %v3206 = vld [vmem:[%s15 + $0xc8] sm:$0xff]
        %v3207 = vld [vmem:[%s15 + $0xd0] sm:$0xff]
        %v3208 = vld [vmem:[%s15 + $0xd8] sm:$0xff]
        %v3209 = vld [vmem:[%s15 + $0xe0] sm:$0xff]
        %v3210 = vld [vmem:[%s15 + $0xe8] sm:$0xff]
        %v3211 = vld [vmem:[%s15 + $0xf0] sm:$0xff]
        %v3212 = vld [vmem:[%s15 + $0xf8] sm:$0xff]
        %v3213 = vld [vmem:[%s16] sm:$0x3]
        %v3216 = vunpack.c.l.s4 1966171168
        %v3217 = vunpack.c.0.s8 %v3216
        %v3218 = vlaneseq
        %v3219 = vshrl.u32 %v3218, 7
        %v3220 = vsub.s32 %v3217, %v3219
        %v3221 = vrot.slane %v3180, %v3220
        %v3222 = vcombine.high %v3221, %v3221
        %v3224 = vunpack.c.l.s4 1966171168
        %v3225 = vunpack.c.0.s8 %v3224
        %v3226 = vlaneseq
        %v3227 = vshrl.u32 %v3226, 7
        %v3228 = vsub.s32 %v3225, %v3227
        %v3229 = vrot.slane %v3221, %v3228
        %v3231 = vunpack.c.l.s4 1966171168
        %v3232 = vunpack.c.0.s8 %v3231
        %v3233 = vlaneseq
        %v3234 = vshrl.u32 %v3233, 7
        %v3235 = vsub.s32 %v3232, %v3234
        %v3236 = vrot.slane %v3222, %v3235
        %v3271 = vunpack.c.l.b16 %v3181
        %v3272 = vunpack.c.h.b16 %v3181
        %v3273 = vunpack.c.l.b16 %v3182
        %v3274 = vunpack.c.h.b16 %v3182
        %v3275 = vunpack.c.l.b16 %v3183
        %v3276 = vunpack.c.h.b16 %v3183
        %v3277 = vunpack.c.l.b16 %v3184
        %v3278 = vunpack.c.h.b16 %v3184
        %v3279 = vunpack.c.l.b16 %v3185
        %v3280 = vunpack.c.h.b16 %v3185
        %v3281 = vunpack.c.l.b16 %v3186
        %v3282 = vunpack.c.h.b16 %v3186
        %v3283 = vunpack.c.l.b16 %v3187
        %v3284 = vunpack.c.h.b16 %v3187
        %v3285 = vunpack.c.l.b16 %v3188
        %v3286 = vunpack.c.h.b16 %v3188
        %v3287 = vunpack.c.l.b16 %v3189
        %v3288 = vunpack.c.h.b16 %v3189
        %v3289 = vunpack.c.l.b16 %v3190
        %v3290 = vunpack.c.h.b16 %v3190
        %v3291 = vunpack.c.l.b16 %v3191
        %v3292 = vunpack.c.h.b16 %v3191
        %v3293 = vunpack.c.l.b16 %v3192
        %v3294 = vunpack.c.h.b16 %v3192
        %v3295 = vunpack.c.l.b16 %v3193
        %v3296 = vunpack.c.h.b16 %v3193
        %v3297 = vunpack.c.l.b16 %v3194
        %v3298 = vunpack.c.h.b16 %v3194
        %v3299 = vunpack.c.l.b16 %v3195
        %v3300 = vunpack.c.h.b16 %v3195
        %v3301 = vunpack.c.l.b16 %v3196
        %v3302 = vunpack.c.h.b16 %v3196
        %v3303 = vunpack.c.l.b16 %v3197
        %v3304 = vunpack.c.h.b16 %v3197
        %v3305 = vunpack.c.l.b16 %v3198
        %v3306 = vunpack.c.h.b16 %v3198
        %v3307 = vunpack.c.l.b16 %v3199
        %v3308 = vunpack.c.h.b16 %v3199
        %v3309 = vunpack.c.l.b16 %v3200
        %v3310 = vunpack.c.h.b16 %v3200
        %v3311 = vunpack.c.l.b16 %v3201
        %v3312 = vunpack.c.h.b16 %v3201
        %v3313 = vunpack.c.l.b16 %v3202
        %v3314 = vunpack.c.h.b16 %v3202
        %v3315 = vunpack.c.l.b16 %v3203
        %v3316 = vunpack.c.h.b16 %v3203
        %v3317 = vunpack.c.l.b16 %v3204
        %v3318 = vunpack.c.h.b16 %v3204
        %v3319 = vunpack.c.l.b16 %v3205
        %v3320 = vunpack.c.h.b16 %v3205
        %v3321 = vunpack.c.l.b16 %v3206
        %v3322 = vunpack.c.h.b16 %v3206
        %v3323 = vunpack.c.l.b16 %v3207
        %v3324 = vunpack.c.h.b16 %v3207
        %v3325 = vunpack.c.l.b16 %v3208
        %v3326 = vunpack.c.h.b16 %v3208
        %v3327 = vunpack.c.l.b16 %v3209
        %v3328 = vunpack.c.h.b16 %v3209
        %v3329 = vunpack.c.l.b16 %v3210
        %v3330 = vunpack.c.h.b16 %v3210
        %v3331 = vunpack.c.l.b16 %v3211
        %v3332 = vunpack.c.h.b16 %v3211
        %v3333 = vunpack.c.l.b16 %v3212
        %v3334 = vunpack.c.h.b16 %v3212
        %v3335 = vpack.c.b16 %v3273, %v3271
        %v3336 = vpack.c.b16 %v3274, %v3272
        %v3337 = vpack.c.b16 %v3277, %v3275
        %v3338 = vpack.c.b16 %v3278, %v3276
        %v3339 = vpack.c.b16 %v3281, %v3279
        %v3340 = vpack.c.b16 %v3282, %v3280
        %v3341 = vpack.c.b16 %v3285, %v3283
        %v3342 = vpack.c.b16 %v3286, %v3284
        %v3343 = vpack.c.b16 %v3289, %v3287
        %v3344 = vpack.c.b16 %v3290, %v3288
        %v3345 = vpack.c.b16 %v3293, %v3291
        %v3346 = vpack.c.b16 %v3294, %v3292
        %v3347 = vpack.c.b16 %v3297, %v3295
        %v3348 = vpack.c.b16 %v3298, %v3296
        %v3349 = vpack.c.b16 %v3301, %v3299
        %v3350 = vpack.c.b16 %v3302, %v3300
        %v3351 = vpack.c.b16 %v3305, %v3303
        %v3352 = vpack.c.b16 %v3306, %v3304
        %v3353 = vpack.c.b16 %v3309, %v3307
        %v3354 = vpack.c.b16 %v3310, %v3308
        %v3355 = vpack.c.b16 %v3313, %v3311
        %v3356 = vpack.c.b16 %v3314, %v3312
        %v3357 = vpack.c.b16 %v3317, %v3315
        %v3358 = vpack.c.b16 %v3318, %v3316
        %v3359 = vpack.c.b16 %v3321, %v3319
        %v3360 = vpack.c.b16 %v3322, %v3320
        %v3361 = vpack.c.b16 %v3325, %v3323
        %v3362 = vpack.c.b16 %v3326, %v3324
        %v3363 = vpack.c.b16 %v3329, %v3327
        %v3364 = vpack.c.b16 %v3330, %v3328
        %v3365 = vpack.c.b16 %v3333, %v3331
        %v3366 = vpack.c.b16 %v3334, %v3332
        %v3400 = vlaneseq
        %v3401 = vshrl.u32 %v3400, 7
        %v3402 = vsub.s32 0, %v3401
        %v3403 = vrot.slane %v3213, %v3402
        %v3404 = vlaneseq
        %v3405 = vshrl.u32 %v3404, 7
        %v3406 = vsub.s32 1, %v3405
        %v3407 = vrot.slane %v3213, %v3406
        %3410 = vmatprep.subr.bf16.mxu0 %v3336
        %3411 = vmatpush1.bf16.msra.mxu0 %v3335
        %3412 = vmatprep.subr.bf16.mxu0 %v3338
        %3413 = vmatpush1.bf16.msra.mxu0 %v3337
        %3414 = vmatprep.subr.bf16.mxu0 %v3340
        %3415 = vmatpush1.bf16.msra.mxu0 %v3339
        %3416 = vmatprep.subr.bf16.mxu0 %v3342
        %3417 = vmatpush1.bf16.msra.mxu0 %v3341
        %3418 = vmatprep.subr.bf16.mxu0 %v3344
        %3419 = vmatpush1.bf16.msra.mxu0 %v3343
        %3420 = vmatprep.subr.bf16.mxu0 %v3346
        %3421 = vmatpush1.bf16.msra.mxu0 %v3345
        %3422 = vmatprep.subr.bf16.mxu0 %v3348
        %3423 = vmatpush1.bf16.msra.mxu0 %v3347
        %3424 = vmatprep.subr.bf16.mxu0 %v3350
        %3425 = vmatpush1.bf16.msra.mxu0 %v3349
        %3426 = vmatprep.subr.bf16.mxu0 %v3352
        %3427 = vmatpush1.bf16.msra.mxu0 %v3351
        %3428 = vmatprep.subr.bf16.mxu0 %v3354
        %3429 = vmatpush1.bf16.msra.mxu0 %v3353
        %3430 = vmatprep.subr.bf16.mxu0 %v3356
        %3431 = vmatpush1.bf16.msra.mxu0 %v3355
        %3432 = vmatprep.subr.bf16.mxu0 %v3358
        %3433 = vmatpush1.bf16.msra.mxu0 %v3357
        %3434 = vmatprep.subr.bf16.mxu0 %v3360
        %3435 = vmatpush1.bf16.msra.mxu0 %v3359
        %3436 = vmatprep.subr.bf16.mxu0 %v3362
        %3437 = vmatpush1.bf16.msra.mxu0 %v3361
        %3438 = vmatprep.subr.bf16.mxu0 %v3364
        %3439 = vmatpush1.bf16.msra.mxu0 %v3363
        %3440 = vmatprep.subr.bf16.mxu0 %v3366
        %3441 = vmatpush1.bf16.msra.mxu0 %v3365
        %3442 = vmatprep.mubr.bf16.mxu0 %v3236
        %3443 = vmatmul.mubr.bf16.gmra.mrb[0].mxu0 %v3229
        %v3444 = vpop.f32.mrb[0].mxu0
        %v3445 = vadd.f32 %v3403, %v3444
        %v3446 = vpop.f32.mrb[0].mxu0
        %v3447 = vadd.f32 %v3407, %v3446
        %v3448 = vpop.f32.mrb[0].mxu0
        %v3449 = vpop.f32.mrb[0].mxu0
        %3450 = vdwg.mxu0
        %v3451 = vmax.f32 %v3445, 0.0
        %v3452 = vmax.f32 %v3447, 0.0
        %v3453 = vpack.c.bf16 %v1909, %v1909
        %v3454 = vpack.c.bf16 %v1941, %v1941
        %v3455 = vld [vmem:[%s17] sm:$0xff]
        %v3456 = vld [vmem:[%s17 + $0x8] sm:$0xff]
        %v3457 = vld [vmem:[%s17 + $0x10] sm:$0xff]
        %v3458 = vld [vmem:[%s17 + $0x18] sm:$0xff]
        %v3459 = vld [vmem:[%s17 + $0x20] sm:$0xff]
        %v3460 = vld [vmem:[%s17 + $0x28] sm:$0xff]
        %v3461 = vld [vmem:[%s17 + $0x30] sm:$0xff]
        %v3462 = vld [vmem:[%s17 + $0x38] sm:$0xff]
        %v3463 = vld [vmem:[%s17 + $0x40] sm:$0xff]
        %v3464 = vld [vmem:[%s17 + $0x48] sm:$0xff]
        %v3465 = vld [vmem:[%s17 + $0x50] sm:$0xff]
        %v3466 = vld [vmem:[%s17 + $0x58] sm:$0xff]
        %v3467 = vld [vmem:[%s17 + $0x60] sm:$0xff]
        %v3468 = vld [vmem:[%s17 + $0x68] sm:$0xff]
        %v3469 = vld [vmem:[%s17 + $0x70] sm:$0xff]
        %v3470 = vld [vmem:[%s17 + $0x78] sm:$0xff]
        %v3471 = vld [vmem:[%s17 + $0x80] sm:$0xff]
        %v3472 = vld [vmem:[%s17 + $0x88] sm:$0xff]
        %v3473 = vld [vmem:[%s17 + $0x90] sm:$0xff]
        %v3474 = vld [vmem:[%s17 + $0x98] sm:$0xff]
        %v3475 = vld [vmem:[%s17 + $0xa0] sm:$0xff]
        %v3476 = vld [vmem:[%s17 + $0xa8] sm:$0xff]
        %v3477 = vld [vmem:[%s17 + $0xb0] sm:$0xff]
        %v3478 = vld [vmem:[%s17 + $0xb8] sm:$0xff]
        %v3479 = vld [vmem:[%s17 + $0xc0] sm:$0xff]
        %v3480 = vld [vmem:[%s17 + $0xc8] sm:$0xff]
        %v3481 = vld [vmem:[%s17 + $0xd0] sm:$0xff]
        %v3482 = vld [vmem:[%s17 + $0xd8] sm:$0xff]
        %v3483 = vld [vmem:[%s17 + $0xe0] sm:$0xff]
        %v3484 = vld [vmem:[%s17 + $0xe8] sm:$0xff]
        %v3485 = vld [vmem:[%s17 + $0xf0] sm:$0xff]
        %v3486 = vld [vmem:[%s17 + $0xf8] sm:$0xff]
        %v3487 = vpack.c.bf16 %v3132, %v3132
        %v3488 = vpack.c.bf16 %v3164, %v3164
        %v3489 = vld [vmem:[%s18] sm:$0xff]
        %v3490 = vld [vmem:[%s18 + $0x8] sm:$0xff]
        %v3491 = vld [vmem:[%s18 + $0x10] sm:$0xff]
        %v3492 = vld [vmem:[%s18 + $0x18] sm:$0xff]
        %v3493 = vld [vmem:[%s18 + $0x20] sm:$0xff]
        %v3494 = vld [vmem:[%s18 + $0x28] sm:$0xff]
        %v3495 = vld [vmem:[%s18 + $0x30] sm:$0xff]
        %v3496 = vld [vmem:[%s18 + $0x38] sm:$0xff]
        %v3497 = vld [vmem:[%s18 + $0x40] sm:$0xff]
        %v3498 = vld [vmem:[%s18 + $0x48] sm:$0xff]
        %v3499 = vld [vmem:[%s18 + $0x50] sm:$0xff]
        %v3500 = vld [vmem:[%s18 + $0x58] sm:$0xff]
        %v3501 = vld [vmem:[%s18 + $0x60] sm:$0xff]
        %v3502 = vld [vmem:[%s18 + $0x68] sm:$0xff]
        %v3503 = vld [vmem:[%s18 + $0x70] sm:$0xff]
        %v3504 = vld [vmem:[%s18 + $0x78] sm:$0xff]
        %v3505 = vld [vmem:[%s18 + $0x80] sm:$0xff]
        %v3506 = vld [vmem:[%s18 + $0x88] sm:$0xff]
        %v3507 = vld [vmem:[%s18 + $0x90] sm:$0xff]
        %v3508 = vld [vmem:[%s18 + $0x98] sm:$0xff]
        %v3509 = vld [vmem:[%s18 + $0xa0] sm:$0xff]
        %v3510 = vld [vmem:[%s18 + $0xa8] sm:$0xff]
        %v3511 = vld [vmem:[%s18 + $0xb0] sm:$0xff]
        %v3512 = vld [vmem:[%s18 + $0xb8] sm:$0xff]
        %v3513 = vld [vmem:[%s18 + $0xc0] sm:$0xff]
        %v3514 = vld [vmem:[%s18 + $0xc8] sm:$0xff]
        %v3515 = vld [vmem:[%s18 + $0xd0] sm:$0xff]
        %v3516 = vld [vmem:[%s18 + $0xd8] sm:$0xff]
        %v3517 = vld [vmem:[%s18 + $0xe0] sm:$0xff]
        %v3518 = vld [vmem:[%s18 + $0xe8] sm:$0xff]
        %v3519 = vld [vmem:[%s18 + $0xf0] sm:$0xff]
        %v3520 = vld [vmem:[%s18 + $0xf8] sm:$0xff]
        %v3553 = vunpack.c.l.b16 %v3489
        %v3554 = vunpack.c.h.b16 %v3489
        %v3555 = vunpack.c.l.b16 %v3490
        %v3556 = vunpack.c.h.b16 %v3490
        %v3557 = vunpack.c.l.b16 %v3491
        %v3558 = vunpack.c.h.b16 %v3491
        %v3559 = vunpack.c.l.b16 %v3492
        %v3560 = vunpack.c.h.b16 %v3492
        %v3561 = vunpack.c.l.b16 %v3493
        %v3562 = vunpack.c.h.b16 %v3493
        %v3563 = vunpack.c.l.b16 %v3494
        %v3564 = vunpack.c.h.b16 %v3494
        %v3565 = vunpack.c.l.b16 %v3495
        %v3566 = vunpack.c.h.b16 %v3495
        %v3567 = vunpack.c.l.b16 %v3496
        %v3568 = vunpack.c.h.b16 %v3496
        %v3569 = vunpack.c.l.b16 %v3497
        %v3570 = vunpack.c.h.b16 %v3497
        %v3571 = vunpack.c.l.b16 %v3498
        %v3572 = vunpack.c.h.b16 %v3498
        %v3573 = vunpack.c.l.b16 %v3499
        %v3574 = vunpack.c.h.b16 %v3499
        %v3575 = vunpack.c.l.b16 %v3500
        %v3576 = vunpack.c.h.b16 %v3500
        %v3577 = vunpack.c.l.b16 %v3501
        %v3578 = vunpack.c.h.b16 %v3501
        %v3579 = vunpack.c.l.b16 %v3502
        %v3580 = vunpack.c.h.b16 %v3502
        %v3581 = vunpack.c.l.b16 %v3503
        %v3582 = vunpack.c.h.b16 %v3503
        %v3583 = vunpack.c.l.b16 %v3504
        %v3584 = vunpack.c.h.b16 %v3504
        %v3585 = vunpack.c.l.b16 %v3505
        %v3586 = vunpack.c.h.b16 %v3505
        %v3587 = vunpack.c.l.b16 %v3506
        %v3588 = vunpack.c.h.b16 %v3506
        %v3589 = vunpack.c.l.b16 %v3507
        %v3590 = vunpack.c.h.b16 %v3507
        %v3591 = vunpack.c.l.b16 %v3508
        %v3592 = vunpack.c.h.b16 %v3508
        %v3593 = vunpack.c.l.b16 %v3509
        %v3594 = vunpack.c.h.b16 %v3509
        %v3595 = vunpack.c.l.b16 %v3510
        %v3596 = vunpack.c.h.b16 %v3510
        %v3597 = vunpack.c.l.b16 %v3511
        %v3598 = vunpack.c.h.b16 %v3511
        %v3599 = vunpack.c.l.b16 %v3512
        %v3600 = vunpack.c.h.b16 %v3512
        %v3601 = vunpack.c.l.b16 %v3513
        %v3602 = vunpack.c.h.b16 %v3513
        %v3603 = vunpack.c.l.b16 %v3514
        %v3604 = vunpack.c.h.b16 %v3514
        %v3605 = vunpack.c.l.b16 %v3515
        %v3606 = vunpack.c.h.b16 %v3515
        %v3607 = vunpack.c.l.b16 %v3516
        %v3608 = vunpack.c.h.b16 %v3516
        %v3609 = vunpack.c.l.b16 %v3517
        %v3610 = vunpack.c.h.b16 %v3517
        %v3611 = vunpack.c.l.b16 %v3518
        %v3612 = vunpack.c.h.b16 %v3518
        %v3613 = vunpack.c.l.b16 %v3519
        %v3614 = vunpack.c.h.b16 %v3519
        %v3615 = vunpack.c.l.b16 %v3520
        %v3616 = vunpack.c.h.b16 %v3520
        %v3617 = vpack.c.b16 %v3555, %v3553
        %v3618 = vpack.c.b16 %v3556, %v3554
        %v3619 = vpack.c.b16 %v3559, %v3557
        %v3620 = vpack.c.b16 %v3560, %v3558
        %v3621 = vpack.c.b16 %v3563, %v3561
        %v3622 = vpack.c.b16 %v3564, %v3562
        %v3623 = vpack.c.b16 %v3567, %v3565
        %v3624 = vpack.c.b16 %v3568, %v3566
        %v3625 = vpack.c.b16 %v3571, %v3569
        %v3626 = vpack.c.b16 %v3572, %v3570
        %v3627 = vpack.c.b16 %v3575, %v3573
        %v3628 = vpack.c.b16 %v3576, %v3574
        %v3629 = vpack.c.b16 %v3579, %v3577
        %v3630 = vpack.c.b16 %v3580, %v3578
        %v3631 = vpack.c.b16 %v3583, %v3581
        %v3632 = vpack.c.b16 %v3584, %v3582
        %v3633 = vpack.c.b16 %v3587, %v3585
        %v3634 = vpack.c.b16 %v3588, %v3586
        %v3635 = vpack.c.b16 %v3591, %v3589
        %v3636 = vpack.c.b16 %v3592, %v3590
        %v3637 = vpack.c.b16 %v3595, %v3593
        %v3638 = vpack.c.b16 %v3596, %v3594
        %v3639 = vpack.c.b16 %v3599, %v3597
        %v3640 = vpack.c.b16 %v3600, %v3598
        %v3641 = vpack.c.b16 %v3603, %v3601
        %v3642 = vpack.c.b16 %v3604, %v3602
        %v3643 = vpack.c.b16 %v3607, %v3605
        %v3644 = vpack.c.b16 %v3608, %v3606
        %v3645 = vpack.c.b16 %v3611, %v3609
        %v3646 = vpack.c.b16 %v3612, %v3610
        %v3647 = vpack.c.b16 %v3615, %v3613
        %v3648 = vpack.c.b16 %v3616, %v3614
        %3681 = vmatprep.subr.bf16.mxu0 %v3618
        %3682 = vmatpush1.bf16.msra.mxu0 %v3617
        %3683 = vmatprep.subr.bf16.mxu0 %v3620
        %3684 = vmatpush1.bf16.msra.mxu0 %v3619
        %3685 = vmatprep.subr.bf16.mxu0 %v3622
        %3686 = vmatpush1.bf16.msra.mxu0 %v3621
        %3687 = vmatprep.subr.bf16.mxu0 %v3624
        %3688 = vmatpush1.bf16.msra.mxu0 %v3623
        %3689 = vmatprep.subr.bf16.mxu0 %v3626
        %3690 = vmatpush1.bf16.msra.mxu0 %v3625
        %3691 = vmatprep.subr.bf16.mxu0 %v3628
        %3692 = vmatpush1.bf16.msra.mxu0 %v3627
        %3693 = vmatprep.subr.bf16.mxu0 %v3630
        %3694 = vmatpush1.bf16.msra.mxu0 %v3629
        %3695 = vmatprep.subr.bf16.mxu0 %v3632
        %3696 = vmatpush1.bf16.msra.mxu0 %v3631
        %3697 = vmatprep.subr.bf16.mxu0 %v3634
        %3698 = vmatpush1.bf16.msra.mxu0 %v3633
        %3699 = vmatprep.subr.bf16.mxu0 %v3636
        %3700 = vmatpush1.bf16.msra.mxu0 %v3635
        %3701 = vmatprep.subr.bf16.mxu0 %v3638
        %3702 = vmatpush1.bf16.msra.mxu0 %v3637
        %3703 = vmatprep.subr.bf16.mxu0 %v3640
        %3704 = vmatpush1.bf16.msra.mxu0 %v3639
        %3705 = vmatprep.subr.bf16.mxu0 %v3642
        %3706 = vmatpush1.bf16.msra.mxu0 %v3641
        %3707 = vmatprep.subr.bf16.mxu0 %v3644
        %3708 = vmatpush1.bf16.msra.mxu0 %v3643
        %3709 = vmatprep.subr.bf16.mxu0 %v3646
        %3710 = vmatpush1.bf16.msra.mxu0 %v3645
        %3711 = vmatprep.subr.bf16.mxu0 %v3648
        %3712 = vmatpush1.bf16.msra.mxu0 %v3647
        %3713 = vmatprep.mubr.bf16.mxu0 %v3488
        %3714 = vmatmul.mubr.bf16.gmra.mrb[0].mxu0 %v3487
        %v3715 = vpop.f32.mrb[0].mxu0
        %v3716 = vadd.f32 0.0, %v3715
        %v3717 = vpop.f32.mrb[0].mxu0
        %v3718 = vadd.f32 0.0, %v3717
        %v3719 = vpop.f32.mrb[0].mxu0
        %v3720 = vpop.f32.mrb[0].mxu0
        %3721 = vdwg.mxu0
        %v3754 = vunpack.c.l.b16 %v3455
        %v3755 = vunpack.c.h.b16 %v3455
        %v3756 = vunpack.c.l.b16 %v3456
        %v3757 = vunpack.c.h.b16 %v3456
        %v3758 = vunpack.c.l.b16 %v3457
        %v3759 = vunpack.c.h.b16 %v3457
        %v3760 = vunpack.c.l.b16 %v3458
        %v3761 = vunpack.c.h.b16 %v3458
        %v3762 = vunpack.c.l.b16 %v3459
        %v3763 = vunpack.c.h.b16 %v3459
        %v3764 = vunpack.c.l.b16 %v3460
        %v3765 = vunpack.c.h.b16 %v3460
        %v3766 = vunpack.c.l.b16 %v3461
        %v3767 = vunpack.c.h.b16 %v3461
        %v3768 = vunpack.c.l.b16 %v3462
        %v3769 = vunpack.c.h.b16 %v3462
        %v3770 = vunpack.c.l.b16 %v3463
        %v3771 = vunpack.c.h.b16 %v3463
        %v3772 = vunpack.c.l.b16 %v3464
        %v3773 = vunpack.c.h.b16 %v3464
        %v3774 = vunpack.c.l.b16 %v3465
        %v3775 = vunpack.c.h.b16 %v3465
        %v3776 = vunpack.c.l.b16 %v3466
        %v3777 = vunpack.c.h.b16 %v3466
        %v3778 = vunpack.c.l.b16 %v3467
        %v3779 = vunpack.c.h.b16 %v3467
        %v3780 = vunpack.c.l.b16 %v3468
        %v3781 = vunpack.c.h.b16 %v3468
        %v3782 = vunpack.c.l.b16 %v3469
        %v3783 = vunpack.c.h.b16 %v3469
        %v3784 = vunpack.c.l.b16 %v3470
        %v3785 = vunpack.c.h.b16 %v3470
        %v3786 = vunpack.c.l.b16 %v3471
        %v3787 = vunpack.c.h.b16 %v3471
        %v3788 = vunpack.c.l.b16 %v3472
        %v3789 = vunpack.c.h.b16 %v3472
        %v3790 = vunpack.c.l.b16 %v3473
        %v3791 = vunpack.c.h.b16 %v3473
        %v3792 = vunpack.c.l.b16 %v3474
        %v3793 = vunpack.c.h.b16 %v3474
        %v3794 = vunpack.c.l.b16 %v3475
        %v3795 = vunpack.c.h.b16 %v3475
        %v3796 = vunpack.c.l.b16 %v3476
        %v3797 = vunpack.c.h.b16 %v3476
        %v3798 = vunpack.c.l.b16 %v3477
        %v3799 = vunpack.c.h.b16 %v3477
        %v3800 = vunpack.c.l.b16 %v3478
        %v3801 = vunpack.c.h.b16 %v3478
        %v3802 = vunpack.c.l.b16 %v3479
        %v3803 = vunpack.c.h.b16 %v3479
        %v3804 = vunpack.c.l.b16 %v3480
        %v3805 = vunpack.c.h.b16 %v3480
        %v3806 = vunpack.c.l.b16 %v3481
        %v3807 = vunpack.c.h.b16 %v3481
        %v3808 = vunpack.c.l.b16 %v3482
        %v3809 = vunpack.c.h.b16 %v3482
        %v3810 = vunpack.c.l.b16 %v3483
        %v3811 = vunpack.c.h.b16 %v3483
        %v3812 = vunpack.c.l.b16 %v3484
        %v3813 = vunpack.c.h.b16 %v3484
        %v3814 = vunpack.c.l.b16 %v3485
        %v3815 = vunpack.c.h.b16 %v3485
        %v3816 = vunpack.c.l.b16 %v3486
        %v3817 = vunpack.c.h.b16 %v3486
        %v3818 = vpack.c.b16 %v3756, %v3754
        %v3819 = vpack.c.b16 %v3757, %v3755
        %v3820 = vpack.c.b16 %v3760, %v3758
        %v3821 = vpack.c.b16 %v3761, %v3759
        %v3822 = vpack.c.b16 %v3764, %v3762
        %v3823 = vpack.c.b16 %v3765, %v3763
        %v3824 = vpack.c.b16 %v3768, %v3766
        %v3825 = vpack.c.b16 %v3769, %v3767
        %v3826 = vpack.c.b16 %v3772, %v3770
        %v3827 = vpack.c.b16 %v3773, %v3771
        %v3828 = vpack.c.b16 %v3776, %v3774
        %v3829 = vpack.c.b16 %v3777, %v3775
        %v3830 = vpack.c.b16 %v3780, %v3778
        %v3831 = vpack.c.b16 %v3781, %v3779
        %v3832 = vpack.c.b16 %v3784, %v3782
        %v3833 = vpack.c.b16 %v3785, %v3783
        %v3834 = vpack.c.b16 %v3788, %v3786
        %v3835 = vpack.c.b16 %v3789, %v3787
        %v3836 = vpack.c.b16 %v3792, %v3790
        %v3837 = vpack.c.b16 %v3793, %v3791
        %v3838 = vpack.c.b16 %v3796, %v3794
        %v3839 = vpack.c.b16 %v3797, %v3795
        %v3840 = vpack.c.b16 %v3800, %v3798
        %v3841 = vpack.c.b16 %v3801, %v3799
        %v3842 = vpack.c.b16 %v3804, %v3802
        %v3843 = vpack.c.b16 %v3805, %v3803
        %v3844 = vpack.c.b16 %v3808, %v3806
        %v3845 = vpack.c.b16 %v3809, %v3807
        %v3846 = vpack.c.b16 %v3812, %v3810
        %v3847 = vpack.c.b16 %v3813, %v3811
        %v3848 = vpack.c.b16 %v3816, %v3814
        %v3849 = vpack.c.b16 %v3817, %v3815
        %3882 = vmatprep.subr.bf16.mxu0 %v3819
        %3883 = vmatpush1.bf16.msra.mxu0 %v3818
        %3884 = vmatprep.subr.bf16.mxu0 %v3821
        %3885 = vmatpush1.bf16.msra.mxu0 %v3820
        %3886 = vmatprep.subr.bf16.mxu0 %v3823
        %3887 = vmatpush1.bf16.msra.mxu0 %v3822
        %3888 = vmatprep.subr.bf16.mxu0 %v3825
        %3889 = vmatpush1.bf16.msra.mxu0 %v3824
        %3890 = vmatprep.subr.bf16.mxu0 %v3827
        %3891 = vmatpush1.bf16.msra.mxu0 %v3826
        %3892 = vmatprep.subr.bf16.mxu0 %v3829
        %3893 = vmatpush1.bf16.msra.mxu0 %v3828
        %3894 = vmatprep.subr.bf16.mxu0 %v3831
        %3895 = vmatpush1.bf16.msra.mxu0 %v3830
        %3896 = vmatprep.subr.bf16.mxu0 %v3833
        %3897 = vmatpush1.bf16.msra.mxu0 %v3832
        %3898 = vmatprep.subr.bf16.mxu0 %v3835
        %3899 = vmatpush1.bf16.msra.mxu0 %v3834
        %3900 = vmatprep.subr.bf16.mxu0 %v3837
        %3901 = vmatpush1.bf16.msra.mxu0 %v3836
        %3902 = vmatprep.subr.bf16.mxu0 %v3839
        %3903 = vmatpush1.bf16.msra.mxu0 %v3838
        %3904 = vmatprep.subr.bf16.mxu0 %v3841
        %3905 = vmatpush1.bf16.msra.mxu0 %v3840
        %3906 = vmatprep.subr.bf16.mxu0 %v3843
        %3907 = vmatpush1.bf16.msra.mxu0 %v3842
        %3908 = vmatprep.subr.bf16.mxu0 %v3845
        %3909 = vmatpush1.bf16.msra.mxu0 %v3844
        %3910 = vmatprep.subr.bf16.mxu0 %v3847
        %3911 = vmatpush1.bf16.msra.mxu0 %v3846
        %3912 = vmatprep.subr.bf16.mxu0 %v3849
        %3913 = vmatpush1.bf16.msra.mxu0 %v3848
        %3914 = vmatprep.mubr.bf16.mxu0 %v3454
        %3915 = vmatmul.mubr.bf16.gmra.mrb[0].mxu0 %v3453
        %v3916 = vpop.f32.mrb[0].mxu0
        %v3917 = vadd.f32 %v3716, %v3916
        %v3918 = vpop.f32.mrb[0].mxu0
        %v3919 = vadd.f32 %v3718, %v3918
        %v3920 = vpop.f32.mrb[0].mxu0
        %v3921 = vpop.f32.mrb[0].mxu0
        %3922 = vdwg.mxu0
        %v3923 = vpack.c.bf16 %v3451, %v3451
        %v3924 = vpack.c.bf16 %v3452, %v3452
        %v3925 = vld [vmem:[%s19] sm:$0xff]
        %v3926 = vld [vmem:[%s19 + $0x8] sm:$0xff]
        %v3927 = vld [vmem:[%s19 + $0x10] sm:$0xff]
        %v3928 = vld [vmem:[%s19 + $0x18] sm:$0xff]
        %v3929 = vld [vmem:[%s19 + $0x20] sm:$0xff]
        %v3930 = vld [vmem:[%s19 + $0x28] sm:$0xff]
        %v3931 = vld [vmem:[%s19 + $0x30] sm:$0xff]
        %v3932 = vld [vmem:[%s19 + $0x38] sm:$0xff]
        %v3933 = vld [vmem:[%s19 + $0x40] sm:$0xff]
        %v3934 = vld [vmem:[%s19 + $0x48] sm:$0xff]
        %v3935 = vld [vmem:[%s19 + $0x50] sm:$0xff]
        %v3936 = vld [vmem:[%s19 + $0x58] sm:$0xff]
        %v3937 = vld [vmem:[%s19 + $0x60] sm:$0xff]
        %v3938 = vld [vmem:[%s19 + $0x68] sm:$0xff]
        %v3939 = vld [vmem:[%s19 + $0x70] sm:$0xff]
        %v3940 = vld [vmem:[%s19 + $0x78] sm:$0xff]
        %v3941 = vld [vmem:[%s19 + $0x80] sm:$0xff]
        %v3942 = vld [vmem:[%s19 + $0x88] sm:$0xff]
        %v3943 = vld [vmem:[%s19 + $0x90] sm:$0xff]
        %v3944 = vld [vmem:[%s19 + $0x98] sm:$0xff]
        %v3945 = vld [vmem:[%s19 + $0xa0] sm:$0xff]
        %v3946 = vld [vmem:[%s19 + $0xa8] sm:$0xff]
        %v3947 = vld [vmem:[%s19 + $0xb0] sm:$0xff]
        %v3948 = vld [vmem:[%s19 + $0xb8] sm:$0xff]
        %v3949 = vld [vmem:[%s19 + $0xc0] sm:$0xff]
        %v3950 = vld [vmem:[%s19 + $0xc8] sm:$0xff]
        %v3951 = vld [vmem:[%s19 + $0xd0] sm:$0xff]
        %v3952 = vld [vmem:[%s19 + $0xd8] sm:$0xff]
        %v3953 = vld [vmem:[%s19 + $0xe0] sm:$0xff]
        %v3954 = vld [vmem:[%s19 + $0xe8] sm:$0xff]
        %v3955 = vld [vmem:[%s19 + $0xf0] sm:$0xff]
        %v3956 = vld [vmem:[%s19 + $0xf8] sm:$0xff]
        %v3989 = vunpack.c.l.b16 %v3925
        %v3990 = vunpack.c.h.b16 %v3925
        %v3991 = vunpack.c.l.b16 %v3926
        %v3992 = vunpack.c.h.b16 %v3926
        %v3993 = vunpack.c.l.b16 %v3927
        %v3994 = vunpack.c.h.b16 %v3927
        %v3995 = vunpack.c.l.b16 %v3928
        %v3996 = vunpack.c.h.b16 %v3928
        %v3997 = vunpack.c.l.b16 %v3929
        %v3998 = vunpack.c.h.b16 %v3929
        %v3999 = vunpack.c.l.b16 %v3930
        %v4000 = vunpack.c.h.b16 %v3930
        %v4001 = vunpack.c.l.b16 %v3931
        %v4002 = vunpack.c.h.b16 %v3931
        %v4003 = vunpack.c.l.b16 %v3932
        %v4004 = vunpack.c.h.b16 %v3932
        %v4005 = vunpack.c.l.b16 %v3933
        %v4006 = vunpack.c.h.b16 %v3933
        %v4007 = vunpack.c.l.b16 %v3934
        %v4008 = vunpack.c.h.b16 %v3934
        %v4009 = vunpack.c.l.b16 %v3935
        %v4010 = vunpack.c.h.b16 %v3935
        %v4011 = vunpack.c.l.b16 %v3936
        %v4012 = vunpack.c.h.b16 %v3936
        %v4013 = vunpack.c.l.b16 %v3937
        %v4014 = vunpack.c.h.b16 %v3937
        %v4015 = vunpack.c.l.b16 %v3938
        %v4016 = vunpack.c.h.b16 %v3938
        %v4017 = vunpack.c.l.b16 %v3939
        %v4018 = vunpack.c.h.b16 %v3939
        %v4019 = vunpack.c.l.b16 %v3940
        %v4020 = vunpack.c.h.b16 %v3940
        %v4021 = vunpack.c.l.b16 %v3941
        %v4022 = vunpack.c.h.b16 %v3941
        %v4023 = vunpack.c.l.b16 %v3942
        %v4024 = vunpack.c.h.b16 %v3942
        %v4025 = vunpack.c.l.b16 %v3943
        %v4026 = vunpack.c.h.b16 %v3943
        %v4027 = vunpack.c.l.b16 %v3944
        %v4028 = vunpack.c.h.b16 %v3944
        %v4029 = vunpack.c.l.b16 %v3945
        %v4030 = vunpack.c.h.b16 %v3945
        %v4031 = vunpack.c.l.b16 %v3946
        %v4032 = vunpack.c.h.b16 %v3946
        %v4033 = vunpack.c.l.b16 %v3947
        %v4034 = vunpack.c.h.b16 %v3947
        %v4035 = vunpack.c.l.b16 %v3948
        %v4036 = vunpack.c.h.b16 %v3948
        %v4037 = vunpack.c.l.b16 %v3949
        %v4038 = vunpack.c.h.b16 %v3949
        %v4039 = vunpack.c.l.b16 %v3950
        %v4040 = vunpack.c.h.b16 %v3950
        %v4041 = vunpack.c.l.b16 %v3951
        %v4042 = vunpack.c.h.b16 %v3951
        %v4043 = vunpack.c.l.b16 %v3952
        %v4044 = vunpack.c.h.b16 %v3952
        %v4045 = vunpack.c.l.b16 %v3953
        %v4046 = vunpack.c.h.b16 %v3953
        %v4047 = vunpack.c.l.b16 %v3954
        %v4048 = vunpack.c.h.b16 %v3954
        %v4049 = vunpack.c.l.b16 %v3955
        %v4050 = vunpack.c.h.b16 %v3955
        %v4051 = vunpack.c.l.b16 %v3956
        %v4052 = vunpack.c.h.b16 %v3956
        %v4053 = vpack.c.b16 %v3991, %v3989
        %v4054 = vpack.c.b16 %v3992, %v3990
        %v4055 = vpack.c.b16 %v3995, %v3993
        %v4056 = vpack.c.b16 %v3996, %v3994
        %v4057 = vpack.c.b16 %v3999, %v3997
        %v4058 = vpack.c.b16 %v4000, %v3998
        %v4059 = vpack.c.b16 %v4003, %v4001
        %v4060 = vpack.c.b16 %v4004, %v4002
        %v4061 = vpack.c.b16 %v4007, %v4005
        %v4062 = vpack.c.b16 %v4008, %v4006
        %v4063 = vpack.c.b16 %v4011, %v4009
        %v4064 = vpack.c.b16 %v4012, %v4010
        %v4065 = vpack.c.b16 %v4015, %v4013
        %v4066 = vpack.c.b16 %v4016, %v4014
        %v4067 = vpack.c.b16 %v4019, %v4017
        %v4068 = vpack.c.b16 %v4020, %v4018
        %v4069 = vpack.c.b16 %v4023, %v4021
        %v4070 = vpack.c.b16 %v4024, %v4022
        %v4071 = vpack.c.b16 %v4027, %v4025
        %v4072 = vpack.c.b16 %v4028, %v4026
        %v4073 = vpack.c.b16 %v4031, %v4029
        %v4074 = vpack.c.b16 %v4032, %v4030
        %v4075 = vpack.c.b16 %v4035, %v4033
        %v4076 = vpack.c.b16 %v4036, %v4034
        %v4077 = vpack.c.b16 %v4039, %v4037
        %v4078 = vpack.c.b16 %v4040, %v4038
        %v4079 = vpack.c.b16 %v4043, %v4041
        %v4080 = vpack.c.b16 %v4044, %v4042
        %v4081 = vpack.c.b16 %v4047, %v4045
        %v4082 = vpack.c.b16 %v4048, %v4046
        %v4083 = vpack.c.b16 %v4051, %v4049
        %v4084 = vpack.c.b16 %v4052, %v4050
        %4117 = vmatprep.subr.bf16.mxu0 %v4054
        %4118 = vmatpush1.bf16.msra.mxu0 %v4053
        %4119 = vmatprep.subr.bf16.mxu0 %v4056
        %4120 = vmatpush1.bf16.msra.mxu0 %v4055
        %4121 = vmatprep.subr.bf16.mxu0 %v4058
        %4122 = vmatpush1.bf16.msra.mxu0 %v4057
        %4123 = vmatprep.subr.bf16.mxu0 %v4060
        %4124 = vmatpush1.bf16.msra.mxu0 %v4059
        %4125 = vmatprep.subr.bf16.mxu0 %v4062
        %4126 = vmatpush1.bf16.msra.mxu0 %v4061
        %4127 = vmatprep.subr.bf16.mxu0 %v4064
        %4128 = vmatpush1.bf16.msra.mxu0 %v4063
        %4129 = vmatprep.subr.bf16.mxu0 %v4066
        %4130 = vmatpush1.bf16.msra.mxu0 %v4065
        %4131 = vmatprep.subr.bf16.mxu0 %v4068
        %4132 = vmatpush1.bf16.msra.mxu0 %v4067
        %4133 = vmatprep.subr.bf16.mxu0 %v4070
        %4134 = vmatpush1.bf16.msra.mxu0 %v4069
        %4135 = vmatprep.subr.bf16.mxu0 %v4072
        %4136 = vmatpush1.bf16.msra.mxu0 %v4071
        %4137 = vmatprep.subr.bf16.mxu0 %v4074
        %4138 = vmatpush1.bf16.msra.mxu0 %v4073
        %4139 = vmatprep.subr.bf16.mxu0 %v4076
        %4140 = vmatpush1.bf16.msra.mxu0 %v4075
        %4141 = vmatprep.subr.bf16.mxu0 %v4078
        %4142 = vmatpush1.bf16.msra.mxu0 %v4077
        %4143 = vmatprep.subr.bf16.mxu0 %v4080
        %4144 = vmatpush1.bf16.msra.mxu0 %v4079
        %4145 = vmatprep.subr.bf16.mxu0 %v4082
        %4146 = vmatpush1.bf16.msra.mxu0 %v4081
        %4147 = vmatprep.subr.bf16.mxu0 %v4084
        %4148 = vmatpush1.bf16.msra.mxu0 %v4083
        %4149 = vmatprep.mubr.bf16.mxu0 %v3924
        %4150 = vmatmul.mubr.bf16.gmra.mrb[0].mxu0 %v3923
        %v4151 = vpop.f32.mrb[0].mxu0
        %v4152 = vadd.f32 0.0, %v4151
        %v4153 = vpop.f32.mrb[0].mxu0
        %v4154 = vadd.f32 0.0, %v4153
        %v4155 = vpop.f32.mrb[0].mxu0
        %v4156 = vpop.f32.mrb[0].mxu0
        %4157 = vdwg.mxu0
        %v4158 = vadd.f32 %v3917, %v4152
        %v4159 = vadd.f32 %v3919, %v4154
        %v4160 = vld [vmem:[%s20] sm:$0x3]
        %v4162 = vlaneseq
        %v4163 = vshrl.u32 %v4162, 7
        %v4164 = vsub.s32 0, %v4163
        %v4165 = vrot.slane %v4160, %v4164
        %v4166 = vlaneseq
        %v4167 = vshrl.u32 %v4166, 7
        %v4168 = vsub.s32 1, %v4167
        %v4169 = vrot.slane %v4160, %v4168
        %v4172 = vadd.f32 %v4158, %v4165
        %v4173 = vadd.f32 %v4159, %v4169
        %v4174 = vmax.f32 %v4172, 0.0
        %v4175 = vmax.f32 %v4173, 0.0
        %v4178 = vcombine.low %v4174, %v4175
        %v4180 = vunpack.c.l.s4 1966171168
        %v4181 = vunpack.c.0.s8 %v4180
        %v4182 = vlaneseq
        %v4183 = vshrl.u32 %v4182, 7
        %v4184 = vsub.s32 %v4181, %v4183
        %v4185 = vrot.slane %v4178, %v4184
        %v4187 = vunpack.c.l.s4 1966171168
        %v4188 = vunpack.c.0.s8 %v4187
        %v4189 = vlaneseq
        %v4190 = vshrl.u32 %v4189, 7
        %v4191 = vsub.s32 %v4188, %v4190
        %v4192 = vrot.slane %v4185, %v4191
        %v4194 = vlaneseq
        %vm4195 = vcmp.ge.s32.totalorder %v4194, 0
        %vm4196 = vcmp.lt.s32.totalorder %v4194, 256
        %vm4197 = vmand %vm4195, %vm4196
        %4198 = vst.msk [vmem:[%s717] sm:$0x3] %vm4197, %v4192
        %s4199 = sand.u32 %s501, 1
        %s4200 = scalar_lea.sflag [#allocation4], %s4199
        %s4201 = sand.u32 %s501, 1
        %s4202 = smul.addr %s4201, 2
        %s4203 = scalar_lea.vmem [#allocation8], %s4202
        // Predicated region
        $region117: #{tpu_custom_call.1} parent=103 // pred_check
          %p4204 = pneg %p511
        $region118: #{tpu_custom_call.1} parent=103 // pred_check_branch
          %4206 = sbr.rel (%p4204) target = $region120
        $region119: #{tpu_custom_call.1} parent=103 // pred_region
          %s4208 = ssub.s32 32, 32
          %4209 = vsyncadd %s4200, %s4208
          %s4210 = smul.addr %s37, 2
          %s4211 = smul.addr %s4210, 16
          %s4212 = scalar_lea.hbm %s21, %s4211
          %s4214 = sshll.u32 %s4203, 4
          %s4215 = int_to_ptr.vmem [resolvable:$true] %s4214
          %4217 = dma.vmem_to_hbm [thread:$0]  %s4215, 32, %s4212, %s4200
        $region120: #{tpu_custom_call.1} parent=103 // pred_fallthru
          _
      $region104: #{tpu_custom_call.1} parent=5 // pred_fallthru
        _
      %p4218 = scmp.le.s32.totalorder 2, %s32
      // Predicated region
      $region121: #{tpu_custom_call.1} parent=5 // pred_check
        %p4219 = pneg %p4218
      $region122: #{tpu_custom_call.1} parent=5 // pred_check_branch
        %4221 = sbr.rel (%p4219) target = $region124
      $region123: #{tpu_custom_call.1} parent=5 // pred_region
        %s4222 = ssub.s32 %s32, 2
        // Predicated region
        $region125: #{tpu_custom_call.1} parent=123 // pred_check
          %p4223 = pneg %p517
        $region126: #{tpu_custom_call.1} parent=123 // pred_check_branch
          %4225 = sbr.rel (%p4223) target = $region128
        $region127: #{tpu_custom_call.1} parent=123 // pred_region
          %s4226 = sand.u32 %s502, 1
          %s4227 = scalar_lea.sflag [#allocation4], %s4226
          %s4228 = sand.u32 %s502, 1
          %s4229 = smul.addr %s4228, 2
          %s4230 = scalar_lea.vmem [#allocation8], %s4229
          %4231 = dma.done %s4227, 32
        $region128: #{tpu_custom_call.1} parent=123 // pred_fallthru
          _
      $region124: #{tpu_custom_call.1} parent=5 // pred_fallthru
        _
    $region6: #{tpu_custom_call.1} parent=1 // loop_footer
      %s36 = sadd.s32 1, %s32
    $region7: #{tpu_custom_call.1} parent=1 // loop_footer_branch
      %31 = sbr.rel target = $region3
    $region8: #{tpu_custom_call.1} parent=1 // loop_exit
      _
    %4232 = vsyncpa [#allocation3], 1
    %s4233 = scalar_lea.sflag [#allocation3], 1
    %4234 = vsyncpa %s4233, 1
    %4235 = vsyncpa [#allocation6], 1
    %4236 = vsyncpa [#allocation4], 1
    %s4237 = scalar_lea.sflag [#allocation4], 1
    %4238 = vsyncpa %s4237, 1

</llo_original>
